<compile_context>
chip_gen: v6e
topology: v6e:2x2x1
jax: 0.10.0
libtpu: 0.0.40
codegen_flags: <defaults>
</compile_context>

<pallas_src>
from collections import namedtuple

import jax
import jax.numpy as jnp
from jax import lax
from jax.experimental import pallas as pl
from jax.experimental.pallas import tpu as pltpu

BN_EPS = 1e-5
STATE_DTYPE = jnp.bfloat16       # storage dtype of intermediate states
MAX_TILE_ROWS = 65536            # absolute cap on TILE_M (lane rows per block)

GroupPlan = namedtuple("GroupPlan", ["conv_cins", "n_id", "cout", "emit_stats"])


def _tpu_vmem_capacity():
    """Physical VMEM bytes of the current TPU generation (safe fallback 64 MiB)."""
    try:
        return int(pltpu.get_tpu_info().vmem_capacity_bytes)
    except Exception:
        return 64 * 1024 * 1024


def _per_row_state_bytes(specs):
    """Rough per-M-row VMEM footprint of one fused state call.

    specs: iterable of (k_conv_channels, n_id, cout, emit_stats) per group.
    Counts double-buffered bf16 streams (ins + out) plus the f32 accumulator and
    bf16 relu/concat transients the compiler keeps live per tile.
    """
    total = 0
    for k, n_id, cout, emit_stats in specs:
        streamed = 2 * (k + n_id * cout + cout)   # bf16 conv ins + id ins + out
        total += 2 * streamed                     # double buffering
        total += 2 * k + 8 * cout                 # relu/concat operand + f32 acc/temp
        if emit_stats:
            total += 6 * cout                     # bf16 relu(out) + f32 cast for colsum
    return max(total, 1)


# ------------------------------- kernels -----------------------------------

def _make_input_stats_kernel(n_inputs):
    """Accumulate Gram = relu(x) @ relu(x)^T and colsum of relu(x) for each raw
    input, reduced over the inner (M) grid axis into a per-core slab."""

    def kernel(*refs):
        x_refs = refs[:n_inputs]
        stat_refs = refs[n_inputs:]               # gram0, colsum0, gram1, colsum1, ...

        @pl.when(pl.program_id(1) == 0)
        def _init():
            for o in stat_refs:
                o[...] = jnp.zeros_like(o)

        for g in range(n_inputs):
            r = jnp.maximum(x_refs[g][...], 0)    # bf16 relu, (C, TILE_M)
            stat_refs[2 * g][...] += lax.dot_general(
                r, r, (((1,), (1,)), ((), ())),   # contract lane dim: r @ r^T
                preferred_element_type=jnp.float32)
            stat_refs[2 * g + 1][...] += jnp.sum(
                r.astype(jnp.float32), axis=1, keepdims=True)

    return kernel


def _make_state_kernel(plans, tile_m, tiles_per, m_true, mask_tail):
    """One fused kernel producing one or more cell states.

    Per group:  out = Wstacked @ concat_j relu(conv_in_j)  +  sum_k id_in_k  + bias
    (BN pre-folded into Wstacked / bias), stored as bf16, plus — if a downstream
    conv edge reads this state — the Gram/colsum moments of relu(out),
    accumulated into per-core slabs over the inner grid axis.
    """
    n_groups = len(plans)

    def kernel(*refs):
        # ---- unpack inputs:  per group: conv ins, id ins, [w_stacked], bias ----
        idx = 0
        gin = []
        for pln in plans:
            conv_refs = refs[idx: idx + len(pln.conv_cins)]
            idx += len(pln.conv_cins)
            id_refs = refs[idx: idx + pln.n_id]
            idx += pln.n_id
            w_ref = None
            if pln.conv_cins:
                w_ref = refs[idx]
                idx += 1
            bias_ref = refs[idx]
            idx += 1
            gin.append((conv_refs, id_refs, w_ref, bias_ref))

        # ---- unpack outputs: all states, then (gram, colsum) per stats group ----
        state_refs = refs[idx: idx + n_groups]
        idx += n_groups
        stats_refs = []
        for pln in plans:
            if pln.emit_stats:
                stats_refs.append((refs[idx], refs[idx + 1]))
                idx += 2
            else:
                stats_refs.append(None)

        if any(pln.emit_stats for pln in plans):
            @pl.when(pl.program_id(1) == 0)
            def _init():
                for sr in stats_refs:
                    if sr is not None:
                        sr[0][...] = jnp.zeros_like(sr[0])
                        sr[1][...] = jnp.zeros_like(sr[1])

        if mask_tail:
            col0 = (pl.program_id(0) * tiles_per + pl.program_id(1)) * tile_m
            col = col0 + lax.broadcasted_iota(jnp.int32, (1, tile_m), 1)
            valid = col < m_true

        for pln, (conv_refs, id_refs, w_ref, bias_ref), out_ref, sr in zip(
                plans, gin, state_refs, stats_refs):
            if pln.conv_cins:
                # relu directly on bf16 (exact); stack conv edges along K so a
                # single MXU dot covers every conv edge of this node.
                rs = [jnp.maximum(cr[...], 0) for cr in conv_refs]
                r = rs[0] if len(rs) == 1 else jnp.concatenate(rs, axis=0)
                acc = jnp.dot(w_ref[...], r, preferred_element_type=jnp.float32)
            else:
                acc = jnp.zeros(out_ref.shape, jnp.float32)
            for ir in id_refs:
                acc = acc + ir[...].astype(jnp.float32)
            acc = acc + bias_ref[...]                       # (Cout, 1) lane-broadcast
            if mask_tail:
                acc = jnp.where(valid, acc, 0.0)            # keep padded cols relu-neutral
            out_bf = acc.astype(out_ref.dtype)
            out_ref[...] = out_bf                           # lane-dense unmasked store

            if sr is not None:
                g_ref, c_ref = sr
                rstat = jnp.maximum(out_bf, 0)              # exact bf16 relu of stored state
                g_ref[...] += lax.dot_general(
                    rstat, rstat, (((1,), (1,)), ((), ())),
                    preferred_element_type=jnp.float32)
                c_ref[...] += jnp.sum(rstat.astype(jnp.float32), axis=1, keepdims=True)

    return kernel


# ------------------------------ wrappers ------------------------------------

def _run_input_stats(xs, *, tile_m, m_pad, p_split, vmem_limit):
    tiles_per = (m_pad // tile_m) // p_split
    stream_map = lambda p, i: (0, p * tiles_per + i)
    slab_map = lambda p, i: (p, 0, 0)

    in_specs = [pl.BlockSpec((x.shape[0], tile_m), stream_map) for x in xs]
    out_shapes, out_specs = [], []
    flops, bytes_acc = 0, 0
    for x in xs:
        c = int(x.shape[0])
        out_shapes += [jax.ShapeDtypeStruct((p_split, c, c), jnp.float32),
                       jax.ShapeDtypeStruct((p_split, c, 1), jnp.float32)]
        out_specs += [pl.BlockSpec((None, c, c), slab_map),
                      pl.BlockSpec((None, c, 1), slab_map)]
        flops += 2 * c * c * m_pad
        bytes_acc += 2 * c * m_pad

    res = pl.pallas_call(
        _make_input_stats_kernel(len(xs)),
        out_shape=tuple(out_shapes),
        grid_spec=pltpu.PrefetchScalarGridSpec(
            num_scalar_prefetch=0,
            grid=(p_split, tiles_per),
            in_specs=in_specs,
            out_specs=tuple(out_specs)),
        compiler_params=pltpu.CompilerParams(
            dimension_semantics=("parallel", "arbitrary"),
            vmem_limit_bytes=int(vmem_limit)),
        cost_estimate=pl.CostEstimate(flops=int(flops), transcendentals=0,
                                      bytes_accessed=int(bytes_acc)),
    )(*xs)
    return [(res[2 * g], res[2 * g + 1]) for g in range(len(xs))]


def _run_groups(groups, *, tile_m, m_pad, m_true, p_split, mask_tail, vmem_limit):
    """Run one fused state kernel.  Returns [(state_bf16, stats_or_None)] per group."""
    tiles_per = (m_pad // tile_m) // p_split
    stream_map = lambda p, i: (0, p * tiles_per + i)
    const_map = lambda p, i: (0, 0)
    slab_map = lambda p, i: (p, 0, 0)

    plans, in_specs, args = [], [], []
    flops, bytes_acc = 0, 0
    for g in groups:
        conv_cins = tuple(int(x.shape[0]) for x in g["conv_inputs"])
        cout = int(g["cout"])
        plans.append(GroupPlan(conv_cins, len(g["id_inputs"]), cout,
                               bool(g["emit_stats"])))
        for x in g["conv_inputs"]:
            in_specs.append(pl.BlockSpec((x.shape[0], tile_m), stream_map))
            args.append(x)
        for x in g["id_inputs"]:
            in_specs.append(pl.BlockSpec((x.shape[0], tile_m), stream_map))
            args.append(x)
        if conv_cins:
            w = g["w_stacked"]
            in_specs.append(pl.BlockSpec(w.shape, const_map))   # VMEM-resident weight
            args.append(w)
        in_specs.append(pl.BlockSpec(g["bias"].shape, const_map))
        args.append(g["bias"])
        k = sum(conv_cins)
        flops += 2 * k * cout * m_pad
        if g["emit_stats"]:
            flops += 2 * cout * cout * m_pad
        bytes_acc += 2 * (k + len(g["id_inputs"]) * cout + cout) * m_pad

    out_shapes, out_specs = [], []
    for g in groups:
        out_shapes.append(jax.ShapeDtypeStruct((g["cout"], m_pad), STATE_DTYPE))
        out_specs.append(pl.BlockSpec((g["cout"], tile_m), stream_map))
    for g in groups:
        if g["emit_stats"]:
            c = int(g["cout"])
            out_shapes.append(jax.ShapeDtypeStruct((p_split, c, c), jnp.float32))
            out_specs.append(pl.BlockSpec((None, c, c), slab_map))
            out_shapes.append(jax.ShapeDtypeStruct((p_split, c, 1), jnp.float32))
            out_specs.append(pl.BlockSpec((None, c, 1), slab_map))

    any_stats = any(g["emit_stats"] for g in groups)
    res = pl.pallas_call(
        _make_state_kernel(tuple(plans), tile_m, tiles_per, m_true, mask_tail),
        out_shape=tuple(out_shapes),
        grid_spec=pltpu.PrefetchScalarGridSpec(
            num_scalar_prefetch=0,
            grid=(p_split, tiles_per),
            in_specs=in_specs,
            out_specs=tuple(out_specs)),
        compiler_params=pltpu.CompilerParams(
            dimension_semantics=("parallel",
                                 "arbitrary" if any_stats else "parallel"),
            vmem_limit_bytes=int(vmem_limit)),
        cost_estimate=pl.CostEstimate(flops=int(flops), transcendentals=0,
                                      bytes_accessed=int(bytes_acc)),
    )(*args)

    out, si = [], len(groups)
    for gi, g in enumerate(groups):
        if g["emit_stats"]:
            out.append((res[gi], (res[si], res[si + 1])))
            si += 2
        else:
            out.append((res[gi], None))
    return out


def bn_fold(W, gamma, beta, stats, m_rows):
    """Fold training-mode BatchNorm of y = W @ relu(x) into (W*scale, shift) using
    the global relu(x) moments (per-core Gram/colsum slabs summed here).
    Tiny host-side math, runs as plain XLA."""
    gram = jnp.sum(stats[0], axis=0)                    # (Cin, Cin)
    colsum = jnp.sum(stats[1], axis=0)[:, 0]            # (Cin,)
    mu = colsum / m_rows                                # E[relu(x)]
    cov = gram / m_rows - jnp.outer(mu, mu)             # biased covariance of relu(x)
    mean = W @ mu                                       # (Cout,)
    var = jnp.maximum(jnp.einsum("ok,kl,ol->o", W, cov, W), 0.0)
    scale = gamma * lax.rsqrt(var + BN_EPS)
    shift = beta - mean * scale
    return (W * scale[:, None]).astype(STATE_DTYPE), shift


# ----------------------------- architecture ---------------------------------
# The original candidateNameList / candidateOpDict are NOT shipped with the
# module; we fix a deterministic two-op candidate space covering the two
# structurally different cases: identity pass-through and ReLU-Conv(1x1)-BN.
CANDIDATE_NAMES = ("skip_connect", "relu_conv_bn_1x1")


def make_arch():
    edge_arch = {"edge": [
        {"edge": [1, 1]},
        {"edge": [1, 0, 1]},
        {"edge": [0, 1, 1, 0]},
        {"edge": [0, 0, 1, 1, 0]},
    ]}
    op_arch = {"op": [1, 0,
                      1, 0, 0,
                      0, 1, 1, 0,          # node 2 has two conv edges (K-stacking path)
                      0, 0, 1, 0, 0]}
    return op_arch, edge_arch


class PallasCell:
    """JAX/Pallas re-implementation of Cell.forward (non-reduction cell)."""

    def __init__(self, key, arch, prev_prev_C, prev_C, cur_C,
                 bCurReduction=False, bPrevReduction=False,
                 cellSize=4, newStateLen=4, max_tile_rows=None):
        assert not bCurReduction and not bPrevReduction, \
            "reduction cells not implemented"
        # TODO(synk): FactorizedReduce preprocess and stride-2 candidate ops
        # (reduction cells) are not implemented.
        self.cellSize = cellSize
        self.newStateLen = newStateLen
        self.cur_C = cur_C
        self.max_tile_rows = max_tile_rows
        self.op_arch, self.edge_arch = arch
        self._vmem_cap = _tpu_vmem_capacity()

        keys = iter(jax.random.split(key, 64))

        def conv_params(cin, cout):
            # weight stored as (Cout, Cin) to match the lane-dense (C, M) layout
            w = 0.1 * jax.random.normal(next(keys), (cout, cin), jnp.float32)
            gamma = jnp.ones((cout,), jnp.float32)      # BN affine weight init
            beta = jnp.zeros((cout,), jnp.float32)      # BN affine bias init
            return (w, gamma, beta)

        # preprocess0 / preprocess1: ReLUConvBN(kernel=1, stride=1, padding=0)
        self.pre0 = conv_params(prev_prev_C, cur_C)
        self.pre1 = conv_params(prev_C, cur_C)

        # MixedOps in the exact iteration order of the reference __init__.
        self._node_edges = []          # per node: [(src_state_idx, kind, params)]
        self._conv_consumed = set()    # state indices read by some conv edge
        node_index = 0
        for i in range(cellSize):
            edges_i = []
            for j in range(2 + i):
                if self.edge_arch["edge"][i]["edge"][j] == 1:
                    name = CANDIDATE_NAMES[self.op_arch["op"][node_index]]
                    if name == "skip_connect":
                        edges_i.append((j, "identity", None))
                    else:
                        edges_i.append((j, "conv", conv_params(cur_C, cur_C)))
                        self._conv_consumed.add(j)
                node_index += 1
            self._node_edges.append(edges_i)

    # ---- tiling plan: one TILE_M / pad for the whole cell, per-generation VMEM ----
    def _plan_tiling(self, c0, c1, m_true):
        cur_C = self.cur_C
        cap = self._vmem_cap
        vmem_limit = max(32 << 20, min(int(cap * 0.75), cap - (16 << 20)))
        vmem_limit = min(vmem_limit, cap)

        calls = [[(c0, 0, cur_C, True), (c1, 0, cur_C, True)]]        # preprocess pair
        for edges in self._node_edges:
            n_conv = sum(1 for (_, kind, _) in edges if kind == "conv")
            n_id = len(edges) - n_conv
            calls.append([(n_conv * cur_C, n_id, cur_C, True)])
        per_row = max(max(_per_row_state_bytes(c) for c in calls), 10 * (c0 + c1))

        cap_rows = (vmem_limit // 2) // per_row
        if self.max_tile_rows is not None:
            cap_rows = min(cap_rows, self.max_tile_rows)
        cap_rows = min(cap_rows, MAX_TILE_ROWS)
        cap_rows = max(128, (cap_rows // 128) * 128)

        if m_true <= cap_rows:
            tile_m, m_pad = m_true, m_true
        else:
            tile_m = None
            lo = max(128, (cap_rows // 2 // 128) * 128)
            t = cap_rows
            while t >= lo:
                if m_true % t == 0:
                    tile_m = t
                    break
                t -= 128
            if tile_m is None:                       # pad + mask the tail tile
                tile_m = cap_rows
                m_pad = -(-m_true // tile_m) * tile_m
            else:
                m_pad = m_true
        mask_tail = (m_pad != m_true)
        tiles_total = m_pad // tile_m
        p_split = 2 if (tiles_total >= 2 and tiles_total % 2 == 0) else 1
        return dict(tile_m=tile_m, m_pad=m_pad, p_split=p_split,
                    mask_tail=mask_tail, vmem_limit=vmem_limit)

    def __call__(self, s0_nchw, s1_nchw, drop_path_prob=0.0):
        n, c0, h, w = s0_nchw.shape
        c1 = s1_nchw.shape[1]
        m_true = n * h * w
        cfg = self._plan_tiling(c0, c1, m_true)
        m_pad = cfg["m_pad"]
        call_kw = dict(tile_m=cfg["tile_m"], m_pad=m_pad, m_true=m_true,
                       p_split=cfg["p_split"], mask_tail=cfg["mask_tail"],
                       vmem_limit=cfg["vmem_limit"])

        def to_cm(x):   # NCHW -> lane-dense (C, M), bf16, padded along M
            cc = x.shape[1]
            y = x.transpose(1, 0, 2, 3).reshape(cc, m_true).astype(STATE_DTYPE)
            if m_pad != m_true:
                y = jnp.pad(y, ((0, 0), (0, m_pad - m_true)))
            return y

        x0, x1 = to_cm(s0_nchw), to_cm(s1_nchw)

        # TODO(synk): drop_path only fires when training and drop_path_prob > 0;
        # the forward default (0.0) makes it a no-op, so it is not implemented.

        # pass 1: fused global relu moments of both raw inputs (for BN folding).
        st0, st1 = _run_input_stats([x0, x1], tile_m=cfg["tile_m"], m_pad=m_pad,
                                    p_split=cfg["p_split"],
                                    vmem_limit=cfg["vmem_limit"])

        # pass 2: fused preprocess0 + preprocess1 (BN folded into the 1x1 convs),
        # emitting downstream stats for whichever of s0/s1 a conv edge consumes.
        w0, g0, b0 = self.pre0
        w1, g1, b1 = self.pre1
        w0s, sh0 = bn_fold(w0, g0, b0, st0, m_true)
        w1s, sh1 = bn_fold(w1, g1, b1, st1, m_true)
        res = _run_groups([
            dict(conv_inputs=[x0], id_inputs=[], w_stacked=w0s,
                 bias=sh0[:, None], cout=self.cur_C,
                 emit_stats=(0 in self._conv_consumed)),
            dict(conv_inputs=[x1], id_inputs=[], w_stacked=w1s,
                 bias=sh1[:, None], cout=self.cur_C,
                 emit_stats=(1 in self._conv_consumed)),
        ], **call_kw)
        states = [res[0], res[1]]

        # one fused kernel per intermediate node: conv edges stacked along K,
        # identity edges added, per-edge BN shifts summed into a single bias.
        for node_idx, edges in enumerate(self._node_edges):
            conv_ins, w_cols, shifts, id_ins = [], [], [], []
            for (j, kind, params) in edges:
                st, stats = states[j]
                if kind == "identity":
                    id_ins.append(st)
                else:
                    wp, gp, bp = params
                    ws, sh = bn_fold(wp, gp, bp, stats, m_true)
                    conv_ins.append(st)
                    w_cols.append(ws)
                    shifts.append(sh)
            w_stacked = jnp.concatenate(w_cols, axis=1) if w_cols else None
            bias = (sum(shifts) if shifts
                    else jnp.zeros((self.cur_C,), jnp.float32))[:, None]
            res = _run_groups([dict(
                conv_inputs=conv_ins, id_inputs=id_ins, w_stacked=w_stacked,
                bias=bias, cout=self.cur_C,
                emit_stats=((2 + node_idx) in self._conv_consumed))], **call_kw)
            states.append(res[0])

        # torch.cat(states[-newStateLen:], dim=1); XLA fuses the concat with the
        # single (C, M) -> NCHW exit transpose.
        out2d = jnp.concatenate([s for (s, _) in states[-self.newStateLen:]], axis=0)
        out2d = out2d[:, :m_true].astype(jnp.float32)
        c_total = out2d.shape[0]
        return out2d.reshape(c_total, n, h, w).transpose(1, 0, 2, 3)


# ----------------------- pure-JAX f32 reference (spec) ----------------------

def reference_cell(cell, s0_nchw, s1_nchw):
    """Literal f32 re-statement of the PyTorch Cell.forward (training-mode BN)."""
    def to_2d(x):
        n, c, h, w = x.shape
        return x.transpose(0, 2, 3, 1).reshape(n * h * w, c), (n, h, w)

    def relu_conv_bn(x, params):
        W, gamma, beta = params            # W: (Cout, Cin)
        y = jnp.maximum(x, 0.0) @ W.T
        mean = jnp.mean(y, axis=0)
        var = jnp.mean((y - mean) ** 2, axis=0)
        return gamma * (y - mean) / jnp.sqrt(var + BN_EPS) + beta

    s0_2d, (n, h, w) = to_2d(s0_nchw)
    s1_2d, _ = to_2d(s1_nchw)
    states = [relu_conv_bn(s0_2d, cell.pre0), relu_conv_bn(s1_2d, cell.pre1)]
    for edges in cell._node_edges:
        terms = []
        for (j, kind, params) in edges:
            x = states[j]
            terms.append(x if kind == "identity" else relu_conv_bn(x, params))
        states.append(jnp.stack(terms, 0).sum(0))
    out = jnp.concatenate(states[-cell.newStateLen:], axis=1)
    c = out.shape[1]
    return out.reshape(n, h, w, c).transpose(0, 3, 1, 2)


if __name__ == "__main__":
    key = jax.random.PRNGKey(0)
    k_params, k0, k1, k2, k3 = jax.random.split(key, 5)

    # ---- main run: small shapes (single-tile fast path) ----
    N, C0, C1, CUR, H, W = 2, 8, 8, 16, 16, 16
    cell = PallasCell(k_params, make_arch(), C0, C1, CUR,
                      bCurReduction=False, bPrevReduction=False)
    s0 = jax.random.normal(k0, (N, C0, H, W), jnp.float32)
    s1 = jax.random.normal(k1, (N, C1, H, W), jnp.float32)

    out = jax.block_until_ready(jax.jit(cell.__call__)(s0, s1))
    assert out.shape == (N, 4 * CUR, H, W), out.shape
    assert bool(jnp.all(jnp.isfinite(out)))
    ref = reference_cell(cell, s0, s1)
    err = float(jnp.max(jnp.abs(out - ref)) / (jnp.max(jnp.abs(ref)) + 1e-6))
    assert err < 0.1, f"mismatch vs reference: rel_err={err}"

    # ---- stress run: forces multi-tile grid, 2-way core split, padded+masked tail ----
    # M = 2*14*25 = 700 -> padded to 768 with TILE_M=128 (6 tiles, P=2).
    N2, H2, W2 = 2, 14, 25
    cell2 = PallasCell(k2, make_arch(), C0, C1, CUR, max_tile_rows=128)
    t0 = jax.random.normal(k3, (N2, C0, H2, W2), jnp.float32)
    t1 = jax.random.normal(jax.random.fold_in(k3, 1), (N2, C1, H2, W2), jnp.float32)
    out2 = jax.block_until_ready(jax.jit(cell2.__call__)(t0, t1))
    assert out2.shape == (N2, 4 * CUR, H2, W2), out2.shape
    ref2 = reference_cell(cell2, t0, t1)
    err2 = float(jnp.max(jnp.abs(out2 - ref2)) / (jnp.max(jnp.abs(ref2)) + 1e-6))
    assert err2 < 0.1, f"mismatch vs reference (stress): rel_err={err2}"

    print("KERNEL_OK")
</pallas_src>

<mosaic_0001>
module attributes {stable_mosaic.version = 11 : i64} {
  func.func @kernel(%arg0: i32, %arg1: i32, %arg2: memref<8x512xbf16, #tpu.memory_space<vmem>>, %arg3: memref<8x512xbf16, #tpu.memory_space<vmem>>, %arg4: memref<1x8x8xf32, #tpu.memory_space<vmem>>, %arg5: memref<1x8x1xf32, #tpu.memory_space<vmem>>, %arg6: memref<1x8x8xf32, #tpu.memory_space<vmem>>, %arg7: memref<1x8x1xf32, #tpu.memory_space<vmem>>) attributes {dimension_semantics = [#tpu.dimension_semantics<parallel>, #tpu.dimension_semantics<arbitrary>], iteration_bounds = array<i64: 1, 1>, scalar_prefetch = 0 : i64, scratch_operands = 0 : i64, tpu.core_type = #tpu.core_type<tc>, window_params = [{transform_indices = @transform_0, window_bounds = array<i64: 8, 512>}, {transform_indices = @transform_1, window_bounds = array<i64: 8, 512>}, {transform_indices = @transform_2, window_bounds = array<i64: 1, 8, 8>}, {transform_indices = @transform_3, window_bounds = array<i64: 1, 8, 1>}, {transform_indices = @transform_4, window_bounds = array<i64: 1, 8, 8>}, {transform_indices = @transform_5, window_bounds = array<i64: 1, 8, 1>}]} {
    %c0_i32 = arith.constant 0 : i32
    %0 = arith.cmpi eq, %arg1, %c0_i32 : i32
    %1 = arith.extui %0 : i1 to i32
    %c0_i32_0 = arith.constant 0 : i32
    %2 = arith.cmpi ne, %1, %c0_i32_0 : i32
    scf.if %2 {
      %cst_33 = arith.constant 0.000000e+00 : f32
      %41 = vector.broadcast %cst_33 : f32 to vector<8x8xf32>
      %c0_34 = arith.constant 0 : index
      %c0_35 = arith.constant 0 : index
      %c0_36 = arith.constant 0 : index
      %42 = vector.load %arg4[%c0_34, %c0_35, %c0_36] : memref<1x8x8xf32, #tpu.memory_space<vmem>>, vector<1x8x8xf32>
      %43 = vector.shape_cast %42 : vector<1x8x8xf32> to vector<8x8xf32>
      %44 = vector.shape_cast %41 : vector<8x8xf32> to vector<1x8x8xf32>
      tpu.vector_store %arg4[%c0_34, %c0_35, %c0_36], %44 {strides = array<i32>} : memref<1x8x8xf32, #tpu.memory_space<vmem>>, vector<1x8x8xf32>,
      %cst_37 = arith.constant 0.000000e+00 : f32
      %45 = vector.broadcast %cst_37 : f32 to vector<8x1xf32>
      %c0_38 = arith.constant 0 : index
      %c0_39 = arith.constant 0 : index
      %c0_40 = arith.constant 0 : index
      %46 = vector.load %arg5[%c0_38, %c0_39, %c0_40] : memref<1x8x1xf32, #tpu.memory_space<vmem>>, vector<1x8x1xf32>
      %47 = vector.shape_cast %46 : vector<1x8x1xf32> to vector<8x1xf32>
      %48 = vector.shape_cast %45 : vector<8x1xf32> to vector<1x8x1xf32>
      tpu.vector_store %arg5[%c0_38, %c0_39, %c0_40], %48 {strides = array<i32>} : memref<1x8x1xf32, #tpu.memory_space<vmem>>, vector<1x8x1xf32>,
      %cst_41 = arith.constant 0.000000e+00 : f32
      %49 = vector.broadcast %cst_41 : f32 to vector<8x8xf32>
      %c0_42 = arith.constant 0 : index
      %c0_43 = arith.constant 0 : index
      %c0_44 = arith.constant 0 : index
      %50 = vector.load %arg6[%c0_42, %c0_43, %c0_44] : memref<1x8x8xf32, #tpu.memory_space<vmem>>, vector<1x8x8xf32>
      %51 = vector.shape_cast %50 : vector<1x8x8xf32> to vector<8x8xf32>
      %52 = vector.shape_cast %49 : vector<8x8xf32> to vector<1x8x8xf32>
      tpu.vector_store %arg6[%c0_42, %c0_43, %c0_44], %52 {strides = array<i32>} : memref<1x8x8xf32, #tpu.memory_space<vmem>>, vector<1x8x8xf32>,
      %cst_45 = arith.constant 0.000000e+00 : f32
      %53 = vector.broadcast %cst_45 : f32 to vector<8x1xf32>
      %c0_46 = arith.constant 0 : index
      %c0_47 = arith.constant 0 : index
      %c0_48 = arith.constant 0 : index
      %54 = vector.load %arg7[%c0_46, %c0_47, %c0_48] : memref<1x8x1xf32, #tpu.memory_space<vmem>>, vector<1x8x1xf32>
      %55 = vector.shape_cast %54 : vector<1x8x1xf32> to vector<8x1xf32>
      %56 = vector.shape_cast %53 : vector<8x1xf32> to vector<1x8x1xf32>
      tpu.vector_store %arg7[%c0_46, %c0_47, %c0_48], %56 {strides = array<i32>} : memref<1x8x1xf32, #tpu.memory_space<vmem>>, vector<1x8x1xf32>,
    } else {
    }
    %c0 = arith.constant 0 : index
    %c0_1 = arith.constant 0 : index
    %3 = vector.load %arg2[%c0, %c0_1] : memref<8x512xbf16, #tpu.memory_space<vmem>>, vector<8x512xbf16>
    %cst = arith.constant 0.000000e+00 : bf16
    %4 = vector.broadcast %cst : bf16 to vector<8x512xbf16>
    %5 = arith.maximumf %3, %4 : vector<8x512xbf16>
    %c0_2 = arith.constant 0 : index
    %c0_3 = arith.constant 0 : index
    %c0_4 = arith.constant 0 : index
    %6 = vector.load %arg4[%c0_2, %c0_3, %c0_4] : memref<1x8x8xf32, #tpu.memory_space<vmem>>, vector<1x8x8xf32>
    %7 = vector.shape_cast %6 : vector<1x8x8xf32> to vector<8x8xf32>
    %cst_5 = arith.constant dense<0.000000e+00> : vector<8x8xf32>
    %8 = tpu.matmul %5, %5, %cst_5 {dimension_numbers = #tpu.dot_dimension_numbers<[1], [1], [0], [0], [0, 0, 1, 0], [], []>} : vector<8x512xbf16>, vector<8x512xbf16>, vector<8x8xf32> -> vector<8x8xf32>
    %9 = arith.addf %7, %8 : vector<8x8xf32>
    %c0_6 = arith.constant 0 : index
    %c0_7 = arith.constant 0 : index
    %c0_8 = arith.constant 0 : index
    %10 = vector.load %arg4[%c0_6, %c0_7, %c0_8] : memref<1x8x8xf32, #tpu.memory_space<vmem>>, vector<1x8x8xf32>
    %11 = vector.shape_cast %10 : vector<1x8x8xf32> to vector<8x8xf32>
    %12 = vector.shape_cast %9 : vector<8x8xf32> to vector<1x8x8xf32>
    tpu.vector_store %arg4[%c0_6, %c0_7, %c0_8], %12 {strides = array<i32>} : memref<1x8x8xf32, #tpu.memory_space<vmem>>, vector<1x8x8xf32>,
    %c0_9 = arith.constant 0 : index
    %c0_10 = arith.constant 0 : index
    %c0_11 = arith.constant 0 : index
    %13 = vector.load %arg5[%c0_9, %c0_10, %c0_11] : memref<1x8x1xf32, #tpu.memory_space<vmem>>, vector<1x8x1xf32>
    %14 = vector.shape_cast %13 : vector<1x8x1xf32> to vector<8x1xf32>
    %15 = arith.extf %5 : vector<8x512xbf16> to vector<8x512xf32>
    %cst_12 = arith.constant dense<0.000000e+00> : vector<8xf32>
    %16 = vector.multi_reduction <add>, %15, %cst_12 [1] : vector<8x512xf32> to vector<8xf32>
    %17 = vector.shape_cast %16 : vector<8xf32> to vector<8x1xf32>
    %18 = arith.addf %14, %17 : vector<8x1xf32>
    %c0_13 = arith.constant 0 : index
    %c0_14 = arith.constant 0 : index
    %c0_15 = arith.constant 0 : index
    %19 = vector.load %arg5[%c0_13, %c0_14, %c0_15] : memref<1x8x1xf32, #tpu.memory_space<vmem>>, vector<1x8x1xf32>
    %20 = vector.shape_cast %19 : vector<1x8x1xf32> to vector<8x1xf32>
    %21 = vector.shape_cast %18 : vector<8x1xf32> to vector<1x8x1xf32>
    tpu.vector_store %arg5[%c0_13, %c0_14, %c0_15], %21 {strides = array<i32>} : memref<1x8x1xf32, #tpu.memory_space<vmem>>, vector<1x8x1xf32>,
    %c0_16 = arith.constant 0 : index
    %c0_17 = arith.constant 0 : index
    %22 = vector.load %arg3[%c0_16, %c0_17] : memref<8x512xbf16, #tpu.memory_space<vmem>>, vector<8x512xbf16>
    %cst_18 = arith.constant 0.000000e+00 : bf16
    %23 = vector.broadcast %cst_18 : bf16 to vector<8x512xbf16>
    %24 = arith.maximumf %22, %23 : vector<8x512xbf16>
    %c0_19 = arith.constant 0 : index
    %c0_20 = arith.constant 0 : index
    %c0_21 = arith.constant 0 : index
    %25 = vector.load %arg6[%c0_19, %c0_20, %c0_21] : memref<1x8x8xf32, #tpu.memory_space<vmem>>, vector<1x8x8xf32>
    %26 = vector.shape_cast %25 : vector<1x8x8xf32> to vector<8x8xf32>
    %cst_22 = arith.constant dense<0.000000e+00> : vector<8x8xf32>
    %27 = tpu.matmul %24, %24, %cst_22 {dimension_numbers = #tpu.dot_dimension_numbers<[1], [1], [0], [0], [0, 0, 1, 0], [], []>} : vector<8x512xbf16>, vector<8x512xbf16>, vector<8x8xf32> -> vector<8x8xf32>
    %28 = arith.addf %26, %27 : vector<8x8xf32>
    %c0_23 = arith.constant 0 : index
    %c0_24 = arith.constant 0 : index
    %c0_25 = arith.constant 0 : index
    %29 = vector.load %arg6[%c0_23, %c0_24, %c0_25] : memref<1x8x8xf32, #tpu.memory_space<vmem>>, vector<1x8x8xf32>
    %30 = vector.shape_cast %29 : vector<1x8x8xf32> to vector<8x8xf32>
    %31 = vector.shape_cast %28 : vector<8x8xf32> to vector<1x8x8xf32>
    tpu.vector_store %arg6[%c0_23, %c0_24, %c0_25], %31 {strides = array<i32>} : memref<1x8x8xf32, #tpu.memory_space<vmem>>, vector<1x8x8xf32>,
    %c0_26 = arith.constant 0 : index
    %c0_27 = arith.constant 0 : index
    %c0_28 = arith.constant 0 : index
    %32 = vector.load %arg7[%c0_26, %c0_27, %c0_28] : memref<1x8x1xf32, #tpu.memory_space<vmem>>, vector<1x8x1xf32>
    %33 = vector.shape_cast %32 : vector<1x8x1xf32> to vector<8x1xf32>
    %34 = arith.extf %24 : vector<8x512xbf16> to vector<8x512xf32>
    %cst_29 = arith.constant dense<0.000000e+00> : vector<8xf32>
    %35 = vector.multi_reduction <add>, %34, %cst_29 [1] : vector<8x512xf32> to vector<8xf32>
    %36 = vector.shape_cast %35 : vector<8xf32> to vector<8x1xf32>
    %37 = arith.addf %33, %36 : vector<8x1xf32>
    %c0_30 = arith.constant 0 : index
    %c0_31 = arith.constant 0 : index
    %c0_32 = arith.constant 0 : index
    %38 = vector.load %arg7[%c0_30, %c0_31, %c0_32] : memref<1x8x1xf32, #tpu.memory_space<vmem>>, vector<1x8x1xf32>
    %39 = vector.shape_cast %38 : vector<1x8x1xf32> to vector<8x1xf32>
    %40 = vector.shape_cast %37 : vector<8x1xf32> to vector<1x8x1xf32>
    tpu.vector_store %arg7[%c0_30, %c0_31, %c0_32], %40 {strides = array<i32>} : memref<1x8x1xf32, #tpu.memory_space<vmem>>, vector<1x8x1xf32>,
    return
  }
  func.func @transform_0(%arg0: i32, %arg1: i32) -> (i32, i32) {
    %c1_i32 = arith.constant 1 : i32
    %0 = arith.muli %arg0, %c1_i32 : i32
    %1 = arith.addi %0, %arg1 : i32
    %c0_i32 = arith.constant 0 : i32
    %c0_i32_0 = arith.constant 0 : i32
    return %c0_i32, %1 : i32, i32
  }
  func.func @transform_1(%arg0: i32, %arg1: i32) -> (i32, i32) {
    %c1_i32 = arith.constant 1 : i32
    %0 = arith.muli %arg0, %c1_i32 : i32
    %1 = arith.addi %0, %arg1 : i32
    %c0_i32 = arith.constant 0 : i32
    %c0_i32_0 = arith.constant 0 : i32
    return %c0_i32, %1 : i32, i32
  }
  func.func @transform_2(%arg0: i32, %arg1: i32) -> (i32, i32, i32) {
    %c0_i32 = arith.constant 0 : i32
    %c0_i32_0 = arith.constant 0 : i32
    %c0_i32_1 = arith.constant 0 : i32
    return %arg0, %c0_i32, %c0_i32_0 : i32, i32, i32
  }
  func.func @transform_3(%arg0: i32, %arg1: i32) -> (i32, i32, i32) {
    %c0_i32 = arith.constant 0 : i32
    %c0_i32_0 = arith.constant 0 : i32
    %c0_i32_1 = arith.constant 0 : i32
    return %arg0, %c0_i32, %c0_i32_0 : i32, i32, i32
  }
  func.func @transform_4(%arg0: i32, %arg1: i32) -> (i32, i32, i32) {
    %c0_i32 = arith.constant 0 : i32
    %c0_i32_0 = arith.constant 0 : i32
    %c0_i32_1 = arith.constant 0 : i32
    return %arg0, %c0_i32, %c0_i32_0 : i32, i32, i32
  }
  func.func @transform_5(%arg0: i32, %arg1: i32) -> (i32, i32, i32) {
    %c0_i32 = arith.constant 0 : i32
    %c0_i32_0 = arith.constant 0 : i32
    %c0_i32_1 = arith.constant 0 : i32
    return %arg0, %c0_i32, %c0_i32_0 : i32, i32, i32
  }
}

module attributes {stable_mosaic.version = 11 : i64} {
  func.func @kernel(%arg0: i32, %arg1: i32, %arg2: memref<8x512xbf16, #tpu.memory_space<vmem>>, %arg3: memref<16x8xbf16, #tpu.memory_space<vmem>>, %arg4: memref<16x1xf32, #tpu.memory_space<vmem>>, %arg5: memref<8x512xbf16, #tpu.memory_space<vmem>>, %arg6: memref<16x8xbf16, #tpu.memory_space<vmem>>, %arg7: memref<16x1xf32, #tpu.memory_space<vmem>>, %arg8: memref<16x512xbf16, #tpu.memory_space<vmem>>, %arg9: memref<16x512xbf16, #tpu.memory_space<vmem>>, %arg10: memref<1x16x16xf32, #tpu.memory_space<vmem>>, %arg11: memref<1x16x1xf32, #tpu.memory_space<vmem>>, %arg12: memref<1x16x16xf32, #tpu.memory_space<vmem>>, %arg13: memref<1x16x1xf32, #tpu.memory_space<vmem>>) attributes {dimension_semantics = [#tpu.dimension_semantics<parallel>, #tpu.dimension_semantics<arbitrary>], iteration_bounds = array<i64: 1, 1>, scalar_prefetch = 0 : i64, scratch_operands = 0 : i64, tpu.core_type = #tpu.core_type<tc>, window_params = [{transform_indices = @transform_0, window_bounds = array<i64: 8, 512>}, {pipeline_mode = #tpu.pipeline_mode<synchronous>, transform_indices = @transform_1, window_bounds = array<i64: 16, 8>}, {pipeline_mode = #tpu.pipeline_mode<synchronous>, transform_indices = @transform_2, window_bounds = array<i64: 16, 1>}, {transform_indices = @transform_3, window_bounds = array<i64: 8, 512>}, {pipeline_mode = #tpu.pipeline_mode<synchronous>, transform_indices = @transform_4, window_bounds = array<i64: 16, 8>}, {pipeline_mode = #tpu.pipeline_mode<synchronous>, transform_indices = @transform_5, window_bounds = array<i64: 16, 1>}, {transform_indices = @transform_6, window_bounds = array<i64: 16, 512>}, {transform_indices = @transform_7, window_bounds = array<i64: 16, 512>}, {transform_indices = @transform_8, window_bounds = array<i64: 1, 16, 16>}, {transform_indices = @transform_9, window_bounds = array<i64: 1, 16, 1>}, {transform_indices = @transform_10, window_bounds = array<i64: 1, 16, 16>}, {transform_indices = @transform_11, window_bounds = array<i64: 1, 16, 1>}]} {
    %c0_i32 = arith.constant 0 : i32
    %0 = arith.cmpi eq, %arg1, %c0_i32 : i32
    %1 = arith.extui %0 : i1 to i32
    %c0_i32_0 = arith.constant 0 : i32
    %2 = arith.cmpi ne, %1, %c0_i32_0 : i32
    scf.if %2 {
      %cst_49 = arith.constant 0.000000e+00 : f32
      %59 = vector.broadcast %cst_49 : f32 to vector<16x16xf32>
      %c0_50 = arith.constant 0 : index
      %c0_51 = arith.constant 0 : index
      %c0_52 = arith.constant 0 : index
      %60 = vector.load %arg10[%c0_50, %c0_51, %c0_52] : memref<1x16x16xf32, #tpu.memory_space<vmem>>, vector<1x16x16xf32>
      %61 = vector.shape_cast %60 : vector<1x16x16xf32> to vector<16x16xf32>
      %62 = vector.shape_cast %59 : vector<16x16xf32> to vector<1x16x16xf32>
      tpu.vector_store %arg10[%c0_50, %c0_51, %c0_52], %62 {strides = array<i32>} : memref<1x16x16xf32, #tpu.memory_space<vmem>>, vector<1x16x16xf32>,
      %cst_53 = arith.constant 0.000000e+00 : f32
      %63 = vector.broadcast %cst_53 : f32 to vector<16x1xf32>
      %c0_54 = arith.constant 0 : index
      %c0_55 = arith.constant 0 : index
      %c0_56 = arith.constant 0 : index
      %64 = vector.load %arg11[%c0_54, %c0_55, %c0_56] : memref<1x16x1xf32, #tpu.memory_space<vmem>>, vector<1x16x1xf32>
      %65 = vector.shape_cast %64 : vector<1x16x1xf32> to vector<16x1xf32>
      %66 = vector.shape_cast %63 : vector<16x1xf32> to vector<1x16x1xf32>
      tpu.vector_store %arg11[%c0_54, %c0_55, %c0_56], %66 {strides = array<i32>} : memref<1x16x1xf32, #tpu.memory_space<vmem>>, vector<1x16x1xf32>,
      %cst_57 = arith.constant 0.000000e+00 : f32
      %67 = vector.broadcast %cst_57 : f32 to vector<16x16xf32>
      %c0_58 = arith.constant 0 : index
      %c0_59 = arith.constant 0 : index
      %c0_60 = arith.constant 0 : index
      %68 = vector.load %arg12[%c0_58, %c0_59, %c0_60] : memref<1x16x16xf32, #tpu.memory_space<vmem>>, vector<1x16x16xf32>
      %69 = vector.shape_cast %68 : vector<1x16x16xf32> to vector<16x16xf32>
      %70 = vector.shape_cast %67 : vector<16x16xf32> to vector<1x16x16xf32>
      tpu.vector_store %arg12[%c0_58, %c0_59, %c0_60], %70 {strides = array<i32>} : memref<1x16x16xf32, #tpu.memory_space<vmem>>, vector<1x16x16xf32>,
      %cst_61 = arith.constant 0.000000e+00 : f32
      %71 = vector.broadcast %cst_61 : f32 to vector<16x1xf32>
      %c0_62 = arith.constant 0 : index
      %c0_63 = arith.constant 0 : index
      %c0_64 = arith.constant 0 : index
      %72 = vector.load %arg13[%c0_62, %c0_63, %c0_64] : memref<1x16x1xf32, #tpu.memory_space<vmem>>, vector<1x16x1xf32>
      %73 = vector.shape_cast %72 : vector<1x16x1xf32> to vector<16x1xf32>
      %74 = vector.shape_cast %71 : vector<16x1xf32> to vector<1x16x1xf32>
      tpu.vector_store %arg13[%c0_62, %c0_63, %c0_64], %74 {strides = array<i32>} : memref<1x16x1xf32, #tpu.memory_space<vmem>>, vector<1x16x1xf32>,
    } else {
    }
    %c0 = arith.constant 0 : index
    %c0_1 = arith.constant 0 : index
    %3 = vector.load %arg2[%c0, %c0_1] : memref<8x512xbf16, #tpu.memory_space<vmem>>, vector<8x512xbf16>
    %cst = arith.constant 0.000000e+00 : bf16
    %4 = vector.broadcast %cst : bf16 to vector<8x512xbf16>
    %5 = arith.maximumf %3, %4 : vector<8x512xbf16>
    %c0_2 = arith.constant 0 : index
    %c0_3 = arith.constant 0 : index
    %6 = vector.load %arg3[%c0_2, %c0_3] : memref<16x8xbf16, #tpu.memory_space<vmem>>, vector<16x8xbf16>
    %cst_4 = arith.constant dense<0.000000e+00> : vector<16x512xf32>
    %7 = tpu.matmul %6, %5, %cst_4 {dimension_numbers = #tpu.dot_dimension_numbers<[1], [0], [0], [1], [0, 0, 1, 1], [], []>} : vector<16x8xbf16>, vector<8x512xbf16>, vector<16x512xf32> -> vector<16x512xf32>
    %c0_5 = arith.constant 0 : index
    %c0_6 = arith.constant 0 : index
    %8 = vector.load %arg4[%c0_5, %c0_6] : memref<16x1xf32, #tpu.memory_space<vmem>>, vector<16x1xf32>
    %9 = vector.broadcast %8 : vector<16x1xf32> to vector<16x512xf32>
    %10 = arith.addf %7, %9 : vector<16x512xf32>
    %11 = arith.truncf %10 : vector<16x512xf32> to vector<16x512xbf16>
    %c0_7 = arith.constant 0 : index
    %c0_8 = arith.constant 0 : index
    %12 = vector.load %arg8[%c0_7, %c0_8] : memref<16x512xbf16, #tpu.memory_space<vmem>>, vector<16x512xbf16>
    tpu.vector_store %arg8[%c0_7, %c0_8], %11 {strides = array<i32>} : memref<16x512xbf16, #tpu.memory_space<vmem>>, vector<16x512xbf16>,
    %cst_9 = arith.constant 0.000000e+00 : bf16
    %13 = vector.broadcast %cst_9 : bf16 to vector<16x512xbf16>
    %14 = arith.maximumf %11, %13 : vector<16x512xbf16>
    %c0_10 = arith.constant 0 : index
    %c0_11 = arith.constant 0 : index
    %c0_12 = arith.constant 0 : index
    %15 = vector.load %arg10[%c0_10, %c0_11, %c0_12] : memref<1x16x16xf32, #tpu.memory_space<vmem>>, vector<1x16x16xf32>
    %16 = vector.shape_cast %15 : vector<1x16x16xf32> to vector<16x16xf32>
    %cst_13 = arith.constant dense<0.000000e+00> : vector<16x16xf32>
    %17 = tpu.matmul %14, %14, %cst_13 {dimension_numbers = #tpu.dot_dimension_numbers<[1], [1], [0], [0], [0, 0, 1, 0], [], []>} : vector<16x512xbf16>, vector<16x512xbf16>, vector<16x16xf32> -> vector<16x16xf32>
    %18 = arith.addf %16, %17 : vector<16x16xf32>
    %c0_14 = arith.constant 0 : index
    %c0_15 = arith.constant 0 : index
    %c0_16 = arith.constant 0 : index
    %19 = vector.load %arg10[%c0_14, %c0_15, %c0_16] : memref<1x16x16xf32, #tpu.memory_space<vmem>>, vector<1x16x16xf32>
    %20 = vector.shape_cast %19 : vector<1x16x16xf32> to vector<16x16xf32>
    %21 = vector.shape_cast %18 : vector<16x16xf32> to vector<1x16x16xf32>
    tpu.vector_store %arg10[%c0_14, %c0_15, %c0_16], %21 {strides = array<i32>} : memref<1x16x16xf32, #tpu.memory_space<vmem>>, vector<1x16x16xf32>,
    %c0_17 = arith.constant 0 : index
    %c0_18 = arith.constant 0 : index
    %c0_19 = arith.constant 0 : index
    %22 = vector.load %arg11[%c0_17, %c0_18, %c0_19] : memref<1x16x1xf32, #tpu.memory_space<vmem>>, vector<1x16x1xf32>
    %23 = vector.shape_cast %22 : vector<1x16x1xf32> to vector<16x1xf32>
    %24 = arith.extf %14 : vector<16x512xbf16> to vector<16x512xf32>
    %cst_20 = arith.constant dense<0.000000e+00> : vector<16xf32>
    %25 = vector.multi_reduction <add>, %24, %cst_20 [1] : vector<16x512xf32> to vector<16xf32>
    %26 = vector.shape_cast %25 : vector<16xf32> to vector<16x1xf32>
    %27 = arith.addf %23, %26 : vector<16x1xf32>
    %c0_21 = arith.constant 0 : index
    %c0_22 = arith.constant 0 : index
    %c0_23 = arith.constant 0 : index
    %28 = vector.load %arg11[%c0_21, %c0_22, %c0_23] : memref<1x16x1xf32, #tpu.memory_space<vmem>>, vector<1x16x1xf32>
    %29 = vector.shape_cast %28 : vector<1x16x1xf32> to vector<16x1xf32>
    %30 = vector.shape_cast %27 : vector<16x1xf32> to vector<1x16x1xf32>
    tpu.vector_store %arg11[%c0_21, %c0_22, %c0_23], %30 {strides = array<i32>} : memref<1x16x1xf32, #tpu.memory_space<vmem>>, vector<1x16x1xf32>,
    %c0_24 = arith.constant 0 : index
    %c0_25 = arith.constant 0 : index
    %31 = vector.load %arg5[%c0_24, %c0_25] : memref<8x512xbf16, #tpu.memory_space<vmem>>, vector<8x512xbf16>
    %cst_26 = arith.constant 0.000000e+00 : bf16
    %32 = vector.broadcast %cst_26 : bf16 to vector<8x512xbf16>
    %33 = arith.maximumf %31, %32 : vector<8x512xbf16>
    %c0_27 = arith.constant 0 : index
    %c0_28 = arith.constant 0 : index
    %34 = vector.load %arg6[%c0_27, %c0_28] : memref<16x8xbf16, #tpu.memory_space<vmem>>, vector<16x8xbf16>
    %cst_29 = arith.constant dense<0.000000e+00> : vector<16x512xf32>
    %35 = tpu.matmul %34, %33, %cst_29 {dimension_numbers = #tpu.dot_dimension_numbers<[1], [0], [0], [1], [0, 0, 1, 1], [], []>} : vector<16x8xbf16>, vector<8x512xbf16>, vector<16x512xf32> -> vector<16x512xf32>
    %c0_30 = arith.constant 0 : index
    %c0_31 = arith.constant 0 : index
    %36 = vector.load %arg7[%c0_30, %c0_31] : memref<16x1xf32, #tpu.memory_space<vmem>>, vector<16x1xf32>
    %37 = vector.broadcast %36 : vector<16x1xf32> to vector<16x512xf32>
    %38 = arith.addf %35, %37 : vector<16x512xf32>
    %39 = arith.truncf %38 : vector<16x512xf32> to vector<16x512xbf16>
    %c0_32 = arith.constant 0 : index
    %c0_33 = arith.constant 0 : index
    %40 = vector.load %arg9[%c0_32, %c0_33] : memref<16x512xbf16, #tpu.memory_space<vmem>>, vector<16x512xbf16>
    tpu.vector_store %arg9[%c0_32, %c0_33], %39 {strides = array<i32>} : memref<16x512xbf16, #tpu.memory_space<vmem>>, vector<16x512xbf16>,
    %cst_34 = arith.constant 0.000000e+00 : bf16
    %41 = vector.broadcast %cst_34 : bf16 to vector<16x512xbf16>
    %42 = arith.maximumf %39, %41 : vector<16x512xbf16>
    %c0_35 = arith.constant 0 : index
    %c0_36 = arith.constant 0 : index
    %c0_37 = arith.constant 0 : index
    %43 = vector.load %arg12[%c0_35, %c0_36, %c0_37] : memref<1x16x16xf32, #tpu.memory_space<vmem>>, vector<1x16x16xf32>
    %44 = vector.shape_cast %43 : vector<1x16x16xf32> to vector<16x16xf32>
    %cst_38 = arith.constant dense<0.000000e+00> : vector<16x16xf32>
    %45 = tpu.matmul %42, %42, %cst_38 {dimension_numbers = #tpu.dot_dimension_numbers<[1], [1], [0], [0], [0, 0, 1, 0], [], []>} : vector<16x512xbf16>, vector<16x512xbf16>, vector<16x16xf32> -> vector<16x16xf32>
    %46 = arith.addf %44, %45 : vector<16x16xf32>
    %c0_39 = arith.constant 0 : index
    %c0_40 = arith.constant 0 : index
    %c0_41 = arith.constant 0 : index
    %47 = vector.load %arg12[%c0_39, %c0_40, %c0_41] : memref<1x16x16xf32, #tpu.memory_space<vmem>>, vector<1x16x16xf32>
    %48 = vector.shape_cast %47 : vector<1x16x16xf32> to vector<16x16xf32>
    %49 = vector.shape_cast %46 : vector<16x16xf32> to vector<1x16x16xf32>
    tpu.vector_store %arg12[%c0_39, %c0_40, %c0_41], %49 {strides = array<i32>} : memref<1x16x16xf32, #tpu.memory_space<vmem>>, vector<1x16x16xf32>,
    %c0_42 = arith.constant 0 : index
    %c0_43 = arith.constant 0 : index
    %c0_44 = arith.constant 0 : index
    %50 = vector.load %arg13[%c0_42, %c0_43, %c0_44] : memref<1x16x1xf32, #tpu.memory_space<vmem>>, vector<1x16x1xf32>
    %51 = vector.shape_cast %50 : vector<1x16x1xf32> to vector<16x1xf32>
    %52 = arith.extf %42 : vector<16x512xbf16> to vector<16x512xf32>
    %cst_45 = arith.constant dense<0.000000e+00> : vector<16xf32>
    %53 = vector.multi_reduction <add>, %52, %cst_45 [1] : vector<16x512xf32> to vector<16xf32>
    %54 = vector.shape_cast %53 : vector<16xf32> to vector<16x1xf32>
    %55 = arith.addf %51, %54 : vector<16x1xf32>
    %c0_46 = arith.constant 0 : index
    %c0_47 = arith.constant 0 : index
    %c0_48 = arith.constant 0 : index
    %56 = vector.load %arg13[%c0_46, %c0_47, %c0_48] : memref<1x16x1xf32, #tpu.memory_space<vmem>>, vector<1x16x1xf32>
    %57 = vector.shape_cast %56 : vector<1x16x1xf32> to vector<16x1xf32>
    %58 = vector.shape_cast %55 : vector<16x1xf32> to vector<1x16x1xf32>
    tpu.vector_store %arg13[%c0_46, %c0_47, %c0_48], %58 {strides = array<i32>} : memref<1x16x1xf32, #tpu.memory_space<vmem>>, vector<1x16x1xf32>,
    return
  }
  func.func @transform_0(%arg0: i32, %arg1: i32) -> (i32, i32) {
    %c1_i32 = arith.constant 1 : i32
    %0 = arith.muli %arg0, %c1_i32 : i32
    %1 = arith.addi %0, %arg1 : i32
    %c0_i32 = arith.constant 0 : i32
    %c0_i32_0 = arith.constant 0 : i32
    return %c0_i32, %1 : i32, i32
  }
  func.func @transform_1(%arg0: i32, %arg1: i32) -> (i32, i32) {
    %c0_i32 = arith.constant 0 : i32
    %c0_i32_0 = arith.constant 0 : i32
    %c0_i32_1 = arith.constant 0 : i32
    return %c0_i32, %c0_i32_0 : i32, i32
  }
  func.func @transform_2(%arg0: i32, %arg1: i32) -> (i32, i32) {
    %c0_i32 = arith.constant 0 : i32
    %c0_i32_0 = arith.constant 0 : i32
    %c0_i32_1 = arith.constant 0 : i32
    return %c0_i32, %c0_i32_0 : i32, i32
  }
  func.func @transform_3(%arg0: i32, %arg1: i32) -> (i32, i32) {
    %c1_i32 = arith.constant 1 : i32
    %0 = arith.muli %arg0, %c1_i32 : i32
    %1 = arith.addi %0, %arg1 : i32
    %c0_i32 = arith.constant 0 : i32
    %c0_i32_0 = arith.constant 0 : i32
    return %c0_i32, %1 : i32, i32
  }
  func.func @transform_4(%arg0: i32, %arg1: i32) -> (i32, i32) {
    %c0_i32 = arith.constant 0 : i32
    %c0_i32_0 = arith.constant 0 : i32
    %c0_i32_1 = arith.constant 0 : i32
    return %c0_i32, %c0_i32_0 : i32, i32
  }
  func.func @transform_5(%arg0: i32, %arg1: i32) -> (i32, i32) {
    %c0_i32 = arith.constant 0 : i32
    %c0_i32_0 = arith.constant 0 : i32
    %c0_i32_1 = arith.constant 0 : i32
    return %c0_i32, %c0_i32_0 : i32, i32
  }
  func.func @transform_6(%arg0: i32, %arg1: i32) -> (i32, i32) {
    %c1_i32 = arith.constant 1 : i32
    %0 = arith.muli %arg0, %c1_i32 : i32
    %1 = arith.addi %0, %arg1 : i32
    %c0_i32 = arith.constant 0 : i32
    %c0_i32_0 = arith.constant 0 : i32
    return %c0_i32, %1 : i32, i32
  }
  func.func @transform_7(%arg0: i32, %arg1: i32) -> (i32, i32) {
    %c1_i32 = arith.constant 1 : i32
    %0 = arith.muli %arg0, %c1_i32 : i32
    %1 = arith.addi %0, %arg1 : i32
    %c0_i32 = arith.constant 0 : i32
    %c0_i32_0 = arith.constant 0 : i32
    return %c0_i32, %1 : i32, i32
  }
  func.func @transform_8(%arg0: i32, %arg1: i32) -> (i32, i32, i32) {
    %c0_i32 = arith.constant 0 : i32
    %c0_i32_0 = arith.constant 0 : i32
    %c0_i32_1 = arith.constant 0 : i32
    return %arg0, %c0_i32, %c0_i32_0 : i32, i32, i32
  }
  func.func @transform_9(%arg0: i32, %arg1: i32) -> (i32, i32, i32) {
    %c0_i32 = arith.constant 0 : i32
    %c0_i32_0 = arith.constant 0 : i32
    %c0_i32_1 = arith.constant 0 : i32
    return %arg0, %c0_i32, %c0_i32_0 : i32, i32, i32
  }
  func.func @transform_10(%arg0: i32, %arg1: i32) -> (i32, i32, i32) {
    %c0_i32 = arith.constant 0 : i32
    %c0_i32_0 = arith.constant 0 : i32
    %c0_i32_1 = arith.constant 0 : i32
    return %arg0, %c0_i32, %c0_i32_0 : i32, i32, i32
  }
  func.func @transform_11(%arg0: i32, %arg1: i32) -> (i32, i32, i32) {
    %c0_i32 = arith.constant 0 : i32
    %c0_i32_0 = arith.constant 0 : i32
    %c0_i32_1 = arith.constant 0 : i32
    return %arg0, %c0_i32, %c0_i32_0 : i32, i32, i32
  }
}

module attributes {stable_mosaic.version = 11 : i64} {
  func.func @kernel(%arg0: i32, %arg1: i32, %arg2: memref<16x512xbf16, #tpu.memory_space<vmem>>, %arg3: memref<16x512xbf16, #tpu.memory_space<vmem>>, %arg4: memref<16x16xbf16, #tpu.memory_space<vmem>>, %arg5: memref<16x1xf32, #tpu.memory_space<vmem>>, %arg6: memref<16x512xbf16, #tpu.memory_space<vmem>>, %arg7: memref<1x16x16xf32, #tpu.memory_space<vmem>>, %arg8: memref<1x16x1xf32, #tpu.memory_space<vmem>>) attributes {dimension_semantics = [#tpu.dimension_semantics<parallel>, #tpu.dimension_semantics<arbitrary>], iteration_bounds = array<i64: 1, 1>, scalar_prefetch = 0 : i64, scratch_operands = 0 : i64, tpu.core_type = #tpu.core_type<tc>, window_params = [{transform_indices = @transform_0, window_bounds = array<i64: 16, 512>}, {transform_indices = @transform_1, window_bounds = array<i64: 16, 512>}, {pipeline_mode = #tpu.pipeline_mode<synchronous>, transform_indices = @transform_2, window_bounds = array<i64: 16, 16>}, {pipeline_mode = #tpu.pipeline_mode<synchronous>, transform_indices = @transform_3, window_bounds = array<i64: 16, 1>}, {transform_indices = @transform_4, window_bounds = array<i64: 16, 512>}, {transform_indices = @transform_5, window_bounds = array<i64: 1, 16, 16>}, {transform_indices = @transform_6, window_bounds = array<i64: 1, 16, 1>}]} {
    %c0_i32 = arith.constant 0 : i32
    %0 = arith.cmpi eq, %arg1, %c0_i32 : i32
    %1 = arith.extui %0 : i1 to i32
    %c0_i32_0 = arith.constant 0 : i32
    %2 = arith.cmpi ne, %1, %c0_i32_0 : i32
    scf.if %2 {
      %cst_26 = arith.constant 0.000000e+00 : f32
      %34 = vector.broadcast %cst_26 : f32 to vector<16x16xf32>
      %c0_27 = arith.constant 0 : index
      %c0_28 = arith.constant 0 : index
      %c0_29 = arith.constant 0 : index
      %35 = vector.load %arg7[%c0_27, %c0_28, %c0_29] : memref<1x16x16xf32, #tpu.memory_space<vmem>>, vector<1x16x16xf32>
      %36 = vector.shape_cast %35 : vector<1x16x16xf32> to vector<16x16xf32>
      %37 = vector.shape_cast %34 : vector<16x16xf32> to vector<1x16x16xf32>
      tpu.vector_store %arg7[%c0_27, %c0_28, %c0_29], %37 {strides = array<i32>} : memref<1x16x16xf32, #tpu.memory_space<vmem>>, vector<1x16x16xf32>,
      %cst_30 = arith.constant 0.000000e+00 : f32
      %38 = vector.broadcast %cst_30 : f32 to vector<16x1xf32>
      %c0_31 = arith.constant 0 : index
      %c0_32 = arith.constant 0 : index
      %c0_33 = arith.constant 0 : index
      %39 = vector.load %arg8[%c0_31, %c0_32, %c0_33] : memref<1x16x1xf32, #tpu.memory_space<vmem>>, vector<1x16x1xf32>
      %40 = vector.shape_cast %39 : vector<1x16x1xf32> to vector<16x1xf32>
      %41 = vector.shape_cast %38 : vector<16x1xf32> to vector<1x16x1xf32>
      tpu.vector_store %arg8[%c0_31, %c0_32, %c0_33], %41 {strides = array<i32>} : memref<1x16x1xf32, #tpu.memory_space<vmem>>, vector<1x16x1xf32>,
    } else {
    }
    %c0 = arith.constant 0 : index
    %c0_1 = arith.constant 0 : index
    %3 = vector.load %arg2[%c0, %c0_1] : memref<16x512xbf16, #tpu.memory_space<vmem>>, vector<16x512xbf16>
    %cst = arith.constant 0.000000e+00 : bf16
    %4 = vector.broadcast %cst : bf16 to vector<16x512xbf16>
    %5 = arith.maximumf %3, %4 : vector<16x512xbf16>
    %c0_2 = arith.constant 0 : index
    %c0_3 = arith.constant 0 : index
    %6 = vector.load %arg4[%c0_2, %c0_3] : memref<16x16xbf16, #tpu.memory_space<vmem>>, vector<16x16xbf16>
    %cst_4 = arith.constant dense<0.000000e+00> : vector<16x512xf32>
    %7 = tpu.matmul %6, %5, %cst_4 {dimension_numbers = #tpu.dot_dimension_numbers<[1], [0], [0], [1], [0, 0, 1, 1], [], []>} : vector<16x16xbf16>, vector<16x512xbf16>, vector<16x512xf32> -> vector<16x512xf32>
    %c0_5 = arith.constant 0 : index
    %c0_6 = arith.constant 0 : index
    %8 = vector.load %arg3[%c0_5, %c0_6] : memref<16x512xbf16, #tpu.memory_space<vmem>>, vector<16x512xbf16>
    %9 = arith.extf %8 : vector<16x512xbf16> to vector<16x512xf32>
    %10 = arith.addf %7, %9 : vector<16x512xf32>
    %c0_7 = arith.constant 0 : index
    %c0_8 = arith.constant 0 : index
    %11 = vector.load %arg5[%c0_7, %c0_8] : memref<16x1xf32, #tpu.memory_space<vmem>>, vector<16x1xf32>
    %12 = vector.broadcast %11 : vector<16x1xf32> to vector<16x512xf32>
    %13 = arith.addf %10, %12 : vector<16x512xf32>
    %14 = arith.truncf %13 : vector<16x512xf32> to vector<16x512xbf16>
    %c0_9 = arith.constant 0 : index
    %c0_10 = arith.constant 0 : index
    %15 = vector.load %arg6[%c0_9, %c0_10] : memref<16x512xbf16, #tpu.memory_space<vmem>>, vector<16x512xbf16>
    tpu.vector_store %arg6[%c0_9, %c0_10], %14 {strides = array<i32>} : memref<16x512xbf16, #tpu.memory_space<vmem>>, vector<16x512xbf16>,
    %cst_11 = arith.constant 0.000000e+00 : bf16
    %16 = vector.broadcast %cst_11 : bf16 to vector<16x512xbf16>
    %17 = arith.maximumf %14, %16 : vector<16x512xbf16>
    %c0_12 = arith.constant 0 : index
    %c0_13 = arith.constant 0 : index
    %c0_14 = arith.constant 0 : index
    %18 = vector.load %arg7[%c0_12, %c0_13, %c0_14] : memref<1x16x16xf32, #tpu.memory_space<vmem>>, vector<1x16x16xf32>
    %19 = vector.shape_cast %18 : vector<1x16x16xf32> to vector<16x16xf32>
    %cst_15 = arith.constant dense<0.000000e+00> : vector<16x16xf32>
    %20 = tpu.matmul %17, %17, %cst_15 {dimension_numbers = #tpu.dot_dimension_numbers<[1], [1], [0], [0], [0, 0, 1, 0], [], []>} : vector<16x512xbf16>, vector<16x512xbf16>, vector<16x16xf32> -> vector<16x16xf32>
    %21 = arith.addf %19, %20 : vector<16x16xf32>
    %c0_16 = arith.constant 0 : index
    %c0_17 = arith.constant 0 : index
    %c0_18 = arith.constant 0 : index
    %22 = vector.load %arg7[%c0_16, %c0_17, %c0_18] : memref<1x16x16xf32, #tpu.memory_space<vmem>>, vector<1x16x16xf32>
    %23 = vector.shape_cast %22 : vector<1x16x16xf32> to vector<16x16xf32>
    %24 = vector.shape_cast %21 : vector<16x16xf32> to vector<1x16x16xf32>
    tpu.vector_store %arg7[%c0_16, %c0_17, %c0_18], %24 {strides = array<i32>} : memref<1x16x16xf32, #tpu.memory_space<vmem>>, vector<1x16x16xf32>,
    %c0_19 = arith.constant 0 : index
    %c0_20 = arith.constant 0 : index
    %c0_21 = arith.constant 0 : index
    %25 = vector.load %arg8[%c0_19, %c0_20, %c0_21] : memref<1x16x1xf32, #tpu.memory_space<vmem>>, vector<1x16x1xf32>
    %26 = vector.shape_cast %25 : vector<1x16x1xf32> to vector<16x1xf32>
    %27 = arith.extf %17 : vector<16x512xbf16> to vector<16x512xf32>
    %cst_22 = arith.constant dense<0.000000e+00> : vector<16xf32>
    %28 = vector.multi_reduction <add>, %27, %cst_22 [1] : vector<16x512xf32> to vector<16xf32>
    %29 = vector.shape_cast %28 : vector<16xf32> to vector<16x1xf32>
    %30 = arith.addf %26, %29 : vector<16x1xf32>
    %c0_23 = arith.constant 0 : index
    %c0_24 = arith.constant 0 : index
    %c0_25 = arith.constant 0 : index
    %31 = vector.load %arg8[%c0_23, %c0_24, %c0_25] : memref<1x16x1xf32, #tpu.memory_space<vmem>>, vector<1x16x1xf32>
    %32 = vector.shape_cast %31 : vector<1x16x1xf32> to vector<16x1xf32>
    %33 = vector.shape_cast %30 : vector<16x1xf32> to vector<1x16x1xf32>
    tpu.vector_store %arg8[%c0_23, %c0_24, %c0_25], %33 {strides = array<i32>} : memref<1x16x1xf32, #tpu.memory_space<vmem>>, vector<1x16x1xf32>,
    return
  }
  func.func @transform_0(%arg0: i32, %arg1: i32) -> (i32, i32) {
    %c1_i32 = arith.constant 1 : i32
    %0 = arith.muli %arg0, %c1_i32 : i32
    %1 = arith.addi %0, %arg1 : i32
    %c0_i32 = arith.constant 0 : i32
    %c0_i32_0 = arith.constant 0 : i32
    return %c0_i32, %1 : i32, i32
  }
  func.func @transform_1(%arg0: i32, %arg1: i32) -> (i32, i32) {
    %c1_i32 = arith.constant 1 : i32
    %0 = arith.muli %arg0, %c1_i32 : i32
    %1 = arith.addi %0, %arg1 : i32
    %c0_i32 = arith.constant 0 : i32
    %c0_i32_0 = arith.constant 0 : i32
    return %c0_i32, %1 : i32, i32
  }
  func.func @transform_2(%arg0: i32, %arg1: i32) -> (i32, i32) {
    %c0_i32 = arith.constant 0 : i32
    %c0_i32_0 = arith.constant 0 : i32
    %c0_i32_1 = arith.constant 0 : i32
    return %c0_i32, %c0_i32_0 : i32, i32
  }
  func.func @transform_3(%arg0: i32, %arg1: i32) -> (i32, i32) {
    %c0_i32 = arith.constant 0 : i32
    %c0_i32_0 = arith.constant 0 : i32
    %c0_i32_1 = arith.constant 0 : i32
    return %c0_i32, %c0_i32_0 : i32, i32
  }
  func.func @transform_4(%arg0: i32, %arg1: i32) -> (i32, i32) {
    %c1_i32 = arith.constant 1 : i32
    %0 = arith.muli %arg0, %c1_i32 : i32
    %1 = arith.addi %0, %arg1 : i32
    %c0_i32 = arith.constant 0 : i32
    %c0_i32_0 = arith.constant 0 : i32
    return %c0_i32, %1 : i32, i32
  }
  func.func @transform_5(%arg0: i32, %arg1: i32) -> (i32, i32, i32) {
    %c0_i32 = arith.constant 0 : i32
    %c0_i32_0 = arith.constant 0 : i32
    %c0_i32_1 = arith.constant 0 : i32
    return %arg0, %c0_i32, %c0_i32_0 : i32, i32, i32
  }
  func.func @transform_6(%arg0: i32, %arg1: i32) -> (i32, i32, i32) {
    %c0_i32 = arith.constant 0 : i32
    %c0_i32_0 = arith.constant 0 : i32
    %c0_i32_1 = arith.constant 0 : i32
    return %arg0, %c0_i32, %c0_i32_0 : i32, i32, i32
  }
}

module attributes {stable_mosaic.version = 11 : i64} {
  func.func @kernel(%arg0: i32, %arg1: i32, %arg2: memref<16x512xbf16, #tpu.memory_space<vmem>>, %arg3: memref<16x512xbf16, #tpu.memory_space<vmem>>, %arg4: memref<16x16xbf16, #tpu.memory_space<vmem>>, %arg5: memref<16x1xf32, #tpu.memory_space<vmem>>, %arg6: memref<16x512xbf16, #tpu.memory_space<vmem>>) attributes {dimension_semantics = [#tpu.dimension_semantics<parallel>, #tpu.dimension_semantics<parallel>], iteration_bounds = array<i64: 1, 1>, scalar_prefetch = 0 : i64, scratch_operands = 0 : i64, tpu.core_type = #tpu.core_type<tc>, window_params = [{transform_indices = @transform_0, window_bounds = array<i64: 16, 512>}, {transform_indices = @transform_1, window_bounds = array<i64: 16, 512>}, {pipeline_mode = #tpu.pipeline_mode<synchronous>, transform_indices = @transform_2, window_bounds = array<i64: 16, 16>}, {pipeline_mode = #tpu.pipeline_mode<synchronous>, transform_indices = @transform_3, window_bounds = array<i64: 16, 1>}, {transform_indices = @transform_4, window_bounds = array<i64: 16, 512>}]} {
    %c0 = arith.constant 0 : index
    %c0_0 = arith.constant 0 : index
    %0 = vector.load %arg2[%c0, %c0_0] : memref<16x512xbf16, #tpu.memory_space<vmem>>, vector<16x512xbf16>
    %cst = arith.constant 0.000000e+00 : bf16
    %1 = vector.broadcast %cst : bf16 to vector<16x512xbf16>
    %2 = arith.maximumf %0, %1 : vector<16x512xbf16>
    %c0_1 = arith.constant 0 : index
    %c0_2 = arith.constant 0 : index
    %3 = vector.load %arg4[%c0_1, %c0_2] : memref<16x16xbf16, #tpu.memory_space<vmem>>, vector<16x16xbf16>
    %cst_3 = arith.constant dense<0.000000e+00> : vector<16x512xf32>
    %4 = tpu.matmul %3, %2, %cst_3 {dimension_numbers = #tpu.dot_dimension_numbers<[1], [0], [0], [1], [0, 0, 1, 1], [], []>} : vector<16x16xbf16>, vector<16x512xbf16>, vector<16x512xf32> -> vector<16x512xf32>
    %c0_4 = arith.constant 0 : index
    %c0_5 = arith.constant 0 : index
    %5 = vector.load %arg3[%c0_4, %c0_5] : memref<16x512xbf16, #tpu.memory_space<vmem>>, vector<16x512xbf16>
    %6 = arith.extf %5 : vector<16x512xbf16> to vector<16x512xf32>
    %7 = arith.addf %4, %6 : vector<16x512xf32>
    %c0_6 = arith.constant 0 : index
    %c0_7 = arith.constant 0 : index
    %8 = vector.load %arg5[%c0_6, %c0_7] : memref<16x1xf32, #tpu.memory_space<vmem>>, vector<16x1xf32>
    %9 = vector.broadcast %8 : vector<16x1xf32> to vector<16x512xf32>
    %10 = arith.addf %7, %9 : vector<16x512xf32>
    %11 = arith.truncf %10 : vector<16x512xf32> to vector<16x512xbf16>
    %c0_8 = arith.constant 0 : index
    %c0_9 = arith.constant 0 : index
    %12 = vector.load %arg6[%c0_8, %c0_9] : memref<16x512xbf16, #tpu.memory_space<vmem>>, vector<16x512xbf16>
    tpu.vector_store %arg6[%c0_8, %c0_9], %11 {strides = array<i32>} : memref<16x512xbf16, #tpu.memory_space<vmem>>, vector<16x512xbf16>,
    return
  }
  func.func @transform_0(%arg0: i32, %arg1: i32) -> (i32, i32) {
    %c1_i32 = arith.constant 1 : i32
    %0 = arith.muli %arg0, %c1_i32 : i32
    %1 = arith.addi %0, %arg1 : i32
    %c0_i32 = arith.constant 0 : i32
    %c0_i32_0 = arith.constant 0 : i32
    return %c0_i32, %1 : i32, i32
  }
  func.func @transform_1(%arg0: i32, %arg1: i32) -> (i32, i32) {
    %c1_i32 = arith.constant 1 : i32
    %0 = arith.muli %arg0, %c1_i32 : i32
    %1 = arith.addi %0, %arg1 : i32
    %c0_i32 = arith.constant 0 : i32
    %c0_i32_0 = arith.constant 0 : i32
    return %c0_i32, %1 : i32, i32
  }
  func.func @transform_2(%arg0: i32, %arg1: i32) -> (i32, i32) {
    %c0_i32 = arith.constant 0 : i32
    %c0_i32_0 = arith.constant 0 : i32
    %c0_i32_1 = arith.constant 0 : i32
    return %c0_i32, %c0_i32_0 : i32, i32
  }
  func.func @transform_3(%arg0: i32, %arg1: i32) -> (i32, i32) {
    %c0_i32 = arith.constant 0 : i32
    %c0_i32_0 = arith.constant 0 : i32
    %c0_i32_1 = arith.constant 0 : i32
    return %c0_i32, %c0_i32_0 : i32, i32
  }
  func.func @transform_4(%arg0: i32, %arg1: i32) -> (i32, i32) {
    %c1_i32 = arith.constant 1 : i32
    %0 = arith.muli %arg0, %c1_i32 : i32
    %1 = arith.addi %0, %arg1 : i32
    %c0_i32 = arith.constant 0 : i32
    %c0_i32_0 = arith.constant 0 : i32
    return %c0_i32, %1 : i32, i32
  }
}

module attributes {stable_mosaic.version = 11 : i64} {
  func.func @kernel(%arg0: i32, %arg1: i32, %arg2: memref<16x512xbf16, #tpu.memory_space<vmem>>, %arg3: memref<16x512xbf16, #tpu.memory_space<vmem>>, %arg4: memref<16x32xbf16, #tpu.memory_space<vmem>>, %arg5: memref<16x1xf32, #tpu.memory_space<vmem>>, %arg6: memref<16x512xbf16, #tpu.memory_space<vmem>>) attributes {dimension_semantics = [#tpu.dimension_semantics<parallel>, #tpu.dimension_semantics<parallel>], iteration_bounds = array<i64: 1, 1>, scalar_prefetch = 0 : i64, scratch_operands = 0 : i64, tpu.core_type = #tpu.core_type<tc>, window_params = [{transform_indices = @transform_0, window_bounds = array<i64: 16, 512>}, {transform_indices = @transform_1, window_bounds = array<i64: 16, 512>}, {pipeline_mode = #tpu.pipeline_mode<synchronous>, transform_indices = @transform_2, window_bounds = array<i64: 16, 32>}, {pipeline_mode = #tpu.pipeline_mode<synchronous>, transform_indices = @transform_3, window_bounds = array<i64: 16, 1>}, {transform_indices = @transform_4, window_bounds = array<i64: 16, 512>}]} {
    %c0 = arith.constant 0 : index
    %c0_0 = arith.constant 0 : index
    %0 = vector.load %arg2[%c0, %c0_0] : memref<16x512xbf16, #tpu.memory_space<vmem>>, vector<16x512xbf16>
    %cst = arith.constant 0.000000e+00 : bf16
    %1 = vector.broadcast %cst : bf16 to vector<16x512xbf16>
    %2 = arith.maximumf %0, %1 : vector<16x512xbf16>
    %c0_1 = arith.constant 0 : index
    %c0_2 = arith.constant 0 : index
    %3 = vector.load %arg3[%c0_1, %c0_2] : memref<16x512xbf16, #tpu.memory_space<vmem>>, vector<16x512xbf16>
    %cst_3 = arith.constant 0.000000e+00 : bf16
    %4 = vector.broadcast %cst_3 : bf16 to vector<16x512xbf16>
    %5 = arith.maximumf %3, %4 : vector<16x512xbf16>
    %6 = tpu.concatenate %2, %5 in 0 : vector<16x512xbf16>, vector<16x512xbf16> -> vector<32x512xbf16>
    %c0_4 = arith.constant 0 : index
    %c0_5 = arith.constant 0 : index
    %7 = vector.load %arg4[%c0_4, %c0_5] : memref<16x32xbf16, #tpu.memory_space<vmem>>, vector<16x32xbf16>
    %cst_6 = arith.constant dense<0.000000e+00> : vector<16x512xf32>
    %8 = tpu.matmul %7, %6, %cst_6 {dimension_numbers = #tpu.dot_dimension_numbers<[1], [0], [0], [1], [0, 0, 1, 1], [], []>} : vector<16x32xbf16>, vector<32x512xbf16>, vector<16x512xf32> -> vector<16x512xf32>
    %c0_7 = arith.constant 0 : index
    %c0_8 = arith.constant 0 : index
    %9 = vector.load %arg5[%c0_7, %c0_8] : memref<16x1xf32, #tpu.memory_space<vmem>>, vector<16x1xf32>
    %10 = vector.broadcast %9 : vector<16x1xf32> to vector<16x512xf32>
    %11 = arith.addf %8, %10 : vector<16x512xf32>
    %12 = arith.truncf %11 : vector<16x512xf32> to vector<16x512xbf16>
    %c0_9 = arith.constant 0 : index
    %c0_10 = arith.constant 0 : index
    %13 = vector.load %arg6[%c0_9, %c0_10] : memref<16x512xbf16, #tpu.memory_space<vmem>>, vector<16x512xbf16>
    tpu.vector_store %arg6[%c0_9, %c0_10], %12 {strides = array<i32>} : memref<16x512xbf16, #tpu.memory_space<vmem>>, vector<16x512xbf16>,
    return
  }
  func.func @transform_0(%arg0: i32, %arg1: i32) -> (i32, i32) {
    %c1_i32 = arith.constant 1 : i32
    %0 = arith.muli %arg0, %c1_i32 : i32
    %1 = arith.addi %0, %arg1 : i32
    %c0_i32 = arith.constant 0 : i32
    %c0_i32_0 = arith.constant 0 : i32
    return %c0_i32, %1 : i32, i32
  }
  func.func @transform_1(%arg0: i32, %arg1: i32) -> (i32, i32) {
    %c1_i32 = arith.constant 1 : i32
    %0 = arith.muli %arg0, %c1_i32 : i32
    %1 = arith.addi %0, %arg1 : i32
    %c0_i32 = arith.constant 0 : i32
    %c0_i32_0 = arith.constant 0 : i32
    return %c0_i32, %1 : i32, i32
  }
  func.func @transform_2(%arg0: i32, %arg1: i32) -> (i32, i32) {
    %c0_i32 = arith.constant 0 : i32
    %c0_i32_0 = arith.constant 0 : i32
    %c0_i32_1 = arith.constant 0 : i32
    return %c0_i32, %c0_i32_0 : i32, i32
  }
  func.func @transform_3(%arg0: i32, %arg1: i32) -> (i32, i32) {
    %c0_i32 = arith.constant 0 : i32
    %c0_i32_0 = arith.constant 0 : i32
    %c0_i32_1 = arith.constant 0 : i32
    return %c0_i32, %c0_i32_0 : i32, i32
  }
  func.func @transform_4(%arg0: i32, %arg1: i32) -> (i32, i32) {
    %c1_i32 = arith.constant 1 : i32
    %0 = arith.muli %arg0, %c1_i32 : i32
    %1 = arith.addi %0, %arg1 : i32
    %c0_i32 = arith.constant 0 : i32
    %c0_i32_0 = arith.constant 0 : i32
    return %c0_i32, %1 : i32, i32
  }
}

</mosaic_0001>

<llo_original>
// kernel: a_call__.6
$region0: #{a_call__.6}
  #allocation0 [shape = 'u32[]', space=smem, size = 0x4, offset = 0x4, fixed_abs, tag = 'smem constant byte address 0x4 - core index']
  #allocation1 [shape = 'u32[144,128]{1,0:T(1,128)}', space=vmem, size = 0x12000, scoped, tag = 'internal scratch']
  %s0 = inlined_call_operand.vmem [shape: bf16[8,512], index: 0, kind: input, shape index: {}]
  %s1 = inlined_call_operand.vmem [shape: bf16[8,512], index: 1, kind: input, shape index: {}]
  %s2 = inlined_call_operand.vmem [shape: f32[1,8,8], index: 2, kind: output, shape index: {0}]
  %s3 = inlined_call_operand.vmem [shape: f32[1,8,1], index: 3, kind: output, shape index: {1}]
  %s4 = inlined_call_operand.vmem [shape: f32[1,8,8], index: 4, kind: output, shape index: {2}]
  %s5 = inlined_call_operand.vmem [shape: f32[1,8,1], index: 5, kind: output, shape index: {3}]
  %6 = xla_tuple %s2, %s3, %s4, %s5
  %s7 = sld [smem:[#allocation0]]
  $region46: #{a_call__.6} parent=0
    _
  %s9 = ssub.s32 1, %s7
  %s10 = scalar_select 0, %s9, %s7
  // Predicated region
  $region2: #{a_call__.6} parent=0 // pred_check
    _
  $region3: #{a_call__.6} parent=0 // pred_check_branch
    %12 = sbr.rel (0) target = $region5
  $region4: #{a_call__.6} parent=0 // pred_region
    %s13 = sadd.s32 0, 0
    %s14 = smul.u32 4, %s13
    %p15 = scmp.lt.s32.totalorder %s14, 3
    %s16 = scalar_select %p15, %s14, 3
    %s17 = smul.addr %s16, 4
    %s18 = scalar_lea.vmem %s0, %s17
    %s19 = sadd.s32 0, 0
    %s20 = smul.u32 4, %s19
  $region5: #{a_call__.6} parent=0 // pred_fallthru
    _
  // Predicated region
  $region6: #{a_call__.6} parent=0 // pred_check
    _
  $region7: #{a_call__.6} parent=0 // pred_check_branch
    %22 = sbr.rel (0) target = $region9
  $region8: #{a_call__.6} parent=0 // pred_region
    %s23 = sadd.s32 0, 0
    %s24 = smul.u32 4, %s23
    %p25 = scmp.lt.s32.totalorder %s24, 3
    %s26 = scalar_select %p25, %s24, 3
    %s27 = smul.addr %s26, 4
    %s28 = scalar_lea.vmem %s1, %s27
    %s29 = sadd.s32 0, 0
    %s30 = smul.u32 4, %s29
  $region9: #{a_call__.6} parent=0 // pred_fallthru
    _
  %s31 = sadd.s32 0, 0
  %s32 = smul.u32 4, %s31
  %p33 = scmp.lt.s32.totalorder %s32, 3
  %s34 = scalar_select %p33, %s32, 3
  %s35 = smul.addr %s34, 4
  %s36 = scalar_lea.vmem %s0, %s35
  %s37 = sadd.s32 0, 0
  %s38 = smul.u32 4, %s37
  %p39 = scmp.lt.s32.totalorder %s38, 3
  %s40 = scalar_select %p39, %s38, 3
  %s41 = smul.addr %s40, 4
  %s42 = scalar_lea.vmem %s1, %s41
  %s43 = sadd.s32 0, 0
  %s44 = smul.u32 4, %s43
  %p45 = scmp.lt.s32.totalorder %s44, 3
  %s46 = scalar_select %p45, %s44, 3
  %s47 = smul.addr %s46, 4
  %s48 = scalar_lea.vmem %s0, %s47
  %s49 = sadd.s32 0, 0
  %s50 = smul.u32 4, %s49
  %s51 = sadd.s32 0, 0
  %s52 = smul.u32 4, %s51
  %p53 = scmp.lt.s32.totalorder %s52, 3
  %s54 = scalar_select %p53, %s52, 3
  %s55 = smul.addr %s54, 4
  %s56 = scalar_lea.vmem %s1, %s55
  %s57 = sadd.s32 0, 0
  %s58 = smul.u32 4, %s57
  %p60 = scmp.eq.s32.totalorder 0, 0
  // Predicated region
  $region10: #{a_call__.6} parent=0 // pred_check
    %p61 = pneg %p60
  $region11: #{a_call__.6} parent=0 // pred_check_branch
    %63 = sbr.rel (%p61) target = $region13
  $region12: #{a_call__.6} parent=0 // pred_region
    %vm64 = vcmask 64512
    %65 = vst.msk [vmem:[%s2] sm:$0xff] %vm64, 0.0
    %vm66 = vcmask 7168
    %67 = vst.msk [vmem:[%s3] sm:$0xff] %vm66, 0.0
    %68 = vst.msk [vmem:[%s4] sm:$0xff] %vm64, 0.0
    %69 = vst.msk [vmem:[%s5] sm:$0xff] %vm66, 0.0
  $region13: #{a_call__.6} parent=0 // pred_fallthru
    _
  %v70 = vld [vmem:[%s48] sm:$0xff]
  %v71 = vld [vmem:[%s48 + $0x8] sm:$0xff]
  %v72 = vmax.bf16 %v70, 0
  %v73 = vmax.bf16 %v71, 0
  %v74 = vld [vmem:[%s2] sm:$0xff]
  %v77 = vunpack.c.l.b16 %v72
  %v78 = vunpack.c.h.b16 %v72
  %v79 = vunpack.c.l.b16 %v73
  %v80 = vunpack.c.h.b16 %v73
  %v81 = vpack.c.b16 %v77, %v77
  %v82 = vpack.c.b16 %v78, %v78
  %v83 = vpack.c.b16 %v79, %v79
  %v84 = vpack.c.b16 %v80, %v80
  %89 = vmatprep.subr.bf16.mxu0 0
  %90 = vmatpush1.bf16.xpose.msra.mxu0 0
  %91 = vmatprep.subr.bf16.mxu0 0
  %92 = vmatpush1.bf16.xpose.msra.mxu0 0
  %93 = vmatprep.subr.bf16.mxu0 0
  %94 = vmatpush1.bf16.xpose.msra.mxu0 0
  %95 = vmatprep.subr.bf16.mxu0 0
  %96 = vmatpush1.bf16.xpose.msra.mxu0 0
  %97 = vmatprep.subr.bf16.mxu0 0
  %98 = vmatpush1.bf16.xpose.msra.mxu0 0
  %99 = vmatprep.subr.bf16.mxu0 0
  %100 = vmatpush1.bf16.xpose.msra.mxu0 0
  %101 = vmatprep.subr.bf16.mxu0 0
  %102 = vmatpush1.bf16.xpose.msra.mxu0 0
  %103 = vmatprep.subr.bf16.mxu0 %v82
  %104 = vmatpush1.bf16.xpose.msra.mxu0 %v81
  %105 = vmatprep.subr.bf16.mxu0 0
  %106 = vmatpush2.bf16.xpose.msra.mxu0 0
  %107 = vmatprep.subr.bf16.mxu0 0
  %108 = vmatpush2.bf16.xpose.msra.mxu0 0
  %109 = vmatprep.subr.bf16.mxu0 0
  %110 = vmatpush2.bf16.xpose.msra.mxu0 0
  %111 = vmatprep.subr.bf16.mxu0 0
  %112 = vmatpush2.bf16.xpose.msra.mxu0 0
  %113 = vmatprep.subr.bf16.mxu0 0
  %114 = vmatpush2.bf16.xpose.msra.mxu0 0
  %115 = vmatprep.subr.bf16.mxu0 0
  %116 = vmatpush2.bf16.xpose.msra.mxu0 0
  %117 = vmatprep.subr.bf16.mxu0 0
  %118 = vmatpush2.bf16.xpose.msra.mxu0 0
  %119 = vmatprep.subr.bf16.mxu0 0
  %120 = vmatpush2.bf16.xpose.msra.mxu0 0
  %121 = vmatprep.mubr.bf16.mxu0 %v82
  %122 = vmatmul.mubr.bf16.gmra.mxu0 %v81
  %v123 = vpop.f32.mrf.mxu0
  %v124 = vadd.f32 0.0, %v123
  %v125 = vpop.f32.mrf.mxu0
  %v126 = vpop.f32.mrf.mxu0
  %v127 = vpop.f32.mrf.mxu0
  %128 = vdwg.mxu0
  %129 = vmatprep.subr.bf16.mxu0 0
  %130 = vmatpush1.bf16.xpose.msra.mxu0 0
  %131 = vmatprep.subr.bf16.mxu0 0
  %132 = vmatpush1.bf16.xpose.msra.mxu0 0
  %133 = vmatprep.subr.bf16.mxu0 0
  %134 = vmatpush1.bf16.xpose.msra.mxu0 0
  %135 = vmatprep.subr.bf16.mxu0 0
  %136 = vmatpush1.bf16.xpose.msra.mxu0 0
  %137 = vmatprep.subr.bf16.mxu0 0
  %138 = vmatpush1.bf16.xpose.msra.mxu0 0
  %139 = vmatprep.subr.bf16.mxu0 0
  %140 = vmatpush1.bf16.xpose.msra.mxu0 0
  %141 = vmatprep.subr.bf16.mxu0 0
  %142 = vmatpush1.bf16.xpose.msra.mxu0 0
  %143 = vmatprep.subr.bf16.mxu0 %v84
  %144 = vmatpush1.bf16.xpose.msra.mxu0 %v83
  %145 = vmatprep.subr.bf16.mxu0 0
  %146 = vmatpush2.bf16.xpose.msra.mxu0 0
  %147 = vmatprep.subr.bf16.mxu0 0
  %148 = vmatpush2.bf16.xpose.msra.mxu0 0
  %149 = vmatprep.subr.bf16.mxu0 0
  %150 = vmatpush2.bf16.xpose.msra.mxu0 0
  %151 = vmatprep.subr.bf16.mxu0 0
  %152 = vmatpush2.bf16.xpose.msra.mxu0 0
  %153 = vmatprep.subr.bf16.mxu0 0
  %154 = vmatpush2.bf16.xpose.msra.mxu0 0
  %155 = vmatprep.subr.bf16.mxu0 0
  %156 = vmatpush2.bf16.xpose.msra.mxu0 0
  %157 = vmatprep.subr.bf16.mxu0 0
  %158 = vmatpush2.bf16.xpose.msra.mxu0 0
  %159 = vmatprep.subr.bf16.mxu0 0
  %160 = vmatpush2.bf16.xpose.msra.mxu0 0
  %161 = vmatprep.mubr.bf16.mxu0 %v84
  %162 = vmatmul.mubr.bf16.gmra.mxu0 %v83
  %v163 = vpop.f32.mrf.mxu0
  %v164 = vadd.f32 %v124, %v163
  %v165 = vpop.f32.mrf.mxu0
  %v166 = vpop.f32.mrf.mxu0
  %v167 = vpop.f32.mrf.mxu0
  %168 = vdwg.mxu0
  %v169 = vadd.f32 %v74, %v164
  %vm170 = vcmask 64512
  %171 = vst.msk [vmem:[%s2] sm:$0xff] %vm170, %v169
  %v172 = vld [vmem:[%s3] sm:$0xff]
  %v173 = vunpack.c.l.bf16 %v72
  %v174 = vunpack.c.h.bf16 %v72
  %v175 = vunpack.c.l.bf16 %v73
  %v176 = vunpack.c.h.bf16 %v73
  %v177 = vadd.f32 %v173, %v174
  %v178 = vadd.f32 %v177, %v175
  %v179 = vadd.f32 %v178, %v176
  %180 = vadd.xlane.f32.xlu0 %v179
  %v181 = vpop.xlane.xlu0 %180
  %v182 = vadd.f32 %v172, %v181
  %vm183 = vcmask 7168
  %184 = vst.msk [vmem:[%s3] sm:$0xff] %vm183, %v182
  %v185 = vld [vmem:[%s56] sm:$0xff]
  %v186 = vld [vmem:[%s56 + $0x8] sm:$0xff]
  %v187 = vmax.bf16 %v185, 0
  %v188 = vmax.bf16 %v186, 0
  %v189 = vld [vmem:[%s4] sm:$0xff]
  %v192 = vunpack.c.l.b16 %v187
  %v193 = vunpack.c.h.b16 %v187
  %v194 = vunpack.c.l.b16 %v188
  %v195 = vunpack.c.h.b16 %v188
  %v196 = vpack.c.b16 %v192, %v192
  %v197 = vpack.c.b16 %v193, %v193
  %v198 = vpack.c.b16 %v194, %v194
  %v199 = vpack.c.b16 %v195, %v195
  %204 = vmatprep.subr.bf16.mxu0 0
  %205 = vmatpush1.bf16.xpose.msra.mxu0 0
  %206 = vmatprep.subr.bf16.mxu0 0
  %207 = vmatpush1.bf16.xpose.msra.mxu0 0
  %208 = vmatprep.subr.bf16.mxu0 0
  %209 = vmatpush1.bf16.xpose.msra.mxu0 0
  %210 = vmatprep.subr.bf16.mxu0 0
  %211 = vmatpush1.bf16.xpose.msra.mxu0 0
  %212 = vmatprep.subr.bf16.mxu0 0
  %213 = vmatpush1.bf16.xpose.msra.mxu0 0
  %214 = vmatprep.subr.bf16.mxu0 0
  %215 = vmatpush1.bf16.xpose.msra.mxu0 0
  %216 = vmatprep.subr.bf16.mxu0 0
  %217 = vmatpush1.bf16.xpose.msra.mxu0 0
  %218 = vmatprep.subr.bf16.mxu0 %v197
  %219 = vmatpush1.bf16.xpose.msra.mxu0 %v196
  %220 = vmatprep.subr.bf16.mxu0 0
  %221 = vmatpush2.bf16.xpose.msra.mxu0 0
  %222 = vmatprep.subr.bf16.mxu0 0
  %223 = vmatpush2.bf16.xpose.msra.mxu0 0
  %224 = vmatprep.subr.bf16.mxu0 0
  %225 = vmatpush2.bf16.xpose.msra.mxu0 0
  %226 = vmatprep.subr.bf16.mxu0 0
  %227 = vmatpush2.bf16.xpose.msra.mxu0 0
  %228 = vmatprep.subr.bf16.mxu0 0
  %229 = vmatpush2.bf16.xpose.msra.mxu0 0
  %230 = vmatprep.subr.bf16.mxu0 0
  %231 = vmatpush2.bf16.xpose.msra.mxu0 0
  %232 = vmatprep.subr.bf16.mxu0 0
  %233 = vmatpush2.bf16.xpose.msra.mxu0 0
  %234 = vmatprep.subr.bf16.mxu0 0
  %235 = vmatpush2.bf16.xpose.msra.mxu0 0
  %236 = vmatprep.mubr.bf16.mxu0 %v197
  %237 = vmatmul.mubr.bf16.gmra.mxu0 %v196
  %v238 = vpop.f32.mrf.mxu0
  %v239 = vadd.f32 0.0, %v238
  %v240 = vpop.f32.mrf.mxu0
  %v241 = vpop.f32.mrf.mxu0
  %v242 = vpop.f32.mrf.mxu0
  %243 = vdwg.mxu0
  %244 = vmatprep.subr.bf16.mxu0 0
  %245 = vmatpush1.bf16.xpose.msra.mxu0 0
  %246 = vmatprep.subr.bf16.mxu0 0
  %247 = vmatpush1.bf16.xpose.msra.mxu0 0
  %248 = vmatprep.subr.bf16.mxu0 0
  %249 = vmatpush1.bf16.xpose.msra.mxu0 0
  %250 = vmatprep.subr.bf16.mxu0 0
  %251 = vmatpush1.bf16.xpose.msra.mxu0 0
  %252 = vmatprep.subr.bf16.mxu0 0
  %253 = vmatpush1.bf16.xpose.msra.mxu0 0
  %254 = vmatprep.subr.bf16.mxu0 0
  %255 = vmatpush1.bf16.xpose.msra.mxu0 0
  %256 = vmatprep.subr.bf16.mxu0 0
  %257 = vmatpush1.bf16.xpose.msra.mxu0 0
  %258 = vmatprep.subr.bf16.mxu0 %v199
  %259 = vmatpush1.bf16.xpose.msra.mxu0 %v198
  %260 = vmatprep.subr.bf16.mxu0 0
  %261 = vmatpush2.bf16.xpose.msra.mxu0 0
  %262 = vmatprep.subr.bf16.mxu0 0
  %263 = vmatpush2.bf16.xpose.msra.mxu0 0
  %264 = vmatprep.subr.bf16.mxu0 0
  %265 = vmatpush2.bf16.xpose.msra.mxu0 0
  %266 = vmatprep.subr.bf16.mxu0 0
  %267 = vmatpush2.bf16.xpose.msra.mxu0 0
  %268 = vmatprep.subr.bf16.mxu0 0
  %269 = vmatpush2.bf16.xpose.msra.mxu0 0
  %270 = vmatprep.subr.bf16.mxu0 0
  %271 = vmatpush2.bf16.xpose.msra.mxu0 0
  %272 = vmatprep.subr.bf16.mxu0 0
  %273 = vmatpush2.bf16.xpose.msra.mxu0 0
  %274 = vmatprep.subr.bf16.mxu0 0
  %275 = vmatpush2.bf16.xpose.msra.mxu0 0
  %276 = vmatprep.mubr.bf16.mxu0 %v199
  %277 = vmatmul.mubr.bf16.gmra.mxu0 %v198
  %v278 = vpop.f32.mrf.mxu0
  %v279 = vadd.f32 %v239, %v278
  %v280 = vpop.f32.mrf.mxu0
  %v281 = vpop.f32.mrf.mxu0
  %v282 = vpop.f32.mrf.mxu0
  %283 = vdwg.mxu0
  %v284 = vadd.f32 %v189, %v279
  %285 = vst.msk [vmem:[%s4] sm:$0xff] %vm170, %v284
  %v286 = vld [vmem:[%s5] sm:$0xff]
  %v287 = vunpack.c.l.bf16 %v187
  %v288 = vunpack.c.h.bf16 %v187
  %v289 = vunpack.c.l.bf16 %v188
  %v290 = vunpack.c.h.bf16 %v188
  %v291 = vadd.f32 %v287, %v288
  %v292 = vadd.f32 %v291, %v289
  %v293 = vadd.f32 %v292, %v290
  %294 = vadd.xlane.f32.xlu0 %v293
  %v295 = vpop.xlane.xlu0 %294
  %v296 = vadd.f32 %v286, %v295
  %297 = vst.msk [vmem:[%s5] sm:$0xff] %vm183, %v296
  // Predicated region
  $region14: #{a_call__.6} parent=0 // pred_check
    _
  $region15: #{a_call__.6} parent=0 // pred_check_branch
    %299 = sbr.rel (0) target = $region17
  $region16: #{a_call__.6} parent=0 // pred_region
    _
  $region17: #{a_call__.6} parent=0 // pred_fallthru
    _
  // Predicated region
  $region18: #{a_call__.6} parent=0 // pred_check
    _
  $region19: #{a_call__.6} parent=0 // pred_check_branch
    %301 = sbr.rel (0) target = $region21
  $region20: #{a_call__.6} parent=0 // pred_region
    _
  $region21: #{a_call__.6} parent=0 // pred_fallthru
    _
  // Predicated region
  $region22: #{a_call__.6} parent=0 // pred_check
    _
  $region23: #{a_call__.6} parent=0 // pred_check_branch
    %303 = sbr.rel (0) target = $region25
  $region24: #{a_call__.6} parent=0 // pred_region
    _
  $region25: #{a_call__.6} parent=0 // pred_fallthru
    _
  // Predicated region
  $region26: #{a_call__.6} parent=0 // pred_check
    _
  $region27: #{a_call__.6} parent=0 // pred_check_branch
    %305 = sbr.rel (0) target = $region29
  $region28: #{a_call__.6} parent=0 // pred_region
    _
  $region29: #{a_call__.6} parent=0 // pred_fallthru
    _
  // Predicated region
  $region30: #{a_call__.6} parent=0 // pred_check
    _
  $region31: #{a_call__.6} parent=0 // pred_check_branch
    %307 = sbr.rel (0) target = $region33
  $region32: #{a_call__.6} parent=0 // pred_region
    _
  $region33: #{a_call__.6} parent=0 // pred_fallthru
    _
  // Predicated region
  $region34: #{a_call__.6} parent=0 // pred_check
    _
  $region35: #{a_call__.6} parent=0 // pred_check_branch
    %309 = sbr.rel (0) target = $region37
  $region36: #{a_call__.6} parent=0 // pred_region
    _
  $region37: #{a_call__.6} parent=0 // pred_fallthru
    _
  // Predicated region
  $region38: #{a_call__.6} parent=0 // pred_check
    _
  $region39: #{a_call__.6} parent=0 // pred_check_branch
    %311 = sbr.rel (0) target = $region41
  $region40: #{a_call__.6} parent=0 // pred_region
    _
  $region41: #{a_call__.6} parent=0 // pred_fallthru
    _
  // Predicated region
  $region42: #{a_call__.6} parent=0 // pred_check
    _
  $region43: #{a_call__.6} parent=0 // pred_check_branch
    %313 = sbr.rel (0) target = $region45
  $region44: #{a_call__.6} parent=0 // pred_region
    _
  $region45: #{a_call__.6} parent=0 // pred_fallthru
    _

// kernel: a_call__.8
$region0: #{a_call__.8}
  #allocation0 [shape = 'u32[]', space=smem, size = 0x4, offset = 0x4, fixed_abs, tag = 'smem constant byte address 0x4 - core index']
  #allocation1 [shape = 'u32[144,128]{1,0:T(1,128)}', space=vmem, size = 0x12000, scoped, tag = 'internal scratch']
  %s0 = inlined_call_operand.vmem [shape: bf16[16,512], index: 0, kind: input, shape index: {}]
  %s1 = inlined_call_operand.vmem [shape: bf16[16,512], index: 1, kind: input, shape index: {}]
  %s2 = inlined_call_operand.vmem [shape: bf16[16,16], index: 2, kind: input, shape index: {}]
  %s3 = inlined_call_operand.vmem [shape: f32[16,1], index: 3, kind: input, shape index: {}]
  %s4 = inlined_call_operand.vmem [shape: bf16[16,512], index: 4, kind: output, shape index: {0}]
  %s5 = inlined_call_operand.vmem [shape: f32[1,16,16], index: 5, kind: output, shape index: {1}]
  %s6 = inlined_call_operand.vmem [shape: f32[1,16,1], index: 6, kind: output, shape index: {2}]
  %7 = xla_tuple %s4, %s5, %s6
  %s8 = sld [smem:[#allocation0]]
  $region46: #{a_call__.8} parent=0
    _
  %s10 = ssub.s32 1, %s8
  %s11 = scalar_select 0, %s10, %s8
  // Predicated region
  $region2: #{a_call__.8} parent=0 // pred_check
    _
  $region3: #{a_call__.8} parent=0 // pred_check_branch
    %13 = sbr.rel (0) target = $region5
  $region4: #{a_call__.8} parent=0 // pred_region
    %s14 = sadd.s32 0, 0
    %s15 = smul.u32 4, %s14
    %p16 = scmp.lt.s32.totalorder %s15, 3
    %s17 = scalar_select %p16, %s15, 3
    %s18 = smul.addr %s17, 4
    %s19 = scalar_lea.vmem %s0, %s18
    %s20 = sadd.s32 0, 0
    %s21 = smul.u32 4, %s20
  $region5: #{a_call__.8} parent=0 // pred_fallthru
    _
  // Predicated region
  $region6: #{a_call__.8} parent=0 // pred_check
    _
  $region7: #{a_call__.8} parent=0 // pred_check_branch
    %23 = sbr.rel (0) target = $region9
  $region8: #{a_call__.8} parent=0 // pred_region
    %s24 = sadd.s32 0, 0
    %s25 = smul.u32 4, %s24
    %p26 = scmp.lt.s32.totalorder %s25, 3
    %s27 = scalar_select %p26, %s25, 3
    %s28 = smul.addr %s27, 4
    %s29 = scalar_lea.vmem %s1, %s28
    %s30 = sadd.s32 0, 0
    %s31 = smul.u32 4, %s30
  $region9: #{a_call__.8} parent=0 // pred_fallthru
    _
  // Predicated region
  $region10: #{a_call__.8} parent=0 // pred_check
    _
  $region11: #{a_call__.8} parent=0 // pred_check_branch
    %33 = sbr.rel (0) target = $region13
  $region12: #{a_call__.8} parent=0 // pred_region
    _
  $region13: #{a_call__.8} parent=0 // pred_fallthru
    _
  // Predicated region
  $region14: #{a_call__.8} parent=0 // pred_check
    _
  $region15: #{a_call__.8} parent=0 // pred_check_branch
    %35 = sbr.rel (0) target = $region17
  $region16: #{a_call__.8} parent=0 // pred_region
    _
  $region17: #{a_call__.8} parent=0 // pred_fallthru
    _
  %s36 = sadd.s32 0, 0
  %s37 = smul.u32 4, %s36
  %p38 = scmp.lt.s32.totalorder %s37, 3
  %s39 = scalar_select %p38, %s37, 3
  %s40 = smul.addr %s39, 4
  %s41 = scalar_lea.vmem %s0, %s40
  %s42 = sadd.s32 0, 0
  %s43 = smul.u32 4, %s42
  %p44 = scmp.lt.s32.totalorder %s43, 3
  %s45 = scalar_select %p44, %s43, 3
  %s46 = smul.addr %s45, 4
  %s47 = scalar_lea.vmem %s1, %s46
  %s48 = sadd.s32 0, 0
  %s49 = smul.u32 4, %s48
  %p50 = scmp.lt.s32.totalorder %s49, 3
  %s51 = scalar_select %p50, %s49, 3
  %s52 = smul.addr %s51, 4
  %s53 = scalar_lea.vmem %s4, %s52
  %s54 = sadd.s32 0, 0
  %s55 = smul.u32 4, %s54
  %p56 = scmp.lt.s32.totalorder %s55, 3
  %s57 = scalar_select %p56, %s55, 3
  %s58 = smul.addr %s57, 4
  %s59 = scalar_lea.vmem %s0, %s58
  %s60 = sadd.s32 0, 0
  %s61 = smul.u32 4, %s60
  %s62 = sadd.s32 0, 0
  %s63 = smul.u32 4, %s62
  %p64 = scmp.lt.s32.totalorder %s63, 3
  %s65 = scalar_select %p64, %s63, 3
  %s66 = smul.addr %s65, 4
  %s67 = scalar_lea.vmem %s1, %s66
  %s68 = sadd.s32 0, 0
  %s69 = smul.u32 4, %s68
  %s70 = sadd.s32 0, 0
  %s71 = smul.u32 4, %s70
  %p72 = scmp.lt.s32.totalorder %s71, 3
  %s73 = scalar_select %p72, %s71, 3
  %s74 = smul.addr %s73, 4
  %s75 = scalar_lea.vmem %s4, %s74
  %s76 = sadd.s32 0, 0
  %s77 = smul.u32 4, %s76
  %p79 = scmp.eq.s32.totalorder 0, 0
  // Predicated region
  $region18: #{a_call__.8} parent=0 // pred_check
    %p80 = pneg %p79
  $region19: #{a_call__.8} parent=0 // pred_check_branch
    %82 = sbr.rel (%p80) target = $region21
  $region20: #{a_call__.8} parent=0 // pred_region
    %vm83 = vcmask 130048
    %84 = vst.msk [vmem:[%s5] sm:$0xff] %vm83, 0.0
    %85 = vst.msk [vmem:[%s5 + $0x8] sm:$0xff] %vm83, 0.0
    %vm86 = vcmask 7168
    %87 = vst.msk [vmem:[%s6] sm:$0xff] %vm86, 0.0
    %88 = vst.msk [vmem:[%s6 + $0x8] sm:$0xff] %vm86, 0.0
  $region21: #{a_call__.8} parent=0 // pred_fallthru
    _
  %v89 = vld [vmem:[%s59] sm:$0xff]
  %v90 = vld [vmem:[%s59 + $0x8] sm:$0xff]
  %v91 = vld [vmem:[%s59 + $0x10] sm:$0xff]
  %v92 = vld [vmem:[%s59 + $0x18] sm:$0xff]
  %v93 = vmax.bf16 %v89, 0
  %v94 = vmax.bf16 %v90, 0
  %v95 = vmax.bf16 %v91, 0
  %v96 = vmax.bf16 %v92, 0
  %v97 = vld [vmem:[%s2] sm:$0xf]
  %v98 = vld [vmem:[%s2 + $0x4] sm:$0xf]
  %v99 = vld [vmem:[%s67] sm:$0xff]
  %v100 = vld [vmem:[%s67 + $0x8] sm:$0xff]
  %v101 = vld [vmem:[%s67 + $0x10] sm:$0xff]
  %v102 = vld [vmem:[%s67 + $0x18] sm:$0xff]
  %v103 = vunpack.c.l.bf16 %v99
  %v104 = vunpack.c.h.bf16 %v99
  %v105 = vunpack.c.l.bf16 %v100
  %v106 = vunpack.c.h.bf16 %v100
  %v107 = vunpack.c.l.bf16 %v101
  %v108 = vunpack.c.h.bf16 %v101
  %v109 = vunpack.c.l.bf16 %v102
  %v110 = vunpack.c.h.bf16 %v102
  %v113 = vunpack.c.l.b16 %v97
  %v114 = vunpack.c.l.b16 %v98
  %v115 = vpack.c.b16 %v114, %v113
  %v120 = vunpack.c.l.b16 %v93
  %v121 = vunpack.c.h.b16 %v93
  %v122 = vunpack.c.l.b16 %v94
  %v123 = vunpack.c.h.b16 %v94
  %v124 = vunpack.c.l.b16 %v95
  %v125 = vunpack.c.h.b16 %v95
  %v126 = vunpack.c.l.b16 %v96
  %v127 = vunpack.c.h.b16 %v96
  %v128 = vpack.c.b16 %v124, %v120
  %v129 = vpack.c.b16 %v125, %v121
  %v130 = vpack.c.b16 %v126, %v122
  %v131 = vpack.c.b16 %v127, %v123
  %vm136 = vcmask 130048
  %v138 = vsel %vm136, %v115, 0
  %140 = vmatprep.subr.bf16.mxu0 0
  %141 = vmatpush1.bf16.msra.mxu0 0
  %142 = vmatprep.subr.bf16.mxu0 0
  %143 = vmatpush1.bf16.msra.mxu0 0
  %144 = vmatprep.subr.bf16.mxu0 0
  %145 = vmatpush1.bf16.msra.mxu0 0
  %146 = vmatprep.subr.bf16.mxu0 0
  %147 = vmatpush1.bf16.msra.mxu0 0
  %148 = vmatprep.subr.bf16.mxu0 0
  %149 = vmatpush1.bf16.msra.mxu0 0
  %150 = vmatprep.subr.bf16.mxu0 0
  %151 = vmatpush1.bf16.msra.mxu0 0
  %152 = vmatprep.subr.bf16.mxu0 0
  %153 = vmatpush1.bf16.msra.mxu0 0
  %154 = vmatprep.subr.bf16.mxu0 %v129
  %155 = vmatpush1.bf16.msra.mxu0 %v128
  %156 = vmatprep.subr.bf16.mxu0 0
  %157 = vmatpush2.bf16.msra.mxu0 0
  %158 = vmatprep.subr.bf16.mxu0 0
  %159 = vmatpush2.bf16.msra.mxu0 0
  %160 = vmatprep.subr.bf16.mxu0 0
  %161 = vmatpush2.bf16.msra.mxu0 0
  %162 = vmatprep.subr.bf16.mxu0 0
  %163 = vmatpush2.bf16.msra.mxu0 0
  %164 = vmatprep.subr.bf16.mxu0 0
  %165 = vmatpush2.bf16.msra.mxu0 0
  %166 = vmatprep.subr.bf16.mxu0 0
  %167 = vmatpush2.bf16.msra.mxu0 0
  %168 = vmatprep.subr.bf16.mxu0 0
  %169 = vmatpush2.bf16.msra.mxu0 0
  %170 = vmatprep.subr.bf16.mxu0 0
  %171 = vmatpush2.bf16.msra.mxu0 0
  %172 = vmatprep.mubr.bf16.mxu0 0
  %173 = vmatmul.mubr.bf16.gmra.mxu0 %v138
  %v174 = vpop.f32.mrf.mxu0
  %v175 = vadd.f32 %v103, %v174
  %v176 = vpop.f32.mrf.mxu0
  %v177 = vadd.f32 %v104, %v176
  %v178 = vpop.f32.mrf.mxu0
  %v179 = vadd.f32 %v107, %v178
  %v180 = vpop.f32.mrf.mxu0
  %v181 = vadd.f32 %v108, %v180
  %182 = vdwg.mxu0
  %183 = vmatprep.subr.bf16.mxu0 0
  %184 = vmatpush1.bf16.msra.mxu0 0
  %185 = vmatprep.subr.bf16.mxu0 0
  %186 = vmatpush1.bf16.msra.mxu0 0
  %187 = vmatprep.subr.bf16.mxu0 0
  %188 = vmatpush1.bf16.msra.mxu0 0
  %189 = vmatprep.subr.bf16.mxu0 0
  %190 = vmatpush1.bf16.msra.mxu0 0
  %191 = vmatprep.subr.bf16.mxu0 0
  %192 = vmatpush1.bf16.msra.mxu0 0
  %193 = vmatprep.subr.bf16.mxu0 0
  %194 = vmatpush1.bf16.msra.mxu0 0
  %195 = vmatprep.subr.bf16.mxu0 0
  %196 = vmatpush1.bf16.msra.mxu0 0
  %197 = vmatprep.subr.bf16.mxu0 %v131
  %198 = vmatpush1.bf16.msra.mxu0 %v130
  %199 = vmatprep.subr.bf16.mxu0 0
  %200 = vmatpush2.bf16.msra.mxu0 0
  %201 = vmatprep.subr.bf16.mxu0 0
  %202 = vmatpush2.bf16.msra.mxu0 0
  %203 = vmatprep.subr.bf16.mxu0 0
  %204 = vmatpush2.bf16.msra.mxu0 0
  %205 = vmatprep.subr.bf16.mxu0 0
  %206 = vmatpush2.bf16.msra.mxu0 0
  %207 = vmatprep.subr.bf16.mxu0 0
  %208 = vmatpush2.bf16.msra.mxu0 0
  %209 = vmatprep.subr.bf16.mxu0 0
  %210 = vmatpush2.bf16.msra.mxu0 0
  %211 = vmatprep.subr.bf16.mxu0 0
  %212 = vmatpush2.bf16.msra.mxu0 0
  %213 = vmatprep.subr.bf16.mxu0 0
  %214 = vmatpush2.bf16.msra.mxu0 0
  %215 = vmatprep.mubr.bf16.mxu0 0
  %216 = vmatmul.mubr.bf16.gmra.mxu0 %v138
  %v217 = vpop.f32.mrf.mxu0
  %v218 = vadd.f32 %v105, %v217
  %v219 = vpop.f32.mrf.mxu0
  %v220 = vadd.f32 %v106, %v219
  %v221 = vpop.f32.mrf.mxu0
  %v222 = vadd.f32 %v109, %v221
  %v223 = vpop.f32.mrf.mxu0
  %v224 = vadd.f32 %v110, %v223
  %225 = vdwg.mxu0
  %v226 = vld [vmem:[%s3] sm:$0xff]
  %v227 = vld [vmem:[%s3 + $0x8] sm:$0xff]
  %229 = vset.pattern.permute.xlu0 0
  %230 = vperm.xlu0 %229, %v226
  %v231 = vpop.permute.xlu0 %230
  %234 = vset.pattern.permute.xlu0 0
  %235 = vperm.xlu0 %234, %v227
  %v236 = vpop.permute.xlu0 %235
  %v238 = vadd.f32 %v175, %v231
  %v239 = vadd.f32 %v177, %v231
  %v240 = vadd.f32 %v218, %v231
  %v241 = vadd.f32 %v220, %v231
  %v242 = vadd.f32 %v179, %v236
  %v243 = vadd.f32 %v181, %v236
  %v244 = vadd.f32 %v222, %v236
  %v245 = vadd.f32 %v224, %v236
  %v246 = vpack.c.bf16 %v242, %v238
  %v247 = vpack.c.bf16 %v243, %v239
  %v248 = vpack.c.bf16 %v244, %v240
  %v249 = vpack.c.bf16 %v245, %v241
  %v254 = vunpack.c.l.b16 %v246
  %v255 = vunpack.c.l.b16 %v247
  %v256 = vunpack.c.l.b16 %v248
  %v257 = vunpack.c.l.b16 %v249
  %v258 = vunpack.c.h.b16 %v246
  %v259 = vunpack.c.h.b16 %v247
  %v260 = vunpack.c.h.b16 %v248
  %v261 = vunpack.c.h.b16 %v249
  %v262 = vpack.c.b16 %v255, %v254
  %v263 = vpack.c.b16 %v257, %v256
  %v264 = vpack.c.b16 %v259, %v258
  %v265 = vpack.c.b16 %v261, %v260
  %270 = vst [vmem:[%s75] sm:$0xff] %v262
  %271 = vst [vmem:[%s75 + $0x8] sm:$0xff] %v263
  %272 = vst [vmem:[%s75 + $0x10] sm:$0xff] %v264
  %273 = vst [vmem:[%s75 + $0x18] sm:$0xff] %v265
  %v274 = vmax.bf16 %v246, 0
  %v275 = vmax.bf16 %v247, 0
  %v276 = vmax.bf16 %v248, 0
  %v277 = vmax.bf16 %v249, 0
  %v278 = vld [vmem:[%s5] sm:$0xff]
  %v279 = vld [vmem:[%s5 + $0x8] sm:$0xff]
  %280 = vmatprep.subr.bf16.mxu0 0
  %281 = vmatpush1.bf16.xpose.msra.mxu0 0
  %282 = vmatprep.subr.bf16.mxu0 0
  %283 = vmatpush1.bf16.xpose.msra.mxu0 0
  %284 = vmatprep.subr.bf16.mxu0 0
  %285 = vmatpush1.bf16.xpose.msra.mxu0 0
  %286 = vmatprep.subr.bf16.mxu0 0
  %287 = vmatpush1.bf16.xpose.msra.mxu0 0
  %288 = vmatprep.subr.bf16.mxu0 0
  %289 = vmatpush1.bf16.xpose.msra.mxu0 0
  %290 = vmatprep.subr.bf16.mxu0 0
  %291 = vmatpush1.bf16.xpose.msra.mxu0 0
  %292 = vmatprep.subr.bf16.mxu0 0
  %293 = vmatpush1.bf16.xpose.msra.mxu0 0
  %294 = vmatprep.subr.bf16.mxu0 %v275
  %295 = vmatpush1.bf16.xpose.msra.mxu0 %v274
  %296 = vmatprep.subr.bf16.mxu0 0
  %297 = vmatpush2.bf16.xpose.msra.mxu0 0
  %298 = vmatprep.subr.bf16.mxu0 0
  %299 = vmatpush2.bf16.xpose.msra.mxu0 0
  %300 = vmatprep.subr.bf16.mxu0 0
  %301 = vmatpush2.bf16.xpose.msra.mxu0 0
  %302 = vmatprep.subr.bf16.mxu0 0
  %303 = vmatpush2.bf16.xpose.msra.mxu0 0
  %304 = vmatprep.subr.bf16.mxu0 0
  %305 = vmatpush2.bf16.xpose.msra.mxu0 0
  %306 = vmatprep.subr.bf16.mxu0 0
  %307 = vmatpush2.bf16.xpose.msra.mxu0 0
  %308 = vmatprep.subr.bf16.mxu0 0
  %309 = vmatpush2.bf16.xpose.msra.mxu0 0
  %310 = vmatprep.subr.bf16.mxu0 0
  %311 = vmatpush2.bf16.xpose.msra.mxu0 0
  %312 = vmatprep.mubr.bf16.mxu0 %v275
  %313 = vmatmul.mubr.bf16.gmra.mxu0 %v274
  %v314 = vpop.f32.mrf.mxu0
  %v315 = vadd.f32 0.0, %v314
  %v316 = vpop.f32.mrf.mxu0
  %v317 = vpop.f32.mrf.mxu0
  %v318 = vadd.f32 0.0, %v317
  %v319 = vpop.f32.mrf.mxu0
  %320 = vdwg.mxu0
  %321 = vmatprep.subr.bf16.mxu0 0
  %322 = vmatpush1.bf16.xpose.msra.mxu0 0
  %323 = vmatprep.subr.bf16.mxu0 0
  %324 = vmatpush1.bf16.xpose.msra.mxu0 0
  %325 = vmatprep.subr.bf16.mxu0 0
  %326 = vmatpush1.bf16.xpose.msra.mxu0 0
  %327 = vmatprep.subr.bf16.mxu0 0
  %328 = vmatpush1.bf16.xpose.msra.mxu0 0
  %329 = vmatprep.subr.bf16.mxu0 0
  %330 = vmatpush1.bf16.xpose.msra.mxu0 0
  %331 = vmatprep.subr.bf16.mxu0 0
  %332 = vmatpush1.bf16.xpose.msra.mxu0 0
  %333 = vmatprep.subr.bf16.mxu0 0
  %334 = vmatpush1.bf16.xpose.msra.mxu0 0
  %335 = vmatprep.subr.bf16.mxu0 %v277
  %336 = vmatpush1.bf16.xpose.msra.mxu0 %v276
  %337 = vmatprep.subr.bf16.mxu0 0
  %338 = vmatpush2.bf16.xpose.msra.mxu0 0
  %339 = vmatprep.subr.bf16.mxu0 0
  %340 = vmatpush2.bf16.xpose.msra.mxu0 0
  %341 = vmatprep.subr.bf16.mxu0 0
  %342 = vmatpush2.bf16.xpose.msra.mxu0 0
  %343 = vmatprep.subr.bf16.mxu0 0
  %344 = vmatpush2.bf16.xpose.msra.mxu0 0
  %345 = vmatprep.subr.bf16.mxu0 0
  %346 = vmatpush2.bf16.xpose.msra.mxu0 0
  %347 = vmatprep.subr.bf16.mxu0 0
  %348 = vmatpush2.bf16.xpose.msra.mxu0 0
  %349 = vmatprep.subr.bf16.mxu0 0
  %350 = vmatpush2.bf16.xpose.msra.mxu0 0
  %351 = vmatprep.subr.bf16.mxu0 0
  %352 = vmatpush2.bf16.xpose.msra.mxu0 0
  %353 = vmatprep.mubr.bf16.mxu0 %v277
  %354 = vmatmul.mubr.bf16.gmra.mxu0 %v276
  %v355 = vpop.f32.mrf.mxu0
  %v356 = vadd.f32 %v315, %v355
  %v357 = vpop.f32.mrf.mxu0
  %v358 = vpop.f32.mrf.mxu0
  %v359 = vadd.f32 %v318, %v358
  %v360 = vpop.f32.mrf.mxu0
  %361 = vdwg.mxu0
  %v362 = vadd.f32 %v278, %v356
  %v363 = vadd.f32 %v279, %v359
  %364 = vst.msk [vmem:[%s5] sm:$0xff] %vm136, %v362
  %365 = vst.msk [vmem:[%s5 + $0x8] sm:$0xff] %vm136, %v363
  %v366 = vld [vmem:[%s6] sm:$0xff]
  %v367 = vld [vmem:[%s6 + $0x8] sm:$0xff]
  %v368 = vunpack.c.l.bf16 %v274
  %v369 = vunpack.c.l.bf16 %v275
  %v370 = vunpack.c.l.bf16 %v276
  %v371 = vunpack.c.l.bf16 %v277
  %v372 = vunpack.c.h.bf16 %v274
  %v373 = vunpack.c.h.bf16 %v275
  %v374 = vunpack.c.h.bf16 %v276
  %v375 = vunpack.c.h.bf16 %v277
  %v376 = vadd.f32 %v368, %v369
  %v377 = vadd.f32 %v376, %v370
  %v378 = vadd.f32 %v377, %v371
  %379 = vadd.xlane.f32.xlu0 %v378
  %v380 = vpop.xlane.xlu0 %379
  %v381 = vadd.f32 %v372, %v373
  %v382 = vadd.f32 %v381, %v374
  %v383 = vadd.f32 %v382, %v375
  %384 = vadd.xlane.f32.xlu0 %v383
  %v385 = vpop.xlane.xlu0 %384
  %v386 = vadd.f32 %v366, %v380
  %v387 = vadd.f32 %v367, %v385
  %vm388 = vcmask 7168
  %389 = vst.msk [vmem:[%s6] sm:$0xff] %vm388, %v386
  %390 = vst.msk [vmem:[%s6 + $0x8] sm:$0xff] %vm388, %v387
  %s391 = sadd.s32 0, 0
  %s392 = smul.u32 4, %s391
  %p393 = scmp.lt.s32.totalorder %s392, 3
  %s394 = scalar_select %p393, %s392, 3
  %s395 = smul.addr %s394, 4
  %s396 = scalar_lea.vmem %s4, %s395
  // Predicated region
  $region22: #{a_call__.8} parent=0 // pred_check
    _
  $region23: #{a_call__.8} parent=0 // pred_check_branch
    %398 = sbr.rel (0) target = $region25
  $region24: #{a_call__.8} parent=0 // pred_region
    %s399 = sadd.s32 0, 0
    %s400 = smul.u32 4, %s399
  $region25: #{a_call__.8} parent=0 // pred_fallthru
    _
  // Predicated region
  $region26: #{a_call__.8} parent=0 // pred_check
    _
  $region27: #{a_call__.8} parent=0 // pred_check_branch
    %402 = sbr.rel (0) target = $region29
  $region28: #{a_call__.8} parent=0 // pred_region
    _
  $region29: #{a_call__.8} parent=0 // pred_fallthru
    _
  // Predicated region
  $region30: #{a_call__.8} parent=0 // pred_check
    _
  $region31: #{a_call__.8} parent=0 // pred_check_branch
    %404 = sbr.rel (0) target = $region33
  $region32: #{a_call__.8} parent=0 // pred_region
    _
  $region33: #{a_call__.8} parent=0 // pred_fallthru
    _
  // Predicated region
  $region34: #{a_call__.8} parent=0 // pred_check
    _
  $region35: #{a_call__.8} parent=0 // pred_check_branch
    %406 = sbr.rel (0) target = $region37
  $region36: #{a_call__.8} parent=0 // pred_region
    %s407 = sadd.s32 0, 0
    %s408 = smul.u32 4, %s407
    %p409 = scmp.lt.s32.totalorder %s408, 3
    %s410 = scalar_select %p409, %s408, 3
    %s411 = smul.addr %s410, 4
    %s412 = scalar_lea.vmem %s4, %s411
  $region37: #{a_call__.8} parent=0 // pred_fallthru
    _
  // Predicated region
  $region38: #{a_call__.8} parent=0 // pred_check
    _
  $region39: #{a_call__.8} parent=0 // pred_check_branch
    %414 = sbr.rel (0) target = $region41
  $region40: #{a_call__.8} parent=0 // pred_region
    _
  $region41: #{a_call__.8} parent=0 // pred_fallthru
    _
  // Predicated region
  $region42: #{a_call__.8} parent=0 // pred_check
    _
  $region43: #{a_call__.8} parent=0 // pred_check_branch
    %416 = sbr.rel (0) target = $region45
  $region44: #{a_call__.8} parent=0 // pred_region
    _
  $region45: #{a_call__.8} parent=0 // pred_fallthru
    _

// kernel: a_call__.9
$region0: #{a_call__.9}
  #allocation0 [shape = 'u32[]', space=smem, size = 0x4, offset = 0x4, fixed_abs, tag = 'smem constant byte address 0x4 - core index']
  #allocation1 [shape = 'u32[144,128]{1,0:T(1,128)}', space=vmem, size = 0x12000, scoped, tag = 'internal scratch']
  %s0 = inlined_call_operand.vmem [shape: bf16[16,512], index: 0, kind: input, shape index: {}]
  %s1 = inlined_call_operand.vmem [shape: bf16[16,512], index: 1, kind: input, shape index: {}]
  %s2 = inlined_call_operand.vmem [shape: bf16[16,16], index: 2, kind: input, shape index: {}]
  %s3 = inlined_call_operand.vmem [shape: f32[16,1], index: 3, kind: input, shape index: {}]
  %s4 = inlined_call_operand.vmem [shape: bf16[16,512], index: 4, kind: output, shape index: {}]
  %s5 = sld [smem:[#allocation0]]
  $region26: #{a_call__.9} parent=0
    _
  %s7 = ssub.s32 1, %s5
  %s8 = scalar_select 0, %s7, %s5
  // Predicated region
  $region2: #{a_call__.9} parent=0 // pred_check
    _
  $region3: #{a_call__.9} parent=0 // pred_check_branch
    %10 = sbr.rel (0) target = $region5
  $region4: #{a_call__.9} parent=0 // pred_region
    %s11 = sadd.s32 0, 0
    %s12 = smul.u32 4, %s11
    %p13 = scmp.lt.s32.totalorder %s12, 3
    %s14 = scalar_select %p13, %s12, 3
    %s15 = smul.addr %s14, 4
    %s16 = scalar_lea.vmem %s0, %s15
    %s17 = sadd.s32 0, 0
    %s18 = smul.u32 4, %s17
  $region5: #{a_call__.9} parent=0 // pred_fallthru
    _
  // Predicated region
  $region6: #{a_call__.9} parent=0 // pred_check
    _
  $region7: #{a_call__.9} parent=0 // pred_check_branch
    %20 = sbr.rel (0) target = $region9
  $region8: #{a_call__.9} parent=0 // pred_region
    %s21 = sadd.s32 0, 0
    %s22 = smul.u32 4, %s21
    %p23 = scmp.lt.s32.totalorder %s22, 3
    %s24 = scalar_select %p23, %s22, 3
    %s25 = smul.addr %s24, 4
    %s26 = scalar_lea.vmem %s1, %s25
    %s27 = sadd.s32 0, 0
    %s28 = smul.u32 4, %s27
  $region9: #{a_call__.9} parent=0 // pred_fallthru
    _
  // Predicated region
  $region10: #{a_call__.9} parent=0 // pred_check
    _
  $region11: #{a_call__.9} parent=0 // pred_check_branch
    %30 = sbr.rel (0) target = $region13
  $region12: #{a_call__.9} parent=0 // pred_region
    _
  $region13: #{a_call__.9} parent=0 // pred_fallthru
    _
  // Predicated region
  $region14: #{a_call__.9} parent=0 // pred_check
    _
  $region15: #{a_call__.9} parent=0 // pred_check_branch
    %32 = sbr.rel (0) target = $region17
  $region16: #{a_call__.9} parent=0 // pred_region
    _
  $region17: #{a_call__.9} parent=0 // pred_fallthru
    _
  %s33 = sadd.s32 0, 0
  %s34 = smul.u32 4, %s33
  %p35 = scmp.lt.s32.totalorder %s34, 3
  %s36 = scalar_select %p35, %s34, 3
  %s37 = smul.addr %s36, 4
  %s38 = scalar_lea.vmem %s0, %s37
  %s39 = sadd.s32 0, 0
  %s40 = smul.u32 4, %s39
  %p41 = scmp.lt.s32.totalorder %s40, 3
  %s42 = scalar_select %p41, %s40, 3
  %s43 = smul.addr %s42, 4
  %s44 = scalar_lea.vmem %s1, %s43
  %s45 = sadd.s32 0, 0
  %s46 = smul.u32 4, %s45
  %p47 = scmp.lt.s32.totalorder %s46, 3
  %s48 = scalar_select %p47, %s46, 3
  %s49 = smul.addr %s48, 4
  %s50 = scalar_lea.vmem %s4, %s49
  %s51 = sadd.s32 0, 0
  %s52 = smul.u32 4, %s51
  %p53 = scmp.lt.s32.totalorder %s52, 3
  %s54 = scalar_select %p53, %s52, 3
  %s55 = smul.addr %s54, 4
  %s56 = scalar_lea.vmem %s0, %s55
  %s57 = sadd.s32 0, 0
  %s58 = smul.u32 4, %s57
  %s59 = sadd.s32 0, 0
  %s60 = smul.u32 4, %s59
  %p61 = scmp.lt.s32.totalorder %s60, 3
  %s62 = scalar_select %p61, %s60, 3
  %s63 = smul.addr %s62, 4
  %s64 = scalar_lea.vmem %s1, %s63
  %s65 = sadd.s32 0, 0
  %s66 = smul.u32 4, %s65
  %s67 = sadd.s32 0, 0
  %s68 = smul.u32 4, %s67
  %p69 = scmp.lt.s32.totalorder %s68, 3
  %s70 = scalar_select %p69, %s68, 3
  %s71 = smul.addr %s70, 4
  %s72 = scalar_lea.vmem %s4, %s71
  %s73 = sadd.s32 0, 0
  %s74 = smul.u32 4, %s73
  %v76 = vld [vmem:[%s56] sm:$0xff]
  %v77 = vld [vmem:[%s56 + $0x8] sm:$0xff]
  %v78 = vld [vmem:[%s56 + $0x10] sm:$0xff]
  %v79 = vld [vmem:[%s56 + $0x18] sm:$0xff]
  %v80 = vmax.bf16 %v76, 0
  %v81 = vmax.bf16 %v77, 0
  %v82 = vmax.bf16 %v78, 0
  %v83 = vmax.bf16 %v79, 0
  %v84 = vld [vmem:[%s2] sm:$0xf]
  %v85 = vld [vmem:[%s2 + $0x4] sm:$0xf]
  %v86 = vld [vmem:[%s64] sm:$0xff]
  %v87 = vld [vmem:[%s64 + $0x8] sm:$0xff]
  %v88 = vld [vmem:[%s64 + $0x10] sm:$0xff]
  %v89 = vld [vmem:[%s64 + $0x18] sm:$0xff]
  %v90 = vunpack.c.l.bf16 %v86
  %v91 = vunpack.c.h.bf16 %v86
  %v92 = vunpack.c.l.bf16 %v87
  %v93 = vunpack.c.h.bf16 %v87
  %v94 = vunpack.c.l.bf16 %v88
  %v95 = vunpack.c.h.bf16 %v88
  %v96 = vunpack.c.l.bf16 %v89
  %v97 = vunpack.c.h.bf16 %v89
  %v100 = vunpack.c.l.b16 %v84
  %v101 = vunpack.c.l.b16 %v85
  %v102 = vpack.c.b16 %v101, %v100
  %v107 = vunpack.c.l.b16 %v80
  %v108 = vunpack.c.h.b16 %v80
  %v109 = vunpack.c.l.b16 %v81
  %v110 = vunpack.c.h.b16 %v81
  %v111 = vunpack.c.l.b16 %v82
  %v112 = vunpack.c.h.b16 %v82
  %v113 = vunpack.c.l.b16 %v83
  %v114 = vunpack.c.h.b16 %v83
  %v115 = vpack.c.b16 %v111, %v107
  %v116 = vpack.c.b16 %v112, %v108
  %v117 = vpack.c.b16 %v113, %v109
  %v118 = vpack.c.b16 %v114, %v110
  %vm123 = vcmask 130048
  %v125 = vsel %vm123, %v102, 0
  %127 = vmatprep.subr.bf16.mxu0 0
  %128 = vmatpush1.bf16.msra.mxu0 0
  %129 = vmatprep.subr.bf16.mxu0 0
  %130 = vmatpush1.bf16.msra.mxu0 0
  %131 = vmatprep.subr.bf16.mxu0 0
  %132 = vmatpush1.bf16.msra.mxu0 0
  %133 = vmatprep.subr.bf16.mxu0 0
  %134 = vmatpush1.bf16.msra.mxu0 0
  %135 = vmatprep.subr.bf16.mxu0 0
  %136 = vmatpush1.bf16.msra.mxu0 0
  %137 = vmatprep.subr.bf16.mxu0 0
  %138 = vmatpush1.bf16.msra.mxu0 0
  %139 = vmatprep.subr.bf16.mxu0 0
  %140 = vmatpush1.bf16.msra.mxu0 0
  %141 = vmatprep.subr.bf16.mxu0 %v116
  %142 = vmatpush1.bf16.msra.mxu0 %v115
  %143 = vmatprep.subr.bf16.mxu0 0
  %144 = vmatpush2.bf16.msra.mxu0 0
  %145 = vmatprep.subr.bf16.mxu0 0
  %146 = vmatpush2.bf16.msra.mxu0 0
  %147 = vmatprep.subr.bf16.mxu0 0
  %148 = vmatpush2.bf16.msra.mxu0 0
  %149 = vmatprep.subr.bf16.mxu0 0
  %150 = vmatpush2.bf16.msra.mxu0 0
  %151 = vmatprep.subr.bf16.mxu0 0
  %152 = vmatpush2.bf16.msra.mxu0 0
  %153 = vmatprep.subr.bf16.mxu0 0
  %154 = vmatpush2.bf16.msra.mxu0 0
  %155 = vmatprep.subr.bf16.mxu0 0
  %156 = vmatpush2.bf16.msra.mxu0 0
  %157 = vmatprep.subr.bf16.mxu0 0
  %158 = vmatpush2.bf16.msra.mxu0 0
  %159 = vmatprep.mubr.bf16.mxu0 0
  %160 = vmatmul.mubr.bf16.gmra.mxu0 %v125
  %v161 = vpop.f32.mrf.mxu0
  %v162 = vadd.f32 %v90, %v161
  %v163 = vpop.f32.mrf.mxu0
  %v164 = vadd.f32 %v91, %v163
  %v165 = vpop.f32.mrf.mxu0
  %v166 = vadd.f32 %v94, %v165
  %v167 = vpop.f32.mrf.mxu0
  %v168 = vadd.f32 %v95, %v167
  %169 = vdwg.mxu0
  %170 = vmatprep.subr.bf16.mxu0 0
  %171 = vmatpush1.bf16.msra.mxu0 0
  %172 = vmatprep.subr.bf16.mxu0 0
  %173 = vmatpush1.bf16.msra.mxu0 0
  %174 = vmatprep.subr.bf16.mxu0 0
  %175 = vmatpush1.bf16.msra.mxu0 0
  %176 = vmatprep.subr.bf16.mxu0 0
  %177 = vmatpush1.bf16.msra.mxu0 0
  %178 = vmatprep.subr.bf16.mxu0 0
  %179 = vmatpush1.bf16.msra.mxu0 0
  %180 = vmatprep.subr.bf16.mxu0 0
  %181 = vmatpush1.bf16.msra.mxu0 0
  %182 = vmatprep.subr.bf16.mxu0 0
  %183 = vmatpush1.bf16.msra.mxu0 0
  %184 = vmatprep.subr.bf16.mxu0 %v118
  %185 = vmatpush1.bf16.msra.mxu0 %v117
  %186 = vmatprep.subr.bf16.mxu0 0
  %187 = vmatpush2.bf16.msra.mxu0 0
  %188 = vmatprep.subr.bf16.mxu0 0
  %189 = vmatpush2.bf16.msra.mxu0 0
  %190 = vmatprep.subr.bf16.mxu0 0
  %191 = vmatpush2.bf16.msra.mxu0 0
  %192 = vmatprep.subr.bf16.mxu0 0
  %193 = vmatpush2.bf16.msra.mxu0 0
  %194 = vmatprep.subr.bf16.mxu0 0
  %195 = vmatpush2.bf16.msra.mxu0 0
  %196 = vmatprep.subr.bf16.mxu0 0
  %197 = vmatpush2.bf16.msra.mxu0 0
  %198 = vmatprep.subr.bf16.mxu0 0
  %199 = vmatpush2.bf16.msra.mxu0 0
  %200 = vmatprep.subr.bf16.mxu0 0
  %201 = vmatpush2.bf16.msra.mxu0 0
  %202 = vmatprep.mubr.bf16.mxu0 0
  %203 = vmatmul.mubr.bf16.gmra.mxu0 %v125
  %v204 = vpop.f32.mrf.mxu0
  %v205 = vadd.f32 %v92, %v204
  %v206 = vpop.f32.mrf.mxu0
  %v207 = vadd.f32 %v93, %v206
  %v208 = vpop.f32.mrf.mxu0
  %v209 = vadd.f32 %v96, %v208
  %v210 = vpop.f32.mrf.mxu0
  %v211 = vadd.f32 %v97, %v210
  %212 = vdwg.mxu0
  %v213 = vld [vmem:[%s3] sm:$0xff]
  %v214 = vld [vmem:[%s3 + $0x8] sm:$0xff]
  %216 = vset.pattern.permute.xlu0 0
  %217 = vperm.xlu0 %216, %v213
  %v218 = vpop.permute.xlu0 %217
  %221 = vset.pattern.permute.xlu0 0
  %222 = vperm.xlu0 %221, %v214
  %v223 = vpop.permute.xlu0 %222
  %v225 = vadd.f32 %v162, %v218
  %v226 = vadd.f32 %v164, %v218
  %v227 = vadd.f32 %v205, %v218
  %v228 = vadd.f32 %v207, %v218
  %v229 = vadd.f32 %v166, %v223
  %v230 = vadd.f32 %v168, %v223
  %v231 = vadd.f32 %v209, %v223
  %v232 = vadd.f32 %v211, %v223
  %v233 = vpack.c.bf16 %v229, %v225
  %v234 = vpack.c.bf16 %v230, %v226
  %v235 = vpack.c.bf16 %v231, %v227
  %v236 = vpack.c.bf16 %v232, %v228
  %v241 = vunpack.c.l.b16 %v233
  %v242 = vunpack.c.l.b16 %v234
  %v243 = vunpack.c.l.b16 %v235
  %v244 = vunpack.c.l.b16 %v236
  %v245 = vunpack.c.h.b16 %v233
  %v246 = vunpack.c.h.b16 %v234
  %v247 = vunpack.c.h.b16 %v235
  %v248 = vunpack.c.h.b16 %v236
  %v249 = vpack.c.b16 %v242, %v241
  %v250 = vpack.c.b16 %v244, %v243
  %v251 = vpack.c.b16 %v246, %v245
  %v252 = vpack.c.b16 %v248, %v247
  %257 = vst [vmem:[%s72] sm:$0xff] %v249
  %258 = vst [vmem:[%s72 + $0x8] sm:$0xff] %v250
  %259 = vst [vmem:[%s72 + $0x10] sm:$0xff] %v251
  %260 = vst [vmem:[%s72 + $0x18] sm:$0xff] %v252
  %s261 = sadd.s32 0, 0
  %s262 = smul.u32 4, %s261
  %p263 = scmp.lt.s32.totalorder %s262, 3
  %s264 = scalar_select %p263, %s262, 3
  %s265 = smul.addr %s264, 4
  %s266 = scalar_lea.vmem %s4, %s265
  // Predicated region
  $region18: #{a_call__.9} parent=0 // pred_check
    _
  $region19: #{a_call__.9} parent=0 // pred_check_branch
    %268 = sbr.rel (0) target = $region21
  $region20: #{a_call__.9} parent=0 // pred_region
    %s269 = sadd.s32 0, 0
    %s270 = smul.u32 4, %s269
  $region21: #{a_call__.9} parent=0 // pred_fallthru
    _
  // Predicated region
  $region22: #{a_call__.9} parent=0 // pred_check
    _
  $region23: #{a_call__.9} parent=0 // pred_check_branch
    %272 = sbr.rel (0) target = $region25
  $region24: #{a_call__.9} parent=0 // pred_region
    %s273 = sadd.s32 0, 0
    %s274 = smul.u32 4, %s273
    %p275 = scmp.lt.s32.totalorder %s274, 3
    %s276 = scalar_select %p275, %s274, 3
    %s277 = smul.addr %s276, 4
    %s278 = scalar_lea.vmem %s4, %s277
  $region25: #{a_call__.9} parent=0 // pred_fallthru
    _

// kernel: a_call__.7
$region0: #{a_call__.7}
  #allocation0 [shape = 'u32[]', space=smem, size = 0x4, offset = 0x4, fixed_abs, tag = 'smem constant byte address 0x4 - core index']
  #allocation1 [shape = 'u32[144,128]{1,0:T(1,128)}', space=vmem, size = 0x12000, scoped, tag = 'internal scratch']
  %s0 = inlined_call_operand.vmem [shape: bf16[8,512], index: 0, kind: input, shape index: {}]
  %s1 = inlined_call_operand.vmem [shape: bf16[16,8], index: 1, kind: input, shape index: {}]
  %s2 = inlined_call_operand.vmem [shape: f32[16,1], index: 2, kind: input, shape index: {}]
  %s3 = inlined_call_operand.vmem [shape: bf16[8,512], index: 3, kind: input, shape index: {}]
  %s4 = inlined_call_operand.vmem [shape: bf16[16,8], index: 4, kind: input, shape index: {}]
  %s5 = inlined_call_operand.vmem [shape: f32[16,1], index: 5, kind: input, shape index: {}]
  %s6 = inlined_call_operand.vmem [shape: bf16[16,512], index: 6, kind: output, shape index: {0}]
  %s7 = inlined_call_operand.vmem [shape: bf16[16,512], index: 7, kind: output, shape index: {1}]
  %s8 = inlined_call_operand.vmem [shape: f32[1,16,16], index: 8, kind: output, shape index: {2}]
  %s9 = inlined_call_operand.vmem [shape: f32[1,16,1], index: 9, kind: output, shape index: {3}]
  %s10 = inlined_call_operand.vmem [shape: f32[1,16,16], index: 10, kind: output, shape index: {4}]
  %s11 = inlined_call_operand.vmem [shape: f32[1,16,1], index: 11, kind: output, shape index: {5}]
  %12 = xla_tuple %s6, %s7, %s8, %s9, %s10, %s11
  %s13 = sld [smem:[#allocation0]]
  $region78: #{a_call__.7} parent=0
    _
  %s15 = ssub.s32 1, %s13
  %s16 = scalar_select 0, %s15, %s13
  // Predicated region
  $region2: #{a_call__.7} parent=0 // pred_check
    _
  $region3: #{a_call__.7} parent=0 // pred_check_branch
    %18 = sbr.rel (0) target = $region5
  $region4: #{a_call__.7} parent=0 // pred_region
    %s19 = sadd.s32 0, 0
    %s20 = smul.u32 4, %s19
    %p21 = scmp.lt.s32.totalorder %s20, 3
    %s22 = scalar_select %p21, %s20, 3
    %s23 = smul.addr %s22, 4
    %s24 = scalar_lea.vmem %s0, %s23
    %s25 = sadd.s32 0, 0
    %s26 = smul.u32 4, %s25
  $region5: #{a_call__.7} parent=0 // pred_fallthru
    _
  // Predicated region
  $region6: #{a_call__.7} parent=0 // pred_check
    _
  $region7: #{a_call__.7} parent=0 // pred_check_branch
    %28 = sbr.rel (0) target = $region9
  $region8: #{a_call__.7} parent=0 // pred_region
    _
  $region9: #{a_call__.7} parent=0 // pred_fallthru
    _
  // Predicated region
  $region10: #{a_call__.7} parent=0 // pred_check
    _
  $region11: #{a_call__.7} parent=0 // pred_check_branch
    %30 = sbr.rel (0) target = $region13
  $region12: #{a_call__.7} parent=0 // pred_region
    _
  $region13: #{a_call__.7} parent=0 // pred_fallthru
    _
  // Predicated region
  $region14: #{a_call__.7} parent=0 // pred_check
    _
  $region15: #{a_call__.7} parent=0 // pred_check_branch
    %32 = sbr.rel (0) target = $region17
  $region16: #{a_call__.7} parent=0 // pred_region
    %s33 = sadd.s32 0, 0
    %s34 = smul.u32 4, %s33
    %p35 = scmp.lt.s32.totalorder %s34, 3
    %s36 = scalar_select %p35, %s34, 3
    %s37 = smul.addr %s36, 4
    %s38 = scalar_lea.vmem %s3, %s37
    %s39 = sadd.s32 0, 0
    %s40 = smul.u32 4, %s39
  $region17: #{a_call__.7} parent=0 // pred_fallthru
    _
  // Predicated region
  $region18: #{a_call__.7} parent=0 // pred_check
    _
  $region19: #{a_call__.7} parent=0 // pred_check_branch
    %42 = sbr.rel (0) target = $region21
  $region20: #{a_call__.7} parent=0 // pred_region
    _
  $region21: #{a_call__.7} parent=0 // pred_fallthru
    _
  // Predicated region
  $region22: #{a_call__.7} parent=0 // pred_check
    _
  $region23: #{a_call__.7} parent=0 // pred_check_branch
    %44 = sbr.rel (0) target = $region25
  $region24: #{a_call__.7} parent=0 // pred_region
    _
  $region25: #{a_call__.7} parent=0 // pred_fallthru
    _
  %s45 = sadd.s32 0, 0
  %s46 = smul.u32 4, %s45
  %p47 = scmp.lt.s32.totalorder %s46, 3
  %s48 = scalar_select %p47, %s46, 3
  %s49 = smul.addr %s48, 4
  %s50 = scalar_lea.vmem %s0, %s49
  %s51 = sadd.s32 0, 0
  %s52 = smul.u32 4, %s51
  %p53 = scmp.lt.s32.totalorder %s52, 3
  %s54 = scalar_select %p53, %s52, 3
  %s55 = smul.addr %s54, 4
  %s56 = scalar_lea.vmem %s3, %s55
  %s57 = sadd.s32 0, 0
  %s58 = smul.u32 4, %s57
  %p59 = scmp.lt.s32.totalorder %s58, 3
  %s60 = scalar_select %p59, %s58, 3
  %s61 = smul.addr %s60, 4
  %s62 = scalar_lea.vmem %s6, %s61
  %s63 = sadd.s32 0, 0
  %s64 = smul.u32 4, %s63
  %p65 = scmp.lt.s32.totalorder %s64, 3
  %s66 = scalar_select %p65, %s64, 3
  %s67 = smul.addr %s66, 4
  %s68 = scalar_lea.vmem %s7, %s67
  %s69 = sadd.s32 0, 0
  %s70 = smul.u32 4, %s69
  %p71 = scmp.lt.s32.totalorder %s70, 3
  %s72 = scalar_select %p71, %s70, 3
  %s73 = smul.addr %s72, 4
  %s74 = scalar_lea.vmem %s0, %s73
  %s75 = sadd.s32 0, 0
  %s76 = smul.u32 4, %s75
  %s77 = sadd.s32 0, 0
  %s78 = smul.u32 4, %s77
  %p79 = scmp.lt.s32.totalorder %s78, 3
  %s80 = scalar_select %p79, %s78, 3
  %s81 = smul.addr %s80, 4
  %s82 = scalar_lea.vmem %s3, %s81
  %s83 = sadd.s32 0, 0
  %s84 = smul.u32 4, %s83
  %s85 = sadd.s32 0, 0
  %s86 = smul.u32 4, %s85
  %p87 = scmp.lt.s32.totalorder %s86, 3
  %s88 = scalar_select %p87, %s86, 3
  %s89 = smul.addr %s88, 4
  %s90 = scalar_lea.vmem %s6, %s89
  %s91 = sadd.s32 0, 0
  %s92 = smul.u32 4, %s91
  %s93 = sadd.s32 0, 0
  %s94 = smul.u32 4, %s93
  %p95 = scmp.lt.s32.totalorder %s94, 3
  %s96 = scalar_select %p95, %s94, 3
  %s97 = smul.addr %s96, 4
  %s98 = scalar_lea.vmem %s7, %s97
  %s99 = sadd.s32 0, 0
  %s100 = smul.u32 4, %s99
  %p102 = scmp.eq.s32.totalorder 0, 0
  // Predicated region
  $region26: #{a_call__.7} parent=0 // pred_check
    %p103 = pneg %p102
  $region27: #{a_call__.7} parent=0 // pred_check_branch
    %105 = sbr.rel (%p103) target = $region29
  $region28: #{a_call__.7} parent=0 // pred_region
    %vm106 = vcmask 130048
    %107 = vst.msk [vmem:[%s8] sm:$0xff] %vm106, 0.0
    %108 = vst.msk [vmem:[%s8 + $0x8] sm:$0xff] %vm106, 0.0
    %vm109 = vcmask 7168
    %110 = vst.msk [vmem:[%s9] sm:$0xff] %vm109, 0.0
    %111 = vst.msk [vmem:[%s9 + $0x8] sm:$0xff] %vm109, 0.0
    %112 = vst.msk [vmem:[%s10] sm:$0xff] %vm106, 0.0
    %113 = vst.msk [vmem:[%s10 + $0x8] sm:$0xff] %vm106, 0.0
    %114 = vst.msk [vmem:[%s11] sm:$0xff] %vm109, 0.0
    %115 = vst.msk [vmem:[%s11 + $0x8] sm:$0xff] %vm109, 0.0
  $region29: #{a_call__.7} parent=0 // pred_fallthru
    _
  %v116 = vld [vmem:[%s74] sm:$0xff]
  %v117 = vld [vmem:[%s74 + $0x8] sm:$0xff]
  %v118 = vmax.bf16 %v116, 0
  %v119 = vmax.bf16 %v117, 0
  %v120 = vld [vmem:[%s1] sm:$0xf]
  %v121 = vld [vmem:[%s1 + $0x4] sm:$0xf]
  %v122 = vld [vmem:[%s2] sm:$0xff]
  %v123 = vld [vmem:[%s2 + $0x8] sm:$0xff]
  %125 = vset.pattern.permute.xlu0 0
  %126 = vperm.xlu0 %125, %v122
  %v127 = vpop.permute.xlu0 %126
  %130 = vset.pattern.permute.xlu0 0
  %131 = vperm.xlu0 %130, %v123
  %v132 = vpop.permute.xlu0 %131
  %v136 = vunpack.c.l.b16 %v120
  %v137 = vunpack.c.l.b16 %v121
  %v138 = vpack.c.b16 %v137, %v136
  %v141 = vunpack.c.l.b16 %v118
  %v142 = vunpack.c.h.b16 %v118
  %v143 = vunpack.c.l.b16 %v119
  %v144 = vunpack.c.h.b16 %v119
  %v145 = vpack.c.b16 %v141, %v141
  %v146 = vpack.c.b16 %v142, %v142
  %v147 = vpack.c.b16 %v143, %v143
  %v148 = vpack.c.b16 %v144, %v144
  %vm149 = vcmask 64512
  %v151 = vsel %vm149, %v138, 0
  %vm153 = vcmask 1043456
  %v155 = vsel %vm153, %v145, 0
  %v158 = vsel %vm153, %v146, 0
  %v161 = vsel %vm153, %v147, 0
  %v164 = vsel %vm153, %v148, 0
  %166 = vmatprep.subr.bf16.mxu0 0
  %167 = vmatpush1.bf16.msra.mxu0 0
  %168 = vmatprep.subr.bf16.mxu0 0
  %169 = vmatpush1.bf16.msra.mxu0 0
  %170 = vmatprep.subr.bf16.mxu0 0
  %171 = vmatpush1.bf16.msra.mxu0 0
  %172 = vmatprep.subr.bf16.mxu0 0
  %173 = vmatpush1.bf16.msra.mxu0 0
  %174 = vmatprep.subr.bf16.mxu0 0
  %175 = vmatpush1.bf16.msra.mxu0 0
  %176 = vmatprep.subr.bf16.mxu0 0
  %177 = vmatpush1.bf16.msra.mxu0 0
  %178 = vmatprep.subr.bf16.mxu0 0
  %179 = vmatpush1.bf16.msra.mxu0 0
  %180 = vmatprep.subr.bf16.mxu0 %v158
  %181 = vmatpush1.bf16.msra.mxu0 %v155
  %182 = vmatprep.subr.bf16.mxu0 0
  %183 = vmatpush2.bf16.msra.mxu0 0
  %184 = vmatprep.subr.bf16.mxu0 0
  %185 = vmatpush2.bf16.msra.mxu0 0
  %186 = vmatprep.subr.bf16.mxu0 0
  %187 = vmatpush2.bf16.msra.mxu0 0
  %188 = vmatprep.subr.bf16.mxu0 0
  %189 = vmatpush2.bf16.msra.mxu0 0
  %190 = vmatprep.subr.bf16.mxu0 0
  %191 = vmatpush2.bf16.msra.mxu0 0
  %192 = vmatprep.subr.bf16.mxu0 0
  %193 = vmatpush2.bf16.msra.mxu0 0
  %194 = vmatprep.subr.bf16.mxu0 0
  %195 = vmatpush2.bf16.msra.mxu0 0
  %196 = vmatprep.subr.bf16.mxu0 0
  %197 = vmatpush2.bf16.msra.mxu0 0
  %198 = vmatprep.mubr.bf16.mxu0 0
  %199 = vmatmul.mubr.bf16.gmra.mxu0 %v151
  %v200 = vpop.f32.mrf.mxu0
  %v201 = vadd.f32 %v127, %v200
  %v202 = vpop.f32.mrf.mxu0
  %v203 = vadd.f32 %v127, %v202
  %v204 = vpop.f32.mrf.mxu0
  %v205 = vadd.f32 %v132, %v204
  %v206 = vpop.f32.mrf.mxu0
  %v207 = vadd.f32 %v132, %v206
  %208 = vdwg.mxu0
  %209 = vmatprep.subr.bf16.mxu0 0
  %210 = vmatpush1.bf16.msra.mxu0 0
  %211 = vmatprep.subr.bf16.mxu0 0
  %212 = vmatpush1.bf16.msra.mxu0 0
  %213 = vmatprep.subr.bf16.mxu0 0
  %214 = vmatpush1.bf16.msra.mxu0 0
  %215 = vmatprep.subr.bf16.mxu0 0
  %216 = vmatpush1.bf16.msra.mxu0 0
  %217 = vmatprep.subr.bf16.mxu0 0
  %218 = vmatpush1.bf16.msra.mxu0 0
  %219 = vmatprep.subr.bf16.mxu0 0
  %220 = vmatpush1.bf16.msra.mxu0 0
  %221 = vmatprep.subr.bf16.mxu0 0
  %222 = vmatpush1.bf16.msra.mxu0 0
  %223 = vmatprep.subr.bf16.mxu0 %v164
  %224 = vmatpush1.bf16.msra.mxu0 %v161
  %225 = vmatprep.subr.bf16.mxu0 0
  %226 = vmatpush2.bf16.msra.mxu0 0
  %227 = vmatprep.subr.bf16.mxu0 0
  %228 = vmatpush2.bf16.msra.mxu0 0
  %229 = vmatprep.subr.bf16.mxu0 0
  %230 = vmatpush2.bf16.msra.mxu0 0
  %231 = vmatprep.subr.bf16.mxu0 0
  %232 = vmatpush2.bf16.msra.mxu0 0
  %233 = vmatprep.subr.bf16.mxu0 0
  %234 = vmatpush2.bf16.msra.mxu0 0
  %235 = vmatprep.subr.bf16.mxu0 0
  %236 = vmatpush2.bf16.msra.mxu0 0
  %237 = vmatprep.subr.bf16.mxu0 0
  %238 = vmatpush2.bf16.msra.mxu0 0
  %239 = vmatprep.subr.bf16.mxu0 0
  %240 = vmatpush2.bf16.msra.mxu0 0
  %241 = vmatprep.mubr.bf16.mxu0 0
  %242 = vmatmul.mubr.bf16.gmra.mxu0 %v151
  %v243 = vpop.f32.mrf.mxu0
  %v244 = vadd.f32 %v127, %v243
  %v245 = vpop.f32.mrf.mxu0
  %v246 = vadd.f32 %v127, %v245
  %v247 = vpop.f32.mrf.mxu0
  %v248 = vadd.f32 %v132, %v247
  %v249 = vpop.f32.mrf.mxu0
  %v250 = vadd.f32 %v132, %v249
  %251 = vdwg.mxu0
  %v252 = vpack.c.bf16 %v205, %v201
  %v253 = vpack.c.bf16 %v207, %v203
  %v254 = vpack.c.bf16 %v248, %v244
  %v255 = vpack.c.bf16 %v250, %v246
  %v260 = vunpack.c.l.b16 %v252
  %v261 = vunpack.c.l.b16 %v253
  %v262 = vunpack.c.l.b16 %v254
  %v263 = vunpack.c.l.b16 %v255
  %v264 = vunpack.c.h.b16 %v252
  %v265 = vunpack.c.h.b16 %v253
  %v266 = vunpack.c.h.b16 %v254
  %v267 = vunpack.c.h.b16 %v255
  %v268 = vpack.c.b16 %v261, %v260
  %v269 = vpack.c.b16 %v263, %v262
  %v270 = vpack.c.b16 %v265, %v264
  %v271 = vpack.c.b16 %v267, %v266
  %276 = vst [vmem:[%s90] sm:$0xff] %v268
  %277 = vst [vmem:[%s90 + $0x8] sm:$0xff] %v269
  %278 = vst [vmem:[%s90 + $0x10] sm:$0xff] %v270
  %279 = vst [vmem:[%s90 + $0x18] sm:$0xff] %v271
  %v280 = vmax.bf16 %v252, 0
  %v281 = vmax.bf16 %v253, 0
  %v282 = vmax.bf16 %v254, 0
  %v283 = vmax.bf16 %v255, 0
  %v284 = vld [vmem:[%s8] sm:$0xff]
  %v285 = vld [vmem:[%s8 + $0x8] sm:$0xff]
  %286 = vmatprep.subr.bf16.mxu0 0
  %287 = vmatpush1.bf16.xpose.msra.mxu0 0
  %288 = vmatprep.subr.bf16.mxu0 0
  %289 = vmatpush1.bf16.xpose.msra.mxu0 0
  %290 = vmatprep.subr.bf16.mxu0 0
  %291 = vmatpush1.bf16.xpose.msra.mxu0 0
  %292 = vmatprep.subr.bf16.mxu0 0
  %293 = vmatpush1.bf16.xpose.msra.mxu0 0
  %294 = vmatprep.subr.bf16.mxu0 0
  %295 = vmatpush1.bf16.xpose.msra.mxu0 0
  %296 = vmatprep.subr.bf16.mxu0 0
  %297 = vmatpush1.bf16.xpose.msra.mxu0 0
  %298 = vmatprep.subr.bf16.mxu0 0
  %299 = vmatpush1.bf16.xpose.msra.mxu0 0
  %300 = vmatprep.subr.bf16.mxu0 %v281
  %301 = vmatpush1.bf16.xpose.msra.mxu0 %v280
  %302 = vmatprep.subr.bf16.mxu0 0
  %303 = vmatpush2.bf16.xpose.msra.mxu0 0
  %304 = vmatprep.subr.bf16.mxu0 0
  %305 = vmatpush2.bf16.xpose.msra.mxu0 0
  %306 = vmatprep.subr.bf16.mxu0 0
  %307 = vmatpush2.bf16.xpose.msra.mxu0 0
  %308 = vmatprep.subr.bf16.mxu0 0
  %309 = vmatpush2.bf16.xpose.msra.mxu0 0
  %310 = vmatprep.subr.bf16.mxu0 0
  %311 = vmatpush2.bf16.xpose.msra.mxu0 0
  %312 = vmatprep.subr.bf16.mxu0 0
  %313 = vmatpush2.bf16.xpose.msra.mxu0 0
  %314 = vmatprep.subr.bf16.mxu0 0
  %315 = vmatpush2.bf16.xpose.msra.mxu0 0
  %316 = vmatprep.subr.bf16.mxu0 0
  %317 = vmatpush2.bf16.xpose.msra.mxu0 0
  %318 = vmatprep.mubr.bf16.mxu0 %v281
  %319 = vmatmul.mubr.bf16.gmra.mxu0 %v280
  %v320 = vpop.f32.mrf.mxu0
  %v321 = vadd.f32 0.0, %v320
  %v322 = vpop.f32.mrf.mxu0
  %v323 = vpop.f32.mrf.mxu0
  %v324 = vadd.f32 0.0, %v323
  %v325 = vpop.f32.mrf.mxu0
  %326 = vdwg.mxu0
  %327 = vmatprep.subr.bf16.mxu0 0
  %328 = vmatpush1.bf16.xpose.msra.mxu0 0
  %329 = vmatprep.subr.bf16.mxu0 0
  %330 = vmatpush1.bf16.xpose.msra.mxu0 0
  %331 = vmatprep.subr.bf16.mxu0 0
  %332 = vmatpush1.bf16.xpose.msra.mxu0 0
  %333 = vmatprep.subr.bf16.mxu0 0
  %334 = vmatpush1.bf16.xpose.msra.mxu0 0
  %335 = vmatprep.subr.bf16.mxu0 0
  %336 = vmatpush1.bf16.xpose.msra.mxu0 0
  %337 = vmatprep.subr.bf16.mxu0 0
  %338 = vmatpush1.bf16.xpose.msra.mxu0 0
  %339 = vmatprep.subr.bf16.mxu0 0
  %340 = vmatpush1.bf16.xpose.msra.mxu0 0
  %341 = vmatprep.subr.bf16.mxu0 %v283
  %342 = vmatpush1.bf16.xpose.msra.mxu0 %v282
  %343 = vmatprep.subr.bf16.mxu0 0
  %344 = vmatpush2.bf16.xpose.msra.mxu0 0
  %345 = vmatprep.subr.bf16.mxu0 0
  %346 = vmatpush2.bf16.xpose.msra.mxu0 0
  %347 = vmatprep.subr.bf16.mxu0 0
  %348 = vmatpush2.bf16.xpose.msra.mxu0 0
  %349 = vmatprep.subr.bf16.mxu0 0
  %350 = vmatpush2.bf16.xpose.msra.mxu0 0
  %351 = vmatprep.subr.bf16.mxu0 0
  %352 = vmatpush2.bf16.xpose.msra.mxu0 0
  %353 = vmatprep.subr.bf16.mxu0 0
  %354 = vmatpush2.bf16.xpose.msra.mxu0 0
  %355 = vmatprep.subr.bf16.mxu0 0
  %356 = vmatpush2.bf16.xpose.msra.mxu0 0
  %357 = vmatprep.subr.bf16.mxu0 0
  %358 = vmatpush2.bf16.xpose.msra.mxu0 0
  %359 = vmatprep.mubr.bf16.mxu0 %v283
  %360 = vmatmul.mubr.bf16.gmra.mxu0 %v282
  %v361 = vpop.f32.mrf.mxu0
  %v362 = vadd.f32 %v321, %v361
  %v363 = vpop.f32.mrf.mxu0
  %v364 = vpop.f32.mrf.mxu0
  %v365 = vadd.f32 %v324, %v364
  %v366 = vpop.f32.mrf.mxu0
  %367 = vdwg.mxu0
  %v368 = vadd.f32 %v284, %v362
  %v369 = vadd.f32 %v285, %v365
  %vm370 = vcmask 130048
  %371 = vst.msk [vmem:[%s8] sm:$0xff] %vm370, %v368
  %372 = vst.msk [vmem:[%s8 + $0x8] sm:$0xff] %vm370, %v369
  %v373 = vld [vmem:[%s9] sm:$0xff]
  %v374 = vld [vmem:[%s9 + $0x8] sm:$0xff]
  %v375 = vunpack.c.l.bf16 %v280
  %v376 = vunpack.c.l.bf16 %v281
  %v377 = vunpack.c.l.bf16 %v282
  %v378 = vunpack.c.l.bf16 %v283
  %v379 = vunpack.c.h.bf16 %v280
  %v380 = vunpack.c.h.bf16 %v281
  %v381 = vunpack.c.h.bf16 %v282
  %v382 = vunpack.c.h.bf16 %v283
  %v383 = vadd.f32 %v375, %v376
  %v384 = vadd.f32 %v383, %v377
  %v385 = vadd.f32 %v384, %v378
  %386 = vadd.xlane.f32.xlu0 %v385
  %v387 = vpop.xlane.xlu0 %386
  %v388 = vadd.f32 %v379, %v380
  %v389 = vadd.f32 %v388, %v381
  %v390 = vadd.f32 %v389, %v382
  %391 = vadd.xlane.f32.xlu0 %v390
  %v392 = vpop.xlane.xlu0 %391
  %v393 = vadd.f32 %v373, %v387
  %v394 = vadd.f32 %v374, %v392
  %vm395 = vcmask 7168
  %396 = vst.msk [vmem:[%s9] sm:$0xff] %vm395, %v393
  %397 = vst.msk [vmem:[%s9 + $0x8] sm:$0xff] %vm395, %v394
  %v398 = vld [vmem:[%s82] sm:$0xff]
  %v399 = vld [vmem:[%s82 + $0x8] sm:$0xff]
  %v400 = vmax.bf16 %v398, 0
  %v401 = vmax.bf16 %v399, 0
  %v402 = vld [vmem:[%s4] sm:$0xf]
  %v403 = vld [vmem:[%s4 + $0x4] sm:$0xf]
  %v404 = vld [vmem:[%s5] sm:$0xff]
  %v405 = vld [vmem:[%s5 + $0x8] sm:$0xff]
  %407 = vset.pattern.permute.xlu0 0
  %408 = vperm.xlu0 %407, %v404
  %v409 = vpop.permute.xlu0 %408
  %412 = vset.pattern.permute.xlu0 0
  %413 = vperm.xlu0 %412, %v405
  %v414 = vpop.permute.xlu0 %413
  %v418 = vunpack.c.l.b16 %v402
  %v419 = vunpack.c.l.b16 %v403
  %v420 = vpack.c.b16 %v419, %v418
  %v423 = vunpack.c.l.b16 %v400
  %v424 = vunpack.c.h.b16 %v400
  %v425 = vunpack.c.l.b16 %v401
  %v426 = vunpack.c.h.b16 %v401
  %v427 = vpack.c.b16 %v423, %v423
  %v428 = vpack.c.b16 %v424, %v424
  %v429 = vpack.c.b16 %v425, %v425
  %v430 = vpack.c.b16 %v426, %v426
  %v432 = vsel %vm149, %v420, 0
  %v435 = vsel %vm153, %v427, 0
  %v438 = vsel %vm153, %v428, 0
  %v441 = vsel %vm153, %v429, 0
  %v444 = vsel %vm153, %v430, 0
  %446 = vmatprep.subr.bf16.mxu0 0
  %447 = vmatpush1.bf16.msra.mxu0 0
  %448 = vmatprep.subr.bf16.mxu0 0
  %449 = vmatpush1.bf16.msra.mxu0 0
  %450 = vmatprep.subr.bf16.mxu0 0
  %451 = vmatpush1.bf16.msra.mxu0 0
  %452 = vmatprep.subr.bf16.mxu0 0
  %453 = vmatpush1.bf16.msra.mxu0 0
  %454 = vmatprep.subr.bf16.mxu0 0
  %455 = vmatpush1.bf16.msra.mxu0 0
  %456 = vmatprep.subr.bf16.mxu0 0
  %457 = vmatpush1.bf16.msra.mxu0 0
  %458 = vmatprep.subr.bf16.mxu0 0
  %459 = vmatpush1.bf16.msra.mxu0 0
  %460 = vmatprep.subr.bf16.mxu0 %v438
  %461 = vmatpush1.bf16.msra.mxu0 %v435
  %462 = vmatprep.subr.bf16.mxu0 0
  %463 = vmatpush2.bf16.msra.mxu0 0
  %464 = vmatprep.subr.bf16.mxu0 0
  %465 = vmatpush2.bf16.msra.mxu0 0
  %466 = vmatprep.subr.bf16.mxu0 0
  %467 = vmatpush2.bf16.msra.mxu0 0
  %468 = vmatprep.subr.bf16.mxu0 0
  %469 = vmatpush2.bf16.msra.mxu0 0
  %470 = vmatprep.subr.bf16.mxu0 0
  %471 = vmatpush2.bf16.msra.mxu0 0
  %472 = vmatprep.subr.bf16.mxu0 0
  %473 = vmatpush2.bf16.msra.mxu0 0
  %474 = vmatprep.subr.bf16.mxu0 0
  %475 = vmatpush2.bf16.msra.mxu0 0
  %476 = vmatprep.subr.bf16.mxu0 0
  %477 = vmatpush2.bf16.msra.mxu0 0
  %478 = vmatprep.mubr.bf16.mxu0 0
  %479 = vmatmul.mubr.bf16.gmra.mxu0 %v432
  %v480 = vpop.f32.mrf.mxu0
  %v481 = vadd.f32 %v409, %v480
  %v482 = vpop.f32.mrf.mxu0
  %v483 = vadd.f32 %v409, %v482
  %v484 = vpop.f32.mrf.mxu0
  %v485 = vadd.f32 %v414, %v484
  %v486 = vpop.f32.mrf.mxu0
  %v487 = vadd.f32 %v414, %v486
  %488 = vdwg.mxu0
  %489 = vmatprep.subr.bf16.mxu0 0
  %490 = vmatpush1.bf16.msra.mxu0 0
  %491 = vmatprep.subr.bf16.mxu0 0
  %492 = vmatpush1.bf16.msra.mxu0 0
  %493 = vmatprep.subr.bf16.mxu0 0
  %494 = vmatpush1.bf16.msra.mxu0 0
  %495 = vmatprep.subr.bf16.mxu0 0
  %496 = vmatpush1.bf16.msra.mxu0 0
  %497 = vmatprep.subr.bf16.mxu0 0
  %498 = vmatpush1.bf16.msra.mxu0 0
  %499 = vmatprep.subr.bf16.mxu0 0
  %500 = vmatpush1.bf16.msra.mxu0 0
  %501 = vmatprep.subr.bf16.mxu0 0
  %502 = vmatpush1.bf16.msra.mxu0 0
  %503 = vmatprep.subr.bf16.mxu0 %v444
  %504 = vmatpush1.bf16.msra.mxu0 %v441
  %505 = vmatprep.subr.bf16.mxu0 0
  %506 = vmatpush2.bf16.msra.mxu0 0
  %507 = vmatprep.subr.bf16.mxu0 0
  %508 = vmatpush2.bf16.msra.mxu0 0
  %509 = vmatprep.subr.bf16.mxu0 0
  %510 = vmatpush2.bf16.msra.mxu0 0
  %511 = vmatprep.subr.bf16.mxu0 0
  %512 = vmatpush2.bf16.msra.mxu0 0
  %513 = vmatprep.subr.bf16.mxu0 0
  %514 = vmatpush2.bf16.msra.mxu0 0
  %515 = vmatprep.subr.bf16.mxu0 0
  %516 = vmatpush2.bf16.msra.mxu0 0
  %517 = vmatprep.subr.bf16.mxu0 0
  %518 = vmatpush2.bf16.msra.mxu0 0
  %519 = vmatprep.subr.bf16.mxu0 0
  %520 = vmatpush2.bf16.msra.mxu0 0
  %521 = vmatprep.mubr.bf16.mxu0 0
  %522 = vmatmul.mubr.bf16.gmra.mxu0 %v432
  %v523 = vpop.f32.mrf.mxu0
  %v524 = vadd.f32 %v409, %v523
  %v525 = vpop.f32.mrf.mxu0
  %v526 = vadd.f32 %v409, %v525
  %v527 = vpop.f32.mrf.mxu0
  %v528 = vadd.f32 %v414, %v527
  %v529 = vpop.f32.mrf.mxu0
  %v530 = vadd.f32 %v414, %v529
  %531 = vdwg.mxu0
  %v532 = vpack.c.bf16 %v485, %v481
  %v533 = vpack.c.bf16 %v487, %v483
  %v534 = vpack.c.bf16 %v528, %v524
  %v535 = vpack.c.bf16 %v530, %v526
  %v540 = vunpack.c.l.b16 %v532
  %v541 = vunpack.c.l.b16 %v533
  %v542 = vunpack.c.l.b16 %v534
  %v543 = vunpack.c.l.b16 %v535
  %v544 = vunpack.c.h.b16 %v532
  %v545 = vunpack.c.h.b16 %v533
  %v546 = vunpack.c.h.b16 %v534
  %v547 = vunpack.c.h.b16 %v535
  %v548 = vpack.c.b16 %v541, %v540
  %v549 = vpack.c.b16 %v543, %v542
  %v550 = vpack.c.b16 %v545, %v544
  %v551 = vpack.c.b16 %v547, %v546
  %556 = vst [vmem:[%s98] sm:$0xff] %v548
  %557 = vst [vmem:[%s98 + $0x8] sm:$0xff] %v549
  %558 = vst [vmem:[%s98 + $0x10] sm:$0xff] %v550
  %559 = vst [vmem:[%s98 + $0x18] sm:$0xff] %v551
  %v560 = vmax.bf16 %v532, 0
  %v561 = vmax.bf16 %v533, 0
  %v562 = vmax.bf16 %v534, 0
  %v563 = vmax.bf16 %v535, 0
  %v564 = vld [vmem:[%s10] sm:$0xff]
  %v565 = vld [vmem:[%s10 + $0x8] sm:$0xff]
  %566 = vmatprep.subr.bf16.mxu0 0
  %567 = vmatpush1.bf16.xpose.msra.mxu0 0
  %568 = vmatprep.subr.bf16.mxu0 0
  %569 = vmatpush1.bf16.xpose.msra.mxu0 0
  %570 = vmatprep.subr.bf16.mxu0 0
  %571 = vmatpush1.bf16.xpose.msra.mxu0 0
  %572 = vmatprep.subr.bf16.mxu0 0
  %573 = vmatpush1.bf16.xpose.msra.mxu0 0
  %574 = vmatprep.subr.bf16.mxu0 0
  %575 = vmatpush1.bf16.xpose.msra.mxu0 0
  %576 = vmatprep.subr.bf16.mxu0 0
  %577 = vmatpush1.bf16.xpose.msra.mxu0 0
  %578 = vmatprep.subr.bf16.mxu0 0
  %579 = vmatpush1.bf16.xpose.msra.mxu0 0
  %580 = vmatprep.subr.bf16.mxu0 %v561
  %581 = vmatpush1.bf16.xpose.msra.mxu0 %v560
  %582 = vmatprep.subr.bf16.mxu0 0
  %583 = vmatpush2.bf16.xpose.msra.mxu0 0
  %584 = vmatprep.subr.bf16.mxu0 0
  %585 = vmatpush2.bf16.xpose.msra.mxu0 0
  %586 = vmatprep.subr.bf16.mxu0 0
  %587 = vmatpush2.bf16.xpose.msra.mxu0 0
  %588 = vmatprep.subr.bf16.mxu0 0
  %589 = vmatpush2.bf16.xpose.msra.mxu0 0
  %590 = vmatprep.subr.bf16.mxu0 0
  %591 = vmatpush2.bf16.xpose.msra.mxu0 0
  %592 = vmatprep.subr.bf16.mxu0 0
  %593 = vmatpush2.bf16.xpose.msra.mxu0 0
  %594 = vmatprep.subr.bf16.mxu0 0
  %595 = vmatpush2.bf16.xpose.msra.mxu0 0
  %596 = vmatprep.subr.bf16.mxu0 0
  %597 = vmatpush2.bf16.xpose.msra.mxu0 0
  %598 = vmatprep.mubr.bf16.mxu0 %v561
  %599 = vmatmul.mubr.bf16.gmra.mxu0 %v560
  %v600 = vpop.f32.mrf.mxu0
  %v601 = vadd.f32 0.0, %v600
  %v602 = vpop.f32.mrf.mxu0
  %v603 = vpop.f32.mrf.mxu0
  %v604 = vadd.f32 0.0, %v603
  %v605 = vpop.f32.mrf.mxu0
  %606 = vdwg.mxu0
  %607 = vmatprep.subr.bf16.mxu0 0
  %608 = vmatpush1.bf16.xpose.msra.mxu0 0
  %609 = vmatprep.subr.bf16.mxu0 0
  %610 = vmatpush1.bf16.xpose.msra.mxu0 0
  %611 = vmatprep.subr.bf16.mxu0 0
  %612 = vmatpush1.bf16.xpose.msra.mxu0 0
  %613 = vmatprep.subr.bf16.mxu0 0
  %614 = vmatpush1.bf16.xpose.msra.mxu0 0
  %615 = vmatprep.subr.bf16.mxu0 0
  %616 = vmatpush1.bf16.xpose.msra.mxu0 0
  %617 = vmatprep.subr.bf16.mxu0 0
  %618 = vmatpush1.bf16.xpose.msra.mxu0 0
  %619 = vmatprep.subr.bf16.mxu0 0
  %620 = vmatpush1.bf16.xpose.msra.mxu0 0
  %621 = vmatprep.subr.bf16.mxu0 %v563
  %622 = vmatpush1.bf16.xpose.msra.mxu0 %v562
  %623 = vmatprep.subr.bf16.mxu0 0
  %624 = vmatpush2.bf16.xpose.msra.mxu0 0
  %625 = vmatprep.subr.bf16.mxu0 0
  %626 = vmatpush2.bf16.xpose.msra.mxu0 0
  %627 = vmatprep.subr.bf16.mxu0 0
  %628 = vmatpush2.bf16.xpose.msra.mxu0 0
  %629 = vmatprep.subr.bf16.mxu0 0
  %630 = vmatpush2.bf16.xpose.msra.mxu0 0
  %631 = vmatprep.subr.bf16.mxu0 0
  %632 = vmatpush2.bf16.xpose.msra.mxu0 0
  %633 = vmatprep.subr.bf16.mxu0 0
  %634 = vmatpush2.bf16.xpose.msra.mxu0 0
  %635 = vmatprep.subr.bf16.mxu0 0
  %636 = vmatpush2.bf16.xpose.msra.mxu0 0
  %637 = vmatprep.subr.bf16.mxu0 0
  %638 = vmatpush2.bf16.xpose.msra.mxu0 0
  %639 = vmatprep.mubr.bf16.mxu0 %v563
  %640 = vmatmul.mubr.bf16.gmra.mxu0 %v562
  %v641 = vpop.f32.mrf.mxu0
  %v642 = vadd.f32 %v601, %v641
  %v643 = vpop.f32.mrf.mxu0
  %v644 = vpop.f32.mrf.mxu0
  %v645 = vadd.f32 %v604, %v644
  %v646 = vpop.f32.mrf.mxu0
  %647 = vdwg.mxu0
  %v648 = vadd.f32 %v564, %v642
  %v649 = vadd.f32 %v565, %v645
  %650 = vst.msk [vmem:[%s10] sm:$0xff] %vm370, %v648
  %651 = vst.msk [vmem:[%s10 + $0x8] sm:$0xff] %vm370, %v649
  %v652 = vld [vmem:[%s11] sm:$0xff]
  %v653 = vld [vmem:[%s11 + $0x8] sm:$0xff]
  %v654 = vunpack.c.l.bf16 %v560
  %v655 = vunpack.c.l.bf16 %v561
  %v656 = vunpack.c.l.bf16 %v562
  %v657 = vunpack.c.l.bf16 %v563
  %v658 = vunpack.c.h.bf16 %v560
  %v659 = vunpack.c.h.bf16 %v561
  %v660 = vunpack.c.h.bf16 %v562
  %v661 = vunpack.c.h.bf16 %v563
  %v662 = vadd.f32 %v654, %v655
  %v663 = vadd.f32 %v662, %v656
  %v664 = vadd.f32 %v663, %v657
  %665 = vadd.xlane.f32.xlu0 %v664
  %v666 = vpop.xlane.xlu0 %665
  %v667 = vadd.f32 %v658, %v659
  %v668 = vadd.f32 %v667, %v660
  %v669 = vadd.f32 %v668, %v661
  %670 = vadd.xlane.f32.xlu0 %v669
  %v671 = vpop.xlane.xlu0 %670
  %v672 = vadd.f32 %v652, %v666
  %v673 = vadd.f32 %v653, %v671
  %674 = vst.msk [vmem:[%s11] sm:$0xff] %vm395, %v672
  %675 = vst.msk [vmem:[%s11 + $0x8] sm:$0xff] %vm395, %v673
  %s676 = sadd.s32 0, 0
  %s677 = smul.u32 4, %s676
  %p678 = scmp.lt.s32.totalorder %s677, 3
  %s679 = scalar_select %p678, %s677, 3
  %s680 = smul.addr %s679, 4
  %s681 = scalar_lea.vmem %s6, %s680
  %s682 = sadd.s32 0, 0
  %s683 = smul.u32 4, %s682
  %p684 = scmp.lt.s32.totalorder %s683, 3
  %s685 = scalar_select %p684, %s683, 3
  %s686 = smul.addr %s685, 4
  %s687 = scalar_lea.vmem %s7, %s686
  // Predicated region
  $region30: #{a_call__.7} parent=0 // pred_check
    _
  $region31: #{a_call__.7} parent=0 // pred_check_branch
    %689 = sbr.rel (0) target = $region33
  $region32: #{a_call__.7} parent=0 // pred_region
    %s690 = sadd.s32 0, 0
    %s691 = smul.u32 4, %s690
  $region33: #{a_call__.7} parent=0 // pred_fallthru
    _
  // Predicated region
  $region34: #{a_call__.7} parent=0 // pred_check
    _
  $region35: #{a_call__.7} parent=0 // pred_check_branch
    %693 = sbr.rel (0) target = $region37
  $region36: #{a_call__.7} parent=0 // pred_region
    %s694 = sadd.s32 0, 0
    %s695 = smul.u32 4, %s694
  $region37: #{a_call__.7} parent=0 // pred_fallthru
    _
  // Predicated region
  $region38: #{a_call__.7} parent=0 // pred_check
    _
  $region39: #{a_call__.7} parent=0 // pred_check_branch
    %697 = sbr.rel (0) target = $region41
  $region40: #{a_call__.7} parent=0 // pred_region
    _
  $region41: #{a_call__.7} parent=0 // pred_fallthru
    _
  // Predicated region
  $region42: #{a_call__.7} parent=0 // pred_check
    _
  $region43: #{a_call__.7} parent=0 // pred_check_branch
    %699 = sbr.rel (0) target = $region45
  $region44: #{a_call__.7} parent=0 // pred_region
    _
  $region45: #{a_call__.7} parent=0 // pred_fallthru
    _
  // Predicated region
  $region46: #{a_call__.7} parent=0 // pred_check
    _
  $region47: #{a_call__.7} parent=0 // pred_check_branch
    %701 = sbr.rel (0) target = $region49
  $region48: #{a_call__.7} parent=0 // pred_region
    _
  $region49: #{a_call__.7} parent=0 // pred_fallthru
    _
  // Predicated region
  $region50: #{a_call__.7} parent=0 // pred_check
    _
  $region51: #{a_call__.7} parent=0 // pred_check_branch
    %703 = sbr.rel (0) target = $region53
  $region52: #{a_call__.7} parent=0 // pred_region
    _
  $region53: #{a_call__.7} parent=0 // pred_fallthru
    _
  // Predicated region
  $region54: #{a_call__.7} parent=0 // pred_check
    _
  $region55: #{a_call__.7} parent=0 // pred_check_branch
    %705 = sbr.rel (0) target = $region57
  $region56: #{a_call__.7} parent=0 // pred_region
    %s706 = sadd.s32 0, 0
    %s707 = smul.u32 4, %s706
    %p708 = scmp.lt.s32.totalorder %s707, 3
    %s709 = scalar_select %p708, %s707, 3
    %s710 = smul.addr %s709, 4
    %s711 = scalar_lea.vmem %s6, %s710
  $region57: #{a_call__.7} parent=0 // pred_fallthru
    _
  // Predicated region
  $region58: #{a_call__.7} parent=0 // pred_check
    _
  $region59: #{a_call__.7} parent=0 // pred_check_branch
    %713 = sbr.rel (0) target = $region61
  $region60: #{a_call__.7} parent=0 // pred_region
    %s714 = sadd.s32 0, 0
    %s715 = smul.u32 4, %s714
    %p716 = scmp.lt.s32.totalorder %s715, 3
    %s717 = scalar_select %p716, %s715, 3
    %s718 = smul.addr %s717, 4
    %s719 = scalar_lea.vmem %s7, %s718
  $region61: #{a_call__.7} parent=0 // pred_fallthru
    _
  // Predicated region
  $region62: #{a_call__.7} parent=0 // pred_check
    _
  $region63: #{a_call__.7} parent=0 // pred_check_branch
    %721 = sbr.rel (0) target = $region65
  $region64: #{a_call__.7} parent=0 // pred_region
    _
  $region65: #{a_call__.7} parent=0 // pred_fallthru
    _
  // Predicated region
  $region66: #{a_call__.7} parent=0 // pred_check
    _
  $region67: #{a_call__.7} parent=0 // pred_check_branch
    %723 = sbr.rel (0) target = $region69
  $region68: #{a_call__.7} parent=0 // pred_region
    _
  $region69: #{a_call__.7} parent=0 // pred_fallthru
    _
  // Predicated region
  $region70: #{a_call__.7} parent=0 // pred_check
    _
  $region71: #{a_call__.7} parent=0 // pred_check_branch
    %725 = sbr.rel (0) target = $region73
  $region72: #{a_call__.7} parent=0 // pred_region
    _
  $region73: #{a_call__.7} parent=0 // pred_fallthru
    _
  // Predicated region
  $region74: #{a_call__.7} parent=0 // pred_check
    _
  $region75: #{a_call__.7} parent=0 // pred_check_branch
    %727 = sbr.rel (0) target = $region77
  $region76: #{a_call__.7} parent=0 // pred_region
    _
  $region77: #{a_call__.7} parent=0 // pred_fallthru
    _

// kernel: a_call__.10
$region0: #{a_call__.10}
  #allocation0 [shape = 'u32[]', space=smem, size = 0x4, offset = 0x4, fixed_abs, tag = 'smem constant byte address 0x4 - core index']
  #allocation1 [shape = 'u32[144,128]{1,0:T(1,128)}', space=vmem, size = 0x12000, scoped, tag = 'internal scratch']
  %s0 = inlined_call_operand.vmem [shape: bf16[16,512], index: 0, kind: input, shape index: {}]
  %s1 = inlined_call_operand.vmem [shape: bf16[16,512], index: 1, kind: input, shape index: {}]
  %s2 = inlined_call_operand.vmem [shape: bf16[16,32], index: 2, kind: input, shape index: {}]
  %s3 = inlined_call_operand.vmem [shape: f32[16,1], index: 3, kind: input, shape index: {}]
  %s4 = inlined_call_operand.vmem [shape: bf16[16,512], index: 4, kind: output, shape index: {}]
  %s5 = sld [smem:[#allocation0]]
  $region26: #{a_call__.10} parent=0
    _
  %s7 = ssub.s32 1, %s5
  %s8 = scalar_select 0, %s7, %s5
  // Predicated region
  $region2: #{a_call__.10} parent=0 // pred_check
    _
  $region3: #{a_call__.10} parent=0 // pred_check_branch
    %10 = sbr.rel (0) target = $region5
  $region4: #{a_call__.10} parent=0 // pred_region
    %s11 = sadd.s32 0, 0
    %s12 = smul.u32 4, %s11
    %p13 = scmp.lt.s32.totalorder %s12, 3
    %s14 = scalar_select %p13, %s12, 3
    %s15 = smul.addr %s14, 4
    %s16 = scalar_lea.vmem %s0, %s15
    %s17 = sadd.s32 0, 0
    %s18 = smul.u32 4, %s17
  $region5: #{a_call__.10} parent=0 // pred_fallthru
    _
  // Predicated region
  $region6: #{a_call__.10} parent=0 // pred_check
    _
  $region7: #{a_call__.10} parent=0 // pred_check_branch
    %20 = sbr.rel (0) target = $region9
  $region8: #{a_call__.10} parent=0 // pred_region
    %s21 = sadd.s32 0, 0
    %s22 = smul.u32 4, %s21
    %p23 = scmp.lt.s32.totalorder %s22, 3
    %s24 = scalar_select %p23, %s22, 3
    %s25 = smul.addr %s24, 4
    %s26 = scalar_lea.vmem %s1, %s25
    %s27 = sadd.s32 0, 0
    %s28 = smul.u32 4, %s27
  $region9: #{a_call__.10} parent=0 // pred_fallthru
    _
  // Predicated region
  $region10: #{a_call__.10} parent=0 // pred_check
    _
  $region11: #{a_call__.10} parent=0 // pred_check_branch
    %30 = sbr.rel (0) target = $region13
  $region12: #{a_call__.10} parent=0 // pred_region
    _
  $region13: #{a_call__.10} parent=0 // pred_fallthru
    _
  // Predicated region
  $region14: #{a_call__.10} parent=0 // pred_check
    _
  $region15: #{a_call__.10} parent=0 // pred_check_branch
    %32 = sbr.rel (0) target = $region17
  $region16: #{a_call__.10} parent=0 // pred_region
    _
  $region17: #{a_call__.10} parent=0 // pred_fallthru
    _
  %s33 = sadd.s32 0, 0
  %s34 = smul.u32 4, %s33
  %p35 = scmp.lt.s32.totalorder %s34, 3
  %s36 = scalar_select %p35, %s34, 3
  %s37 = smul.addr %s36, 4
  %s38 = scalar_lea.vmem %s0, %s37
  %s39 = sadd.s32 0, 0
  %s40 = smul.u32 4, %s39
  %p41 = scmp.lt.s32.totalorder %s40, 3
  %s42 = scalar_select %p41, %s40, 3
  %s43 = smul.addr %s42, 4
  %s44 = scalar_lea.vmem %s1, %s43
  %s45 = sadd.s32 0, 0
  %s46 = smul.u32 4, %s45
  %p47 = scmp.lt.s32.totalorder %s46, 3
  %s48 = scalar_select %p47, %s46, 3
  %s49 = smul.addr %s48, 4
  %s50 = scalar_lea.vmem %s4, %s49
  %s51 = sadd.s32 0, 0
  %s52 = smul.u32 4, %s51
  %p53 = scmp.lt.s32.totalorder %s52, 3
  %s54 = scalar_select %p53, %s52, 3
  %s55 = smul.addr %s54, 4
  %s56 = scalar_lea.vmem %s0, %s55
  %s57 = sadd.s32 0, 0
  %s58 = smul.u32 4, %s57
  %s59 = sadd.s32 0, 0
  %s60 = smul.u32 4, %s59
  %p61 = scmp.lt.s32.totalorder %s60, 3
  %s62 = scalar_select %p61, %s60, 3
  %s63 = smul.addr %s62, 4
  %s64 = scalar_lea.vmem %s1, %s63
  %s65 = sadd.s32 0, 0
  %s66 = smul.u32 4, %s65
  %s67 = sadd.s32 0, 0
  %s68 = smul.u32 4, %s67
  %p69 = scmp.lt.s32.totalorder %s68, 3
  %s70 = scalar_select %p69, %s68, 3
  %s71 = smul.addr %s70, 4
  %s72 = scalar_lea.vmem %s4, %s71
  %s73 = sadd.s32 0, 0
  %s74 = smul.u32 4, %s73
  %v76 = vld [vmem:[%s56] sm:$0xff]
  %v77 = vld [vmem:[%s56 + $0x8] sm:$0xff]
  %v78 = vld [vmem:[%s56 + $0x10] sm:$0xff]
  %v79 = vld [vmem:[%s56 + $0x18] sm:$0xff]
  %v80 = vmax.bf16 %v76, 0
  %v81 = vmax.bf16 %v77, 0
  %v82 = vmax.bf16 %v78, 0
  %v83 = vmax.bf16 %v79, 0
  %v84 = vld [vmem:[%s64] sm:$0xff]
  %v85 = vld [vmem:[%s64 + $0x8] sm:$0xff]
  %v86 = vld [vmem:[%s64 + $0x10] sm:$0xff]
  %v87 = vld [vmem:[%s64 + $0x18] sm:$0xff]
  %v88 = vmax.bf16 %v84, 0
  %v89 = vmax.bf16 %v85, 0
  %v90 = vmax.bf16 %v86, 0
  %v91 = vmax.bf16 %v87, 0
  %v96 = vunpack.c.l.b16 %v80
  %v97 = vunpack.c.h.b16 %v80
  %v98 = vunpack.c.l.b16 %v81
  %v99 = vunpack.c.h.b16 %v81
  %v100 = vunpack.c.l.b16 %v82
  %v101 = vunpack.c.h.b16 %v82
  %v102 = vunpack.c.l.b16 %v83
  %v103 = vunpack.c.h.b16 %v83
  %v104 = vpack.c.b16 %v100, %v96
  %v105 = vpack.c.b16 %v101, %v97
  %v106 = vpack.c.b16 %v102, %v98
  %v107 = vpack.c.b16 %v103, %v99
  %v116 = vunpack.c.l.b16 %v88
  %v117 = vunpack.c.h.b16 %v88
  %v118 = vunpack.c.l.b16 %v89
  %v119 = vunpack.c.h.b16 %v89
  %v120 = vunpack.c.l.b16 %v90
  %v121 = vunpack.c.h.b16 %v90
  %v122 = vunpack.c.l.b16 %v91
  %v123 = vunpack.c.h.b16 %v91
  %v124 = vpack.c.b16 %v120, %v116
  %v125 = vpack.c.b16 %v121, %v117
  %v126 = vpack.c.b16 %v122, %v118
  %v127 = vpack.c.b16 %v123, %v119
  %v132 = vld [vmem:[%s2] sm:$0xf]
  %v133 = vld [vmem:[%s2 + $0x4] sm:$0xf]
  %v134 = vld [vmem:[%s3] sm:$0xff]
  %v135 = vld [vmem:[%s3 + $0x8] sm:$0xff]
  %137 = vset.pattern.permute.xlu0 0
  %138 = vperm.xlu0 %137, %v134
  %v139 = vpop.permute.xlu0 %138
  %142 = vset.pattern.permute.xlu0 0
  %143 = vperm.xlu0 %142, %v135
  %v144 = vpop.permute.xlu0 %143
  %v148 = vunpack.c.l.b16 %v132
  %v149 = vunpack.c.l.b16 %v133
  %v150 = vpack.c.b16 %v149, %v148
  %vm151 = vcmask 261120
  %v153 = vsel %vm151, %v150, 0
  %155 = vmatprep.subr.bf16.mxu0 0
  %156 = vmatpush1.bf16.msra.mxu0 0
  %157 = vmatprep.subr.bf16.mxu0 0
  %158 = vmatpush1.bf16.msra.mxu0 0
  %159 = vmatprep.subr.bf16.mxu0 0
  %160 = vmatpush1.bf16.msra.mxu0 0
  %161 = vmatprep.subr.bf16.mxu0 0
  %162 = vmatpush1.bf16.msra.mxu0 0
  %163 = vmatprep.subr.bf16.mxu0 0
  %164 = vmatpush1.bf16.msra.mxu0 0
  %165 = vmatprep.subr.bf16.mxu0 0
  %166 = vmatpush1.bf16.msra.mxu0 0
  %167 = vmatprep.subr.bf16.mxu0 %v125
  %168 = vmatpush1.bf16.msra.mxu0 %v124
  %169 = vmatprep.subr.bf16.mxu0 %v105
  %170 = vmatpush1.bf16.msra.mxu0 %v104
  %171 = vmatprep.subr.bf16.mxu0 0
  %172 = vmatpush2.bf16.msra.mxu0 0
  %173 = vmatprep.subr.bf16.mxu0 0
  %174 = vmatpush2.bf16.msra.mxu0 0
  %175 = vmatprep.subr.bf16.mxu0 0
  %176 = vmatpush2.bf16.msra.mxu0 0
  %177 = vmatprep.subr.bf16.mxu0 0
  %178 = vmatpush2.bf16.msra.mxu0 0
  %179 = vmatprep.subr.bf16.mxu0 0
  %180 = vmatpush2.bf16.msra.mxu0 0
  %181 = vmatprep.subr.bf16.mxu0 0
  %182 = vmatpush2.bf16.msra.mxu0 0
  %183 = vmatprep.subr.bf16.mxu0 0
  %184 = vmatpush2.bf16.msra.mxu0 0
  %185 = vmatprep.subr.bf16.mxu0 0
  %186 = vmatpush2.bf16.msra.mxu0 0
  %187 = vmatprep.mubr.bf16.mxu0 0
  %188 = vmatmul.mubr.bf16.gmra.mxu0 %v153
  %v189 = vpop.f32.mrf.mxu0
  %v190 = vadd.f32 %v139, %v189
  %v191 = vpop.f32.mrf.mxu0
  %v192 = vadd.f32 %v139, %v191
  %v193 = vpop.f32.mrf.mxu0
  %v194 = vadd.f32 %v144, %v193
  %v195 = vpop.f32.mrf.mxu0
  %v196 = vadd.f32 %v144, %v195
  %197 = vdwg.mxu0
  %198 = vmatprep.subr.bf16.mxu0 0
  %199 = vmatpush1.bf16.msra.mxu0 0
  %200 = vmatprep.subr.bf16.mxu0 0
  %201 = vmatpush1.bf16.msra.mxu0 0
  %202 = vmatprep.subr.bf16.mxu0 0
  %203 = vmatpush1.bf16.msra.mxu0 0
  %204 = vmatprep.subr.bf16.mxu0 0
  %205 = vmatpush1.bf16.msra.mxu0 0
  %206 = vmatprep.subr.bf16.mxu0 0
  %207 = vmatpush1.bf16.msra.mxu0 0
  %208 = vmatprep.subr.bf16.mxu0 0
  %209 = vmatpush1.bf16.msra.mxu0 0
  %210 = vmatprep.subr.bf16.mxu0 %v127
  %211 = vmatpush1.bf16.msra.mxu0 %v126
  %212 = vmatprep.subr.bf16.mxu0 %v107
  %213 = vmatpush1.bf16.msra.mxu0 %v106
  %214 = vmatprep.subr.bf16.mxu0 0
  %215 = vmatpush2.bf16.msra.mxu0 0
  %216 = vmatprep.subr.bf16.mxu0 0
  %217 = vmatpush2.bf16.msra.mxu0 0
  %218 = vmatprep.subr.bf16.mxu0 0
  %219 = vmatpush2.bf16.msra.mxu0 0
  %220 = vmatprep.subr.bf16.mxu0 0
  %221 = vmatpush2.bf16.msra.mxu0 0
  %222 = vmatprep.subr.bf16.mxu0 0
  %223 = vmatpush2.bf16.msra.mxu0 0
  %224 = vmatprep.subr.bf16.mxu0 0
  %225 = vmatpush2.bf16.msra.mxu0 0
  %226 = vmatprep.subr.bf16.mxu0 0
  %227 = vmatpush2.bf16.msra.mxu0 0
  %228 = vmatprep.subr.bf16.mxu0 0
  %229 = vmatpush2.bf16.msra.mxu0 0
  %230 = vmatprep.mubr.bf16.mxu0 0
  %231 = vmatmul.mubr.bf16.gmra.mxu0 %v153
  %v232 = vpop.f32.mrf.mxu0
  %v233 = vadd.f32 %v139, %v232
  %v234 = vpop.f32.mrf.mxu0
  %v235 = vadd.f32 %v139, %v234
  %v236 = vpop.f32.mrf.mxu0
  %v237 = vadd.f32 %v144, %v236
  %v238 = vpop.f32.mrf.mxu0
  %v239 = vadd.f32 %v144, %v238
  %240 = vdwg.mxu0
  %v241 = vpack.c.bf16 %v194, %v190
  %v242 = vpack.c.bf16 %v196, %v192
  %v243 = vpack.c.bf16 %v237, %v233
  %v244 = vpack.c.bf16 %v239, %v235
  %v249 = vunpack.c.l.b16 %v241
  %v250 = vunpack.c.l.b16 %v242
  %v251 = vunpack.c.l.b16 %v243
  %v252 = vunpack.c.l.b16 %v244
  %v253 = vunpack.c.h.b16 %v241
  %v254 = vunpack.c.h.b16 %v242
  %v255 = vunpack.c.h.b16 %v243
  %v256 = vunpack.c.h.b16 %v244
  %v257 = vpack.c.b16 %v250, %v249
  %v258 = vpack.c.b16 %v252, %v251
  %v259 = vpack.c.b16 %v254, %v253
  %v260 = vpack.c.b16 %v256, %v255
  %265 = vst [vmem:[%s72] sm:$0xff] %v257
  %266 = vst [vmem:[%s72 + $0x8] sm:$0xff] %v258
  %267 = vst [vmem:[%s72 + $0x10] sm:$0xff] %v259
  %268 = vst [vmem:[%s72 + $0x18] sm:$0xff] %v260
  %s269 = sadd.s32 0, 0
  %s270 = smul.u32 4, %s269
  %p271 = scmp.lt.s32.totalorder %s270, 3
  %s272 = scalar_select %p271, %s270, 3
  %s273 = smul.addr %s272, 4
  %s274 = scalar_lea.vmem %s4, %s273
  // Predicated region
  $region18: #{a_call__.10} parent=0 // pred_check
    _
  $region19: #{a_call__.10} parent=0 // pred_check_branch
    %276 = sbr.rel (0) target = $region21
  $region20: #{a_call__.10} parent=0 // pred_region
    %s277 = sadd.s32 0, 0
    %s278 = smul.u32 4, %s277
  $region21: #{a_call__.10} parent=0 // pred_fallthru
    _
  // Predicated region
  $region22: #{a_call__.10} parent=0 // pred_check
    _
  $region23: #{a_call__.10} parent=0 // pred_check_branch
    %280 = sbr.rel (0) target = $region25
  $region24: #{a_call__.10} parent=0 // pred_region
    %s281 = sadd.s32 0, 0
    %s282 = smul.u32 4, %s281
    %p283 = scmp.lt.s32.totalorder %s282, 3
    %s284 = scalar_select %p283, %s282, 3
    %s285 = smul.addr %s284, 4
    %s286 = scalar_lea.vmem %s4, %s285
  $region25: #{a_call__.10} parent=0 // pred_fallthru
    _

</llo_original>
